<compile_context>
chip_gen: v7x
topology: tpu7x:2x2x1
jax: 0.10.0
libtpu: 0.0.40
codegen_flags: <defaults>
</compile_context>

<pallas_src>
import jax
import jax.numpy as jnp
from jax.experimental import pallas as pl
from jax.experimental.pallas import tpu as pltpu

HIDDEN = 768          # BERT hidden size (fc1 input)
FC1 = 512
NUM_CLASSES = 2
C_PAD = 128           # lane-dense padded class dim
TB_MAX = 256          # max batch rows per grid step (v6e/v7x sweet spot; fine on v5e)
SUBLANE = 16          # batch-tile alignment (safe for bf16 (16,128) sublane tiling)
VOCAB = 100           # synthetic vocab for the stand-in embedding table


def _round_up(x, m):
    return ((x + m - 1) // m) * m


# --------------------------------------------------------------------------- #
# Kernel
# --------------------------------------------------------------------------- #
def bert_head_kernel(pooled_ref, wp_ref, bp_ref, w1_ref, b1_ref,
                     w2_ref, b2_ref, out_ref):
    """Fused BERT pooler + classifier head + LogSoftmax for one batch tile.

    pooled_ref: (tb, 768) bf16   masked-mean sequence representation
    wp/bp     : (768, 768) bf16 / (1, 768) f32   BERT pooler dense
    w1/b1     : (768, 512) bf16 / (1, 512) f32   fc1
    w2/b2     : (512, 128) bf16 / (1, 128) f32   fc2, N padded 2 -> 128
    out_ref   : (tb, 128) f32    log-probabilities (cols >= 2 are padding)
    """
    x = pooled_ref[...]                                            # (tb, 768) bf16

    # --- BERT pooler: tanh(x @ Wp + bp), f32 accumulation --------------------
    h = jnp.tanh(
        jnp.dot(x, wp_ref[...], preferred_element_type=jnp.float32) + bp_ref[...]
    ).astype(jnp.bfloat16)                                         # (tb, 768)

    # --- fc1 + ReLU -----------------------------------------------------------
    h1 = jnp.dot(h, w1_ref[...], preferred_element_type=jnp.float32) + b1_ref[...]
    h1 = jnp.maximum(h1, 0.0).astype(jnp.bfloat16)                 # (tb, 512)

    # --- dropout(p=0.1): eval-mode identity (inference semantics) -------------

    # --- fc2 (N padded 2 -> 128 for a lane-dense output tile) -----------------
    logits = jnp.dot(h1, w2_ref[...], preferred_element_type=jnp.float32) + b2_ref[...]
    # Mask padded class columns so they vanish from the log-sum-exp.
    # NOTE: must stay f32 (-1e30 in bf16 would be -inf and (z - lse) could NaN).
    col = jax.lax.broadcasted_iota(jnp.int32, logits.shape, 1)     # (tb, 128)
    logits = jnp.where(col < NUM_CLASSES, logits, jnp.float32(-1e30))

    # --- LogSoftmax over dim=1 (numerically stable, f32 throughout) -----------
    m = jnp.max(logits, axis=1, keepdims=True)
    z = logits - m
    lse = jnp.log(jnp.sum(jnp.exp(z), axis=1, keepdims=True))
    out_ref[...] = z - lse


# --------------------------------------------------------------------------- #
# One-time parameter preparation (hoisted out of the per-call wrapper)
# --------------------------------------------------------------------------- #
def prepare_head_params(raw_params):
    """Convert raw f32 params to the kernel layout ONCE (bf16 weights, fc2 padded
    to C_PAD lanes).  Do not call per forward -- that was the main HBM waste."""
    wp, bp, w1, b1, w2, b2 = raw_params
    w2_p = jnp.zeros((FC1, C_PAD), jnp.bfloat16)
    w2_p = w2_p.at[:, :NUM_CLASSES].set(w2.astype(jnp.bfloat16))
    b2_p = jnp.zeros((1, C_PAD), jnp.float32)
    b2_p = b2_p.at[:, :NUM_CLASSES].set(b2.astype(jnp.float32))
    return (wp.astype(jnp.bfloat16), bp.astype(jnp.float32),
            w1.astype(jnp.bfloat16), b1.astype(jnp.float32),
            w2_p, b2_p)


def _choose_batch_tiling(B, tb_max, min_tiles):
    """Pick (tile_rows, n_tiles): minimal padding, sublane-aligned tiles."""
    n_tiles = max(min_tiles, pl.cdiv(B, tb_max))
    tb = _round_up(pl.cdiv(B, n_tiles), SUBLANE)
    return tb, n_tiles


def _resident_spec(shape):
    """Constant-index, single-buffered spec for weights that never change across
    grid steps (saves the pointless second VMEM buffer)."""
    if hasattr(pl, "Buffered"):
        try:
            return pl.BlockSpec(shape, lambda i: (0, 0), pipeline_mode=pl.Buffered(1))
        except TypeError:
            pass
    return pl.BlockSpec(shape, lambda i: (0, 0))


# --------------------------------------------------------------------------- #
# Wrapper
# --------------------------------------------------------------------------- #
def bert_arch_forward(pooled, head_params, *, tb_max=TB_MAX, min_tiles=1):
    """pooled: (B, 768) float (bf16 preferred). head_params: prepare_head_params(...)
    Returns (B, 2) f32 log-probabilities.

    v7x note: for batches that fit in a single tile, pass min_tiles=2 so the
    "parallel" batch axis feeds both TensorCores.  v5e note: tb_max=128 already
    matches its 128-wide MXU; the default 256 is also fine.
    """
    B = pooled.shape[0]
    wp, bp, w1, b1, w2, b2 = head_params

    pooled = pooled.astype(jnp.bfloat16)                 # no-op if backbone emits bf16
    tb, n_tiles = _choose_batch_tiling(B, tb_max, min_tiles)
    B_pad = tb * n_tiles
    if B_pad != B:
        pooled = jnp.pad(pooled, ((0, B_pad - B), (0, 0)))

    tile = lambda shape: pl.BlockSpec(shape, lambda i: (i, 0))

    flops = 2 * B_pad * (HIDDEN * HIDDEN + HIDDEN * FC1 + FC1 * C_PAD)
    transcendentals = B_pad * (HIDDEN + C_PAD)           # tanh + exp
    bytes_accessed = (
        B_pad * HIDDEN * 2 + B_pad * C_PAD * 4           # bf16 pooled in / f32 out
        + (HIDDEN * HIDDEN + HIDDEN * FC1 + FC1 * C_PAD) * 2   # bf16 weights
        + (HIDDEN + FC1 + C_PAD) * 4                     # f32 biases
    )

    out_p = pl.pallas_call(
        bert_head_kernel,
        out_shape=jax.ShapeDtypeStruct((B_pad, C_PAD), jnp.float32),
        grid_spec=pltpu.PrefetchScalarGridSpec(
            num_scalar_prefetch=0,
            grid=(n_tiles,),
            in_specs=[
                tile((tb, HIDDEN)),              # pooled (batch-tiled, bf16)
                _resident_spec((HIDDEN, HIDDEN)),  # Wp  (bf16, resident)
                _resident_spec((1, HIDDEN)),       # bp
                _resident_spec((HIDDEN, FC1)),     # W1  (bf16, resident)
                _resident_spec((1, FC1)),          # b1
                _resident_spec((FC1, C_PAD)),      # W2  (bf16, padded, resident)
                _resident_spec((1, C_PAD)),        # b2  (padded)
            ],
            out_specs=tile((tb, C_PAD)),
        ),
        compiler_params=pltpu.CompilerParams(
            dimension_semantics=("parallel",),
        ),
        cost_estimate=pl.CostEstimate(
            flops=flops,
            transcendentals=transcendentals,
            bytes_accessed=bytes_accessed,
        ),
    )(pooled, wp, bp, w1, b1, w2, b2)

    return out_p[:B, :NUM_CLASSES]


# --------------------------------------------------------------------------- #
# Synthetic backbone stand-in (plain JAX glue)
# --------------------------------------------------------------------------- #
def synthetic_bert_backbone(sent_id, mask, emb_table):
    """Embedding lookup + attention-mask-weighted mean pooling -> (B, 768) bf16.
    Stand-in for the pretrained BERT encoder."""
    emb = emb_table[sent_id]                                   # (B, S, 768)
    m = mask.astype(jnp.float32)[..., None]                    # (B, S, 1)
    denom = jnp.maximum(jnp.sum(m, axis=1), 1.0)               # (B, 1)
    pooled = jnp.sum(emb * m, axis=1) / denom                  # (B, 768) f32
    return pooled.astype(jnp.bfloat16)                         # bf16 handoff to kernel


def init_params(key):
    ks = jax.random.split(key, 7)
    scale = 0.02
    wp = scale * jax.random.normal(ks[0], (HIDDEN, HIDDEN), jnp.float32)
    bp = scale * jax.random.normal(ks[1], (1, HIDDEN), jnp.float32)
    w1 = scale * jax.random.normal(ks[2], (HIDDEN, FC1), jnp.float32)
    b1 = scale * jax.random.normal(ks[3], (1, FC1), jnp.float32)
    w2 = scale * jax.random.normal(ks[4], (FC1, NUM_CLASSES), jnp.float32)
    b2 = scale * jax.random.normal(ks[5], (1, NUM_CLASSES), jnp.float32)
    emb_table = scale * jax.random.normal(ks[6], (VOCAB, HIDDEN), jnp.float32)
    return (wp, bp, w1, b1, w2, b2), emb_table


if __name__ == "__main__":
    key = jax.random.PRNGKey(0)
    k_param, k_ids, k_len = jax.random.split(key, 3)

    B, S = 8, 16   # small batch / sequence length
    raw_params, emb_table = init_params(k_param)
    head_params = prepare_head_params(raw_params)     # one-time prep (bf16 + pad)

    sent_id = jax.random.randint(k_ids, (B, S), 0, VOCAB, dtype=jnp.int32)
    # simple deterministic attention mask: first `len` tokens valid per row
    lens = jax.random.randint(k_len, (B,), 4, S + 1, dtype=jnp.int32)
    mask = (jnp.arange(S)[None, :] < lens[:, None]).astype(jnp.int32)

    @jax.jit
    def forward(sent_id, mask, emb_table, head_params):
        pooled = synthetic_bert_backbone(sent_id, mask, emb_table)  # (B, 768) bf16
        return bert_arch_forward(pooled, head_params)               # (B, 2) f32

    log_probs = jax.block_until_ready(forward(sent_id, mask, emb_table, head_params))

    # sanity: rows of exp(log_probs) should sum to 1
    row_sums = jnp.exp(log_probs).sum(axis=1)
    assert log_probs.shape == (B, NUM_CLASSES)
    assert bool(jnp.all(jnp.isfinite(log_probs)))
    assert bool(jnp.all(jnp.abs(row_sums - 1.0) < 1e-4))

    print("KERNEL_OK")
</pallas_src>

<mosaic_0001>
module attributes {stable_mosaic.version = 11 : i64} {
  func.func @bert_head_kernel(%arg0: i32, %arg1: memref<16x768xbf16, #tpu.memory_space<vmem>>, %arg2: memref<768x768xbf16, #tpu.memory_space<vmem>>, %arg3: memref<1x768xf32, #tpu.memory_space<vmem>>, %arg4: memref<768x512xbf16, #tpu.memory_space<vmem>>, %arg5: memref<1x512xf32, #tpu.memory_space<vmem>>, %arg6: memref<512x128xbf16, #tpu.memory_space<vmem>>, %arg7: memref<1x128xf32, #tpu.memory_space<vmem>>, %arg8: memref<16x128xf32, #tpu.memory_space<vmem>>) attributes {dimension_semantics = [#tpu.dimension_semantics<parallel>], iteration_bounds = array<i64: 1>, scalar_prefetch = 0 : i64, scratch_operands = 0 : i64, tpu.core_type = #tpu.core_type<tc>, window_params = [{transform_indices = @transform_0, window_bounds = array<i64: 16, 768>}, {pipeline_mode = #tpu.pipeline_mode<synchronous>, transform_indices = @transform_1, window_bounds = array<i64: 768, 768>}, {pipeline_mode = #tpu.pipeline_mode<synchronous>, transform_indices = @transform_2, window_bounds = array<i64: 1, 768>}, {pipeline_mode = #tpu.pipeline_mode<synchronous>, transform_indices = @transform_3, window_bounds = array<i64: 768, 512>}, {pipeline_mode = #tpu.pipeline_mode<synchronous>, transform_indices = @transform_4, window_bounds = array<i64: 1, 512>}, {pipeline_mode = #tpu.pipeline_mode<synchronous>, transform_indices = @transform_5, window_bounds = array<i64: 512, 128>}, {pipeline_mode = #tpu.pipeline_mode<synchronous>, transform_indices = @transform_6, window_bounds = array<i64: 1, 128>}, {transform_indices = @transform_7, window_bounds = array<i64: 16, 128>}]} {
    %c0 = arith.constant 0 : index
    %c0_0 = arith.constant 0 : index
    %0 = vector.load %arg1[%c0, %c0_0] : memref<16x768xbf16, #tpu.memory_space<vmem>>, vector<16x768xbf16>
    %c0_1 = arith.constant 0 : index
    %c0_2 = arith.constant 0 : index
    %1 = vector.load %arg2[%c0_1, %c0_2] : memref<768x768xbf16, #tpu.memory_space<vmem>>, vector<768x768xbf16>
    %cst = arith.constant dense<0.000000e+00> : vector<16x768xf32>
    %2 = tpu.matmul %0, %1, %cst {dimension_numbers = #tpu.dot_dimension_numbers<[1], [0], [0], [1], [0, 0, 1, 1], [], []>} : vector<16x768xbf16>, vector<768x768xbf16>, vector<16x768xf32> -> vector<16x768xf32>
    %c0_3 = arith.constant 0 : index
    %c0_4 = arith.constant 0 : index
    %3 = vector.load %arg3[%c0_3, %c0_4] : memref<1x768xf32, #tpu.memory_space<vmem>>, vector<1x768xf32>
    %4 = vector.broadcast %3 : vector<1x768xf32> to vector<16x768xf32>
    %5 = arith.addf %2, %4 : vector<16x768xf32>
    %6 = math.tanh %5 : vector<16x768xf32>
    %7 = arith.truncf %6 : vector<16x768xf32> to vector<16x768xbf16>
    %c0_5 = arith.constant 0 : index
    %c0_6 = arith.constant 0 : index
    %8 = vector.load %arg4[%c0_5, %c0_6] : memref<768x512xbf16, #tpu.memory_space<vmem>>, vector<768x512xbf16>
    %cst_7 = arith.constant dense<0.000000e+00> : vector<16x512xf32>
    %9 = tpu.matmul %7, %8, %cst_7 {dimension_numbers = #tpu.dot_dimension_numbers<[1], [0], [0], [1], [0, 0, 1, 1], [], []>} : vector<16x768xbf16>, vector<768x512xbf16>, vector<16x512xf32> -> vector<16x512xf32>
    %c0_8 = arith.constant 0 : index
    %c0_9 = arith.constant 0 : index
    %10 = vector.load %arg5[%c0_8, %c0_9] : memref<1x512xf32, #tpu.memory_space<vmem>>, vector<1x512xf32>
    %11 = vector.broadcast %10 : vector<1x512xf32> to vector<16x512xf32>
    %12 = arith.addf %9, %11 : vector<16x512xf32>
    %cst_10 = arith.constant 0.000000e+00 : f32
    %13 = vector.broadcast %cst_10 : f32 to vector<16x512xf32>
    %14 = arith.maximumf %12, %13 : vector<16x512xf32>
    %15 = arith.truncf %14 : vector<16x512xf32> to vector<16x512xbf16>
    %c0_11 = arith.constant 0 : index
    %c0_12 = arith.constant 0 : index
    %16 = vector.load %arg6[%c0_11, %c0_12] : memref<512x128xbf16, #tpu.memory_space<vmem>>, vector<512x128xbf16>
    %cst_13 = arith.constant dense<0.000000e+00> : vector<16x128xf32>
    %17 = tpu.matmul %15, %16, %cst_13 {dimension_numbers = #tpu.dot_dimension_numbers<[1], [0], [0], [1], [0, 0, 1, 1], [], []>} : vector<16x512xbf16>, vector<512x128xbf16>, vector<16x128xf32> -> vector<16x128xf32>
    %c0_14 = arith.constant 0 : index
    %c0_15 = arith.constant 0 : index
    %18 = vector.load %arg7[%c0_14, %c0_15] : memref<1x128xf32, #tpu.memory_space<vmem>>, vector<1x128xf32>
    %19 = vector.broadcast %18 : vector<1x128xf32> to vector<16x128xf32>
    %20 = arith.addf %17, %19 : vector<16x128xf32>
    %21 = tpu.iota {dimensions = array<i32: 1>} : vector<16x128xi32>
    %c2_i32 = arith.constant 2 : i32
    %22 = vector.broadcast %c2_i32 : i32 to vector<16x128xi32>
    %23 = arith.cmpi slt, %21, %22 : vector<16x128xi32>
    %cst_16 = arith.constant -1.000000e+30 : f32
    %24 = vector.broadcast %cst_16 : f32 to vector<16x128xf32>
    %25 = arith.select %23, %20, %24 : vector<16x128xi1>, vector<16x128xf32>
    %cst_17 = arith.constant dense<0xFF800000> : vector<16xf32>
    %26 = vector.multi_reduction <maximumf>, %25, %cst_17 [1] : vector<16x128xf32> to vector<16xf32>
    %27 = vector.shape_cast %26 : vector<16xf32> to vector<16x1xf32>
    %28 = vector.broadcast %27 : vector<16x1xf32> to vector<16x128xf32>
    %29 = arith.subf %25, %28 : vector<16x128xf32>
    %30 = math.exp %29 : vector<16x128xf32>
    %cst_18 = arith.constant dense<0.000000e+00> : vector<16xf32>
    %31 = vector.multi_reduction <add>, %30, %cst_18 [1] : vector<16x128xf32> to vector<16xf32>
    %32 = vector.shape_cast %31 : vector<16xf32> to vector<16x1xf32>
    %33 = math.log %32 : vector<16x1xf32>
    %34 = vector.broadcast %33 : vector<16x1xf32> to vector<16x128xf32>
    %35 = arith.subf %29, %34 : vector<16x128xf32>
    %c0_19 = arith.constant 0 : index
    %c0_20 = arith.constant 0 : index
    %36 = vector.load %arg8[%c0_19, %c0_20] : memref<16x128xf32, #tpu.memory_space<vmem>>, vector<16x128xf32>
    tpu.vector_store %arg8[%c0_19, %c0_20], %35 {strides = array<i32>} : memref<16x128xf32, #tpu.memory_space<vmem>>, vector<16x128xf32>,
    return
  }
  func.func @transform_0(%arg0: i32) -> (i32, i32) {
    %c0_i32 = arith.constant 0 : i32
    %c0_i32_0 = arith.constant 0 : i32
    return %arg0, %c0_i32 : i32, i32
  }
  func.func @transform_1(%arg0: i32) -> (i32, i32) {
    %c0_i32 = arith.constant 0 : i32
    %c0_i32_0 = arith.constant 0 : i32
    %c0_i32_1 = arith.constant 0 : i32
    return %c0_i32, %c0_i32_0 : i32, i32
  }
  func.func @transform_2(%arg0: i32) -> (i32, i32) {
    %c0_i32 = arith.constant 0 : i32
    %c0_i32_0 = arith.constant 0 : i32
    %c0_i32_1 = arith.constant 0 : i32
    return %c0_i32, %c0_i32_0 : i32, i32
  }
  func.func @transform_3(%arg0: i32) -> (i32, i32) {
    %c0_i32 = arith.constant 0 : i32
    %c0_i32_0 = arith.constant 0 : i32
    %c0_i32_1 = arith.constant 0 : i32
    return %c0_i32, %c0_i32_0 : i32, i32
  }
  func.func @transform_4(%arg0: i32) -> (i32, i32) {
    %c0_i32 = arith.constant 0 : i32
    %c0_i32_0 = arith.constant 0 : i32
    %c0_i32_1 = arith.constant 0 : i32
    return %c0_i32, %c0_i32_0 : i32, i32
  }
  func.func @transform_5(%arg0: i32) -> (i32, i32) {
    %c0_i32 = arith.constant 0 : i32
    %c0_i32_0 = arith.constant 0 : i32
    %c0_i32_1 = arith.constant 0 : i32
    return %c0_i32, %c0_i32_0 : i32, i32
  }
  func.func @transform_6(%arg0: i32) -> (i32, i32) {
    %c0_i32 = arith.constant 0 : i32
    %c0_i32_0 = arith.constant 0 : i32
    %c0_i32_1 = arith.constant 0 : i32
    return %c0_i32, %c0_i32_0 : i32, i32
  }
  func.func @transform_7(%arg0: i32) -> (i32, i32) {
    %c0_i32 = arith.constant 0 : i32
    %c0_i32_0 = arith.constant 0 : i32
    return %arg0, %c0_i32 : i32, i32
  }
}

</mosaic_0001>

<llo_original>
// kernel: forward.1
$region0: #{forward.1}
  #allocation0 [shape = 'u32[]', space=smem, size = 0x4, offset = 0x4, fixed_abs, tag = 'smem constant byte address 0x4 - core index']
  #allocation1 [shape = 'u32[144,128]{1,0:T(1,128)}', space=vmem, size = 0x12000, scoped, tag = 'internal scratch']
  %s0 = inlined_call_operand.vmem [shape: bf16[16,768], index: 0, kind: input, shape index: {}]
  %s1 = inlined_call_operand.vmem [shape: bf16[768,768], index: 1, kind: input, shape index: {}]
  %s2 = inlined_call_operand.vmem [shape: f32[1,768], index: 2, kind: input, shape index: {}]
  %s3 = inlined_call_operand.vmem [shape: bf16[768,512], index: 3, kind: input, shape index: {}]
  %s4 = inlined_call_operand.vmem [shape: f32[1,512], index: 4, kind: input, shape index: {}]
  %s5 = inlined_call_operand.vmem [shape: bf16[512,128], index: 5, kind: input, shape index: {}]
  %s6 = inlined_call_operand.vmem [shape: f32[1,128], index: 6, kind: input, shape index: {}]
  %s7 = inlined_call_operand.vmem [shape: f32[16,128], index: 7, kind: output, shape index: {}]
  %s8 = sld [smem:[#allocation0]]
  $region38: #{forward.1} parent=0
    _
  %s10 = ssub.s32 1, %s8
  %s11 = scalar_select 0, %s10, %s8
  // Predicated region
  $region2: #{forward.1} parent=0 // pred_check
    _
  $region3: #{forward.1} parent=0 // pred_check_branch
    %13 = sbr.rel (0) target = $region5
  $region4: #{forward.1} parent=0 // pred_region
    _
  $region5: #{forward.1} parent=0 // pred_fallthru
    _
  // Predicated region
  $region6: #{forward.1} parent=0 // pred_check
    _
  $region7: #{forward.1} parent=0 // pred_check_branch
    %15 = sbr.rel (0) target = $region9
  $region8: #{forward.1} parent=0 // pred_region
    _
  $region9: #{forward.1} parent=0 // pred_fallthru
    _
  // Predicated region
  $region10: #{forward.1} parent=0 // pred_check
    _
  $region11: #{forward.1} parent=0 // pred_check_branch
    %17 = sbr.rel (0) target = $region13
  $region12: #{forward.1} parent=0 // pred_region
    _
  $region13: #{forward.1} parent=0 // pred_fallthru
    _
  // Predicated region
  $region14: #{forward.1} parent=0 // pred_check
    _
  $region15: #{forward.1} parent=0 // pred_check_branch
    %19 = sbr.rel (0) target = $region17
  $region16: #{forward.1} parent=0 // pred_region
    _
  $region17: #{forward.1} parent=0 // pred_fallthru
    _
  // Predicated region
  $region18: #{forward.1} parent=0 // pred_check
    _
  $region19: #{forward.1} parent=0 // pred_check_branch
    %21 = sbr.rel (0) target = $region21
  $region20: #{forward.1} parent=0 // pred_region
    _
  $region21: #{forward.1} parent=0 // pred_fallthru
    _
  // Predicated region
  $region22: #{forward.1} parent=0 // pred_check
    _
  $region23: #{forward.1} parent=0 // pred_check_branch
    %23 = sbr.rel (0) target = $region25
  $region24: #{forward.1} parent=0 // pred_region
    _
  $region25: #{forward.1} parent=0 // pred_fallthru
    _
  // Predicated region
  $region26: #{forward.1} parent=0 // pred_check
    _
  $region27: #{forward.1} parent=0 // pred_check_branch
    %25 = sbr.rel (0) target = $region29
  $region28: #{forward.1} parent=0 // pred_region
    _
  $region29: #{forward.1} parent=0 // pred_fallthru
    _
  %v27 = vld [vmem:[%s0] sm:$0xff]
  %v28 = vld [vmem:[%s0 + $0x8] sm:$0xff]
  %v29 = vld [vmem:[%s0 + $0x10] sm:$0xff]
  %v30 = vld [vmem:[%s0 + $0x18] sm:$0xff]
  %v31 = vld [vmem:[%s0 + $0x20] sm:$0xff]
  %v32 = vld [vmem:[%s0 + $0x28] sm:$0xff]
  %v33 = vld [vmem:[%s1] sm:$0xff]
  %v34 = vld [vmem:[%s1 + $0x8] sm:$0xff]
  %v35 = vld [vmem:[%s1 + $0x10] sm:$0xff]
  %v36 = vld [vmem:[%s1 + $0x18] sm:$0xff]
  %v37 = vld [vmem:[%s1 + $0x20] sm:$0xff]
  %v38 = vld [vmem:[%s1 + $0x28] sm:$0xff]
  %v39 = vld [vmem:[%s1 + $0x30] sm:$0xff]
  %v40 = vld [vmem:[%s1 + $0x38] sm:$0xff]
  %v41 = vld [vmem:[%s1 + $0x40] sm:$0xff]
  %v42 = vld [vmem:[%s1 + $0x48] sm:$0xff]
  %v43 = vld [vmem:[%s1 + $0x50] sm:$0xff]
  %v44 = vld [vmem:[%s1 + $0x58] sm:$0xff]
  %v45 = vld [vmem:[%s1 + $0x60] sm:$0xff]
  %v46 = vld [vmem:[%s1 + $0x68] sm:$0xff]
  %v47 = vld [vmem:[%s1 + $0x70] sm:$0xff]
  %v48 = vld [vmem:[%s1 + $0x78] sm:$0xff]
  %v49 = vld [vmem:[%s1 + $0x80] sm:$0xff]
  %v50 = vld [vmem:[%s1 + $0x88] sm:$0xff]
  %v51 = vld [vmem:[%s1 + $0x90] sm:$0xff]
  %v52 = vld [vmem:[%s1 + $0x98] sm:$0xff]
  %v53 = vld [vmem:[%s1 + $0xa0] sm:$0xff]
  %v54 = vld [vmem:[%s1 + $0xa8] sm:$0xff]
  %v55 = vld [vmem:[%s1 + $0xb0] sm:$0xff]
  %v56 = vld [vmem:[%s1 + $0xb8] sm:$0xff]
  %v57 = vld [vmem:[%s1 + $0xc0] sm:$0xff]
  %v58 = vld [vmem:[%s1 + $0xc8] sm:$0xff]
  %v59 = vld [vmem:[%s1 + $0xd0] sm:$0xff]
  %v60 = vld [vmem:[%s1 + $0xd8] sm:$0xff]
  %v61 = vld [vmem:[%s1 + $0xe0] sm:$0xff]
  %v62 = vld [vmem:[%s1 + $0xe8] sm:$0xff]
  %v63 = vld [vmem:[%s1 + $0xf0] sm:$0xff]
  %v64 = vld [vmem:[%s1 + $0xf8] sm:$0xff]
  %v65 = vld [vmem:[%s1 + $0x100] sm:$0xff]
  %v66 = vld [vmem:[%s1 + $0x108] sm:$0xff]
  %v67 = vld [vmem:[%s1 + $0x110] sm:$0xff]
  %v68 = vld [vmem:[%s1 + $0x118] sm:$0xff]
  %v69 = vld [vmem:[%s1 + $0x120] sm:$0xff]
  %v70 = vld [vmem:[%s1 + $0x128] sm:$0xff]
  %v71 = vld [vmem:[%s1 + $0x130] sm:$0xff]
  %v72 = vld [vmem:[%s1 + $0x138] sm:$0xff]
  %v73 = vld [vmem:[%s1 + $0x140] sm:$0xff]
  %v74 = vld [vmem:[%s1 + $0x148] sm:$0xff]
  %v75 = vld [vmem:[%s1 + $0x150] sm:$0xff]
  %v76 = vld [vmem:[%s1 + $0x158] sm:$0xff]
  %v77 = vld [vmem:[%s1 + $0x160] sm:$0xff]
  %v78 = vld [vmem:[%s1 + $0x168] sm:$0xff]
  %v79 = vld [vmem:[%s1 + $0x170] sm:$0xff]
  %v80 = vld [vmem:[%s1 + $0x178] sm:$0xff]
  %v81 = vld [vmem:[%s1 + $0x180] sm:$0xff]
  %v82 = vld [vmem:[%s1 + $0x188] sm:$0xff]
  %v83 = vld [vmem:[%s1 + $0x190] sm:$0xff]
  %v84 = vld [vmem:[%s1 + $0x198] sm:$0xff]
  %v85 = vld [vmem:[%s1 + $0x1a0] sm:$0xff]
  %v86 = vld [vmem:[%s1 + $0x1a8] sm:$0xff]
  %v87 = vld [vmem:[%s1 + $0x1b0] sm:$0xff]
  %v88 = vld [vmem:[%s1 + $0x1b8] sm:$0xff]
  %v89 = vld [vmem:[%s1 + $0x1c0] sm:$0xff]
  %v90 = vld [vmem:[%s1 + $0x1c8] sm:$0xff]
  %v91 = vld [vmem:[%s1 + $0x1d0] sm:$0xff]
  %v92 = vld [vmem:[%s1 + $0x1d8] sm:$0xff]
  %v93 = vld [vmem:[%s1 + $0x1e0] sm:$0xff]
  %v94 = vld [vmem:[%s1 + $0x1e8] sm:$0xff]
  %v95 = vld [vmem:[%s1 + $0x1f0] sm:$0xff]
  %v96 = vld [vmem:[%s1 + $0x1f8] sm:$0xff]
  %v97 = vld [vmem:[%s1 + $0x200] sm:$0xff]
  %v98 = vld [vmem:[%s1 + $0x208] sm:$0xff]
  %v99 = vld [vmem:[%s1 + $0x210] sm:$0xff]
  %v100 = vld [vmem:[%s1 + $0x218] sm:$0xff]
  %v101 = vld [vmem:[%s1 + $0x220] sm:$0xff]
  %v102 = vld [vmem:[%s1 + $0x228] sm:$0xff]
  %v103 = vld [vmem:[%s1 + $0x230] sm:$0xff]
  %v104 = vld [vmem:[%s1 + $0x238] sm:$0xff]
  %v105 = vld [vmem:[%s1 + $0x240] sm:$0xff]
  %v106 = vld [vmem:[%s1 + $0x248] sm:$0xff]
  %v107 = vld [vmem:[%s1 + $0x250] sm:$0xff]
  %v108 = vld [vmem:[%s1 + $0x258] sm:$0xff]
  %v109 = vld [vmem:[%s1 + $0x260] sm:$0xff]
  %v110 = vld [vmem:[%s1 + $0x268] sm:$0xff]
  %v111 = vld [vmem:[%s1 + $0x270] sm:$0xff]
  %v112 = vld [vmem:[%s1 + $0x278] sm:$0xff]
  %v113 = vld [vmem:[%s1 + $0x280] sm:$0xff]
  %v114 = vld [vmem:[%s1 + $0x288] sm:$0xff]
  %v115 = vld [vmem:[%s1 + $0x290] sm:$0xff]
  %v116 = vld [vmem:[%s1 + $0x298] sm:$0xff]
  %v117 = vld [vmem:[%s1 + $0x2a0] sm:$0xff]
  %v118 = vld [vmem:[%s1 + $0x2a8] sm:$0xff]
  %v119 = vld [vmem:[%s1 + $0x2b0] sm:$0xff]
  %v120 = vld [vmem:[%s1 + $0x2b8] sm:$0xff]
  %v121 = vld [vmem:[%s1 + $0x2c0] sm:$0xff]
  %v122 = vld [vmem:[%s1 + $0x2c8] sm:$0xff]
  %v123 = vld [vmem:[%s1 + $0x2d0] sm:$0xff]
  %v124 = vld [vmem:[%s1 + $0x2d8] sm:$0xff]
  %v125 = vld [vmem:[%s1 + $0x2e0] sm:$0xff]
  %v126 = vld [vmem:[%s1 + $0x2e8] sm:$0xff]
  %v127 = vld [vmem:[%s1 + $0x2f0] sm:$0xff]
  %v128 = vld [vmem:[%s1 + $0x2f8] sm:$0xff]
  %v129 = vld [vmem:[%s1 + $0x300] sm:$0xff]
  %v130 = vld [vmem:[%s1 + $0x308] sm:$0xff]
  %v131 = vld [vmem:[%s1 + $0x310] sm:$0xff]
  %v132 = vld [vmem:[%s1 + $0x318] sm:$0xff]
  %v133 = vld [vmem:[%s1 + $0x320] sm:$0xff]
  %v134 = vld [vmem:[%s1 + $0x328] sm:$0xff]
  %v135 = vld [vmem:[%s1 + $0x330] sm:$0xff]
  %v136 = vld [vmem:[%s1 + $0x338] sm:$0xff]
  %v137 = vld [vmem:[%s1 + $0x340] sm:$0xff]
  %v138 = vld [vmem:[%s1 + $0x348] sm:$0xff]
  %v139 = vld [vmem:[%s1 + $0x350] sm:$0xff]
  %v140 = vld [vmem:[%s1 + $0x358] sm:$0xff]
  %v141 = vld [vmem:[%s1 + $0x360] sm:$0xff]
  %v142 = vld [vmem:[%s1 + $0x368] sm:$0xff]
  %v143 = vld [vmem:[%s1 + $0x370] sm:$0xff]
  %v144 = vld [vmem:[%s1 + $0x378] sm:$0xff]
  %v145 = vld [vmem:[%s1 + $0x380] sm:$0xff]
  %v146 = vld [vmem:[%s1 + $0x388] sm:$0xff]
  %v147 = vld [vmem:[%s1 + $0x390] sm:$0xff]
  %v148 = vld [vmem:[%s1 + $0x398] sm:$0xff]
  %v149 = vld [vmem:[%s1 + $0x3a0] sm:$0xff]
  %v150 = vld [vmem:[%s1 + $0x3a8] sm:$0xff]
  %v151 = vld [vmem:[%s1 + $0x3b0] sm:$0xff]
  %v152 = vld [vmem:[%s1 + $0x3b8] sm:$0xff]
  %v153 = vld [vmem:[%s1 + $0x3c0] sm:$0xff]
  %v154 = vld [vmem:[%s1 + $0x3c8] sm:$0xff]
  %v155 = vld [vmem:[%s1 + $0x3d0] sm:$0xff]
  %v156 = vld [vmem:[%s1 + $0x3d8] sm:$0xff]
  %v157 = vld [vmem:[%s1 + $0x3e0] sm:$0xff]
  %v158 = vld [vmem:[%s1 + $0x3e8] sm:$0xff]
  %v159 = vld [vmem:[%s1 + $0x3f0] sm:$0xff]
  %v160 = vld [vmem:[%s1 + $0x3f8] sm:$0xff]
  %v161 = vld [vmem:[%s1 + $0x400] sm:$0xff]
  %v162 = vld [vmem:[%s1 + $0x408] sm:$0xff]
  %v163 = vld [vmem:[%s1 + $0x410] sm:$0xff]
  %v164 = vld [vmem:[%s1 + $0x418] sm:$0xff]
  %v165 = vld [vmem:[%s1 + $0x420] sm:$0xff]
  %v166 = vld [vmem:[%s1 + $0x428] sm:$0xff]
  %v167 = vld [vmem:[%s1 + $0x430] sm:$0xff]
  %v168 = vld [vmem:[%s1 + $0x438] sm:$0xff]
  %v169 = vld [vmem:[%s1 + $0x440] sm:$0xff]
  %v170 = vld [vmem:[%s1 + $0x448] sm:$0xff]
  %v171 = vld [vmem:[%s1 + $0x450] sm:$0xff]
  %v172 = vld [vmem:[%s1 + $0x458] sm:$0xff]
  %v173 = vld [vmem:[%s1 + $0x460] sm:$0xff]
  %v174 = vld [vmem:[%s1 + $0x468] sm:$0xff]
  %v175 = vld [vmem:[%s1 + $0x470] sm:$0xff]
  %v176 = vld [vmem:[%s1 + $0x478] sm:$0xff]
  %v177 = vld [vmem:[%s1 + $0x480] sm:$0xff]
  %v178 = vld [vmem:[%s1 + $0x488] sm:$0xff]
  %v179 = vld [vmem:[%s1 + $0x490] sm:$0xff]
  %v180 = vld [vmem:[%s1 + $0x498] sm:$0xff]
  %v181 = vld [vmem:[%s1 + $0x4a0] sm:$0xff]
  %v182 = vld [vmem:[%s1 + $0x4a8] sm:$0xff]
  %v183 = vld [vmem:[%s1 + $0x4b0] sm:$0xff]
  %v184 = vld [vmem:[%s1 + $0x4b8] sm:$0xff]
  %v185 = vld [vmem:[%s1 + $0x4c0] sm:$0xff]
  %v186 = vld [vmem:[%s1 + $0x4c8] sm:$0xff]
  %v187 = vld [vmem:[%s1 + $0x4d0] sm:$0xff]
  %v188 = vld [vmem:[%s1 + $0x4d8] sm:$0xff]
  %v189 = vld [vmem:[%s1 + $0x4e0] sm:$0xff]
  %v190 = vld [vmem:[%s1 + $0x4e8] sm:$0xff]
  %v191 = vld [vmem:[%s1 + $0x4f0] sm:$0xff]
  %v192 = vld [vmem:[%s1 + $0x4f8] sm:$0xff]
  %v193 = vld [vmem:[%s1 + $0x500] sm:$0xff]
  %v194 = vld [vmem:[%s1 + $0x508] sm:$0xff]
  %v195 = vld [vmem:[%s1 + $0x510] sm:$0xff]
  %v196 = vld [vmem:[%s1 + $0x518] sm:$0xff]
  %v197 = vld [vmem:[%s1 + $0x520] sm:$0xff]
  %v198 = vld [vmem:[%s1 + $0x528] sm:$0xff]
  %v199 = vld [vmem:[%s1 + $0x530] sm:$0xff]
  %v200 = vld [vmem:[%s1 + $0x538] sm:$0xff]
  %v201 = vld [vmem:[%s1 + $0x540] sm:$0xff]
  %v202 = vld [vmem:[%s1 + $0x548] sm:$0xff]
  %v203 = vld [vmem:[%s1 + $0x550] sm:$0xff]
  %v204 = vld [vmem:[%s1 + $0x558] sm:$0xff]
  %v205 = vld [vmem:[%s1 + $0x560] sm:$0xff]
  %v206 = vld [vmem:[%s1 + $0x568] sm:$0xff]
  %v207 = vld [vmem:[%s1 + $0x570] sm:$0xff]
  %v208 = vld [vmem:[%s1 + $0x578] sm:$0xff]
  %v209 = vld [vmem:[%s1 + $0x580] sm:$0xff]
  %v210 = vld [vmem:[%s1 + $0x588] sm:$0xff]
  %v211 = vld [vmem:[%s1 + $0x590] sm:$0xff]
  %v212 = vld [vmem:[%s1 + $0x598] sm:$0xff]
  %v213 = vld [vmem:[%s1 + $0x5a0] sm:$0xff]
  %v214 = vld [vmem:[%s1 + $0x5a8] sm:$0xff]
  %v215 = vld [vmem:[%s1 + $0x5b0] sm:$0xff]
  %v216 = vld [vmem:[%s1 + $0x5b8] sm:$0xff]
  %v217 = vld [vmem:[%s1 + $0x5c0] sm:$0xff]
  %v218 = vld [vmem:[%s1 + $0x5c8] sm:$0xff]
  %v219 = vld [vmem:[%s1 + $0x5d0] sm:$0xff]
  %v220 = vld [vmem:[%s1 + $0x5d8] sm:$0xff]
  %v221 = vld [vmem:[%s1 + $0x5e0] sm:$0xff]
  %v222 = vld [vmem:[%s1 + $0x5e8] sm:$0xff]
  %v223 = vld [vmem:[%s1 + $0x5f0] sm:$0xff]
  %v224 = vld [vmem:[%s1 + $0x5f8] sm:$0xff]
  %v225 = vld [vmem:[%s1 + $0x600] sm:$0xff]
  %v226 = vld [vmem:[%s1 + $0x608] sm:$0xff]
  %v227 = vld [vmem:[%s1 + $0x610] sm:$0xff]
  %v228 = vld [vmem:[%s1 + $0x618] sm:$0xff]
  %v229 = vld [vmem:[%s1 + $0x620] sm:$0xff]
  %v230 = vld [vmem:[%s1 + $0x628] sm:$0xff]
  %v231 = vld [vmem:[%s1 + $0x630] sm:$0xff]
  %v232 = vld [vmem:[%s1 + $0x638] sm:$0xff]
  %v233 = vld [vmem:[%s1 + $0x640] sm:$0xff]
  %v234 = vld [vmem:[%s1 + $0x648] sm:$0xff]
  %v235 = vld [vmem:[%s1 + $0x650] sm:$0xff]
  %v236 = vld [vmem:[%s1 + $0x658] sm:$0xff]
  %v237 = vld [vmem:[%s1 + $0x660] sm:$0xff]
  %v238 = vld [vmem:[%s1 + $0x668] sm:$0xff]
  %v239 = vld [vmem:[%s1 + $0x670] sm:$0xff]
  %v240 = vld [vmem:[%s1 + $0x678] sm:$0xff]
  %v241 = vld [vmem:[%s1 + $0x680] sm:$0xff]
  %v242 = vld [vmem:[%s1 + $0x688] sm:$0xff]
  %v243 = vld [vmem:[%s1 + $0x690] sm:$0xff]
  %v244 = vld [vmem:[%s1 + $0x698] sm:$0xff]
  %v245 = vld [vmem:[%s1 + $0x6a0] sm:$0xff]
  %v246 = vld [vmem:[%s1 + $0x6a8] sm:$0xff]
  %v247 = vld [vmem:[%s1 + $0x6b0] sm:$0xff]
  %v248 = vld [vmem:[%s1 + $0x6b8] sm:$0xff]
  %v249 = vld [vmem:[%s1 + $0x6c0] sm:$0xff]
  %v250 = vld [vmem:[%s1 + $0x6c8] sm:$0xff]
  %v251 = vld [vmem:[%s1 + $0x6d0] sm:$0xff]
  %v252 = vld [vmem:[%s1 + $0x6d8] sm:$0xff]
  %v253 = vld [vmem:[%s1 + $0x6e0] sm:$0xff]
  %v254 = vld [vmem:[%s1 + $0x6e8] sm:$0xff]
  %v255 = vld [vmem:[%s1 + $0x6f0] sm:$0xff]
  %v256 = vld [vmem:[%s1 + $0x6f8] sm:$0xff]
  %v257 = vld [vmem:[%s1 + $0x700] sm:$0xff]
  %v258 = vld [vmem:[%s1 + $0x708] sm:$0xff]
  %v259 = vld [vmem:[%s1 + $0x710] sm:$0xff]
  %v260 = vld [vmem:[%s1 + $0x718] sm:$0xff]
  %v261 = vld [vmem:[%s1 + $0x720] sm:$0xff]
  %v262 = vld [vmem:[%s1 + $0x728] sm:$0xff]
  %v263 = vld [vmem:[%s1 + $0x730] sm:$0xff]
  %v264 = vld [vmem:[%s1 + $0x738] sm:$0xff]
  %v265 = vld [vmem:[%s1 + $0x740] sm:$0xff]
  %v266 = vld [vmem:[%s1 + $0x748] sm:$0xff]
  %v267 = vld [vmem:[%s1 + $0x750] sm:$0xff]
  %v268 = vld [vmem:[%s1 + $0x758] sm:$0xff]
  %v269 = vld [vmem:[%s1 + $0x760] sm:$0xff]
  %v270 = vld [vmem:[%s1 + $0x768] sm:$0xff]
  %v271 = vld [vmem:[%s1 + $0x770] sm:$0xff]
  %v272 = vld [vmem:[%s1 + $0x778] sm:$0xff]
  %v273 = vld [vmem:[%s1 + $0x780] sm:$0xff]
  %v274 = vld [vmem:[%s1 + $0x788] sm:$0xff]
  %v275 = vld [vmem:[%s1 + $0x790] sm:$0xff]
  %v276 = vld [vmem:[%s1 + $0x798] sm:$0xff]
  %v277 = vld [vmem:[%s1 + $0x7a0] sm:$0xff]
  %v278 = vld [vmem:[%s1 + $0x7a8] sm:$0xff]
  %v279 = vld [vmem:[%s1 + $0x7b0] sm:$0xff]
  %v280 = vld [vmem:[%s1 + $0x7b8] sm:$0xff]
  %v281 = vld [vmem:[%s1 + $0x7c0] sm:$0xff]
  %v282 = vld [vmem:[%s1 + $0x7c8] sm:$0xff]
  %v283 = vld [vmem:[%s1 + $0x7d0] sm:$0xff]
  %v284 = vld [vmem:[%s1 + $0x7d8] sm:$0xff]
  %v285 = vld [vmem:[%s1 + $0x7e0] sm:$0xff]
  %v286 = vld [vmem:[%s1 + $0x7e8] sm:$0xff]
  %v287 = vld [vmem:[%s1 + $0x7f0] sm:$0xff]
  %v288 = vld [vmem:[%s1 + $0x7f8] sm:$0xff]
  %v289 = vld [vmem:[%s1 + $0x800] sm:$0xff]
  %v290 = vld [vmem:[%s1 + $0x808] sm:$0xff]
  %v291 = vld [vmem:[%s1 + $0x810] sm:$0xff]
  %v292 = vld [vmem:[%s1 + $0x818] sm:$0xff]
  %v293 = vld [vmem:[%s1 + $0x820] sm:$0xff]
  %v294 = vld [vmem:[%s1 + $0x828] sm:$0xff]
  %v295 = vld [vmem:[%s1 + $0x830] sm:$0xff]
  %v296 = vld [vmem:[%s1 + $0x838] sm:$0xff]
  %v297 = vld [vmem:[%s1 + $0x840] sm:$0xff]
  %v298 = vld [vmem:[%s1 + $0x848] sm:$0xff]
  %v299 = vld [vmem:[%s1 + $0x850] sm:$0xff]
  %v300 = vld [vmem:[%s1 + $0x858] sm:$0xff]
  %v301 = vld [vmem:[%s1 + $0x860] sm:$0xff]
  %v302 = vld [vmem:[%s1 + $0x868] sm:$0xff]
  %v303 = vld [vmem:[%s1 + $0x870] sm:$0xff]
  %v304 = vld [vmem:[%s1 + $0x878] sm:$0xff]
  %v305 = vld [vmem:[%s1 + $0x880] sm:$0xff]
  %v306 = vld [vmem:[%s1 + $0x888] sm:$0xff]
  %v307 = vld [vmem:[%s1 + $0x890] sm:$0xff]
  %v308 = vld [vmem:[%s1 + $0x898] sm:$0xff]
  %v309 = vld [vmem:[%s1 + $0x8a0] sm:$0xff]
  %v310 = vld [vmem:[%s1 + $0x8a8] sm:$0xff]
  %v311 = vld [vmem:[%s1 + $0x8b0] sm:$0xff]
  %v312 = vld [vmem:[%s1 + $0x8b8] sm:$0xff]
  %v313 = vld [vmem:[%s1 + $0x8c0] sm:$0xff]
  %v314 = vld [vmem:[%s1 + $0x8c8] sm:$0xff]
  %v315 = vld [vmem:[%s1 + $0x8d0] sm:$0xff]
  %v316 = vld [vmem:[%s1 + $0x8d8] sm:$0xff]
  %v317 = vld [vmem:[%s1 + $0x8e0] sm:$0xff]
  %v318 = vld [vmem:[%s1 + $0x8e8] sm:$0xff]
  %v319 = vld [vmem:[%s1 + $0x8f0] sm:$0xff]
  %v320 = vld [vmem:[%s1 + $0x8f8] sm:$0xff]
  %v321 = vld [vmem:[%s2] sm:$0x3f]
  %v323 = vlaneseq
  %v324 = vshrl.u32 %v323, 7
  %v325 = vsub.s32 0, %v324
  %v326 = vrot.slane %v321, %v325
  %v327 = vlaneseq
  %v328 = vshrl.u32 %v327, 7
  %v329 = vsub.s32 1, %v328
  %v330 = vrot.slane %v321, %v329
  %v331 = vlaneseq
  %v332 = vshrl.u32 %v331, 7
  %v333 = vsub.s32 2, %v332
  %v334 = vrot.slane %v321, %v333
  %v335 = vlaneseq
  %v336 = vshrl.u32 %v335, 7
  %v337 = vsub.s32 3, %v336
  %v338 = vrot.slane %v321, %v337
  %v339 = vlaneseq
  %v340 = vshrl.u32 %v339, 7
  %v341 = vsub.s32 4, %v340
  %v342 = vrot.slane %v321, %v341
  %v343 = vlaneseq
  %v344 = vshrl.u32 %v343, 7
  %v345 = vsub.s32 5, %v344
  %v346 = vrot.slane %v321, %v345
  %v359 = vunpack.c.l.b16 %v27
  %v360 = vunpack.c.h.b16 %v27
  %v361 = vunpack.c.l.b16 %v28
  %v362 = vunpack.c.h.b16 %v28
  %v363 = vunpack.c.l.b16 %v29
  %v364 = vunpack.c.h.b16 %v29
  %v365 = vunpack.c.l.b16 %v30
  %v366 = vunpack.c.h.b16 %v30
  %v367 = vunpack.c.l.b16 %v31
  %v368 = vunpack.c.h.b16 %v31
  %v369 = vunpack.c.l.b16 %v32
  %v370 = vunpack.c.h.b16 %v32
  %v371 = vpack.c.b16 %v365, %v359
  %v372 = vpack.c.b16 %v366, %v360
  %v373 = vpack.c.b16 %v367, %v361
  %v374 = vpack.c.b16 %v368, %v362
  %v375 = vpack.c.b16 %v369, %v363
  %v376 = vpack.c.b16 %v370, %v364
  %v671 = vunpack.c.l.b16 %v33
  %v672 = vunpack.c.h.b16 %v33
  %v673 = vunpack.c.l.b16 %v34
  %v674 = vunpack.c.h.b16 %v34
  %v675 = vunpack.c.l.b16 %v35
  %v676 = vunpack.c.h.b16 %v35
  %v677 = vunpack.c.l.b16 %v36
  %v678 = vunpack.c.h.b16 %v36
  %v679 = vunpack.c.l.b16 %v37
  %v680 = vunpack.c.h.b16 %v37
  %v681 = vunpack.c.l.b16 %v38
  %v682 = vunpack.c.h.b16 %v38
  %v683 = vunpack.c.l.b16 %v39
  %v684 = vunpack.c.h.b16 %v39
  %v685 = vunpack.c.l.b16 %v40
  %v686 = vunpack.c.h.b16 %v40
  %v687 = vunpack.c.l.b16 %v41
  %v688 = vunpack.c.h.b16 %v41
  %v689 = vunpack.c.l.b16 %v42
  %v690 = vunpack.c.h.b16 %v42
  %v691 = vunpack.c.l.b16 %v43
  %v692 = vunpack.c.h.b16 %v43
  %v693 = vunpack.c.l.b16 %v44
  %v694 = vunpack.c.h.b16 %v44
  %v695 = vunpack.c.l.b16 %v45
  %v696 = vunpack.c.h.b16 %v45
  %v697 = vunpack.c.l.b16 %v46
  %v698 = vunpack.c.h.b16 %v46
  %v699 = vunpack.c.l.b16 %v47
  %v700 = vunpack.c.h.b16 %v47
  %v701 = vunpack.c.l.b16 %v48
  %v702 = vunpack.c.h.b16 %v48
  %v703 = vunpack.c.l.b16 %v49
  %v704 = vunpack.c.h.b16 %v49
  %v705 = vunpack.c.l.b16 %v50
  %v706 = vunpack.c.h.b16 %v50
  %v707 = vunpack.c.l.b16 %v51
  %v708 = vunpack.c.h.b16 %v51
  %v709 = vunpack.c.l.b16 %v52
  %v710 = vunpack.c.h.b16 %v52
  %v711 = vunpack.c.l.b16 %v53
  %v712 = vunpack.c.h.b16 %v53
  %v713 = vunpack.c.l.b16 %v54
  %v714 = vunpack.c.h.b16 %v54
  %v715 = vunpack.c.l.b16 %v55
  %v716 = vunpack.c.h.b16 %v55
  %v717 = vunpack.c.l.b16 %v56
  %v718 = vunpack.c.h.b16 %v56
  %v719 = vunpack.c.l.b16 %v57
  %v720 = vunpack.c.h.b16 %v57
  %v721 = vunpack.c.l.b16 %v58
  %v722 = vunpack.c.h.b16 %v58
  %v723 = vunpack.c.l.b16 %v59
  %v724 = vunpack.c.h.b16 %v59
  %v725 = vunpack.c.l.b16 %v60
  %v726 = vunpack.c.h.b16 %v60
  %v727 = vunpack.c.l.b16 %v61
  %v728 = vunpack.c.h.b16 %v61
  %v729 = vunpack.c.l.b16 %v62
  %v730 = vunpack.c.h.b16 %v62
  %v731 = vunpack.c.l.b16 %v63
  %v732 = vunpack.c.h.b16 %v63
  %v733 = vunpack.c.l.b16 %v64
  %v734 = vunpack.c.h.b16 %v64
  %v735 = vunpack.c.l.b16 %v65
  %v736 = vunpack.c.h.b16 %v65
  %v737 = vunpack.c.l.b16 %v66
  %v738 = vunpack.c.h.b16 %v66
  %v739 = vunpack.c.l.b16 %v67
  %v740 = vunpack.c.h.b16 %v67
  %v741 = vunpack.c.l.b16 %v68
  %v742 = vunpack.c.h.b16 %v68
  %v743 = vunpack.c.l.b16 %v69
  %v744 = vunpack.c.h.b16 %v69
  %v745 = vunpack.c.l.b16 %v70
  %v746 = vunpack.c.h.b16 %v70
  %v747 = vunpack.c.l.b16 %v71
  %v748 = vunpack.c.h.b16 %v71
  %v749 = vunpack.c.l.b16 %v72
  %v750 = vunpack.c.h.b16 %v72
  %v751 = vunpack.c.l.b16 %v73
  %v752 = vunpack.c.h.b16 %v73
  %v753 = vunpack.c.l.b16 %v74
  %v754 = vunpack.c.h.b16 %v74
  %v755 = vunpack.c.l.b16 %v75
  %v756 = vunpack.c.h.b16 %v75
  %v757 = vunpack.c.l.b16 %v76
  %v758 = vunpack.c.h.b16 %v76
  %v759 = vunpack.c.l.b16 %v77
  %v760 = vunpack.c.h.b16 %v77
  %v761 = vunpack.c.l.b16 %v78
  %v762 = vunpack.c.h.b16 %v78
  %v763 = vunpack.c.l.b16 %v79
  %v764 = vunpack.c.h.b16 %v79
  %v765 = vunpack.c.l.b16 %v80
  %v766 = vunpack.c.h.b16 %v80
  %v767 = vunpack.c.l.b16 %v81
  %v768 = vunpack.c.h.b16 %v81
  %v769 = vunpack.c.l.b16 %v82
  %v770 = vunpack.c.h.b16 %v82
  %v771 = vunpack.c.l.b16 %v83
  %v772 = vunpack.c.h.b16 %v83
  %v773 = vunpack.c.l.b16 %v84
  %v774 = vunpack.c.h.b16 %v84
  %v775 = vunpack.c.l.b16 %v85
  %v776 = vunpack.c.h.b16 %v85
  %v777 = vunpack.c.l.b16 %v86
  %v778 = vunpack.c.h.b16 %v86
  %v779 = vunpack.c.l.b16 %v87
  %v780 = vunpack.c.h.b16 %v87
  %v781 = vunpack.c.l.b16 %v88
  %v782 = vunpack.c.h.b16 %v88
  %v783 = vunpack.c.l.b16 %v89
  %v784 = vunpack.c.h.b16 %v89
  %v785 = vunpack.c.l.b16 %v90
  %v786 = vunpack.c.h.b16 %v90
  %v787 = vunpack.c.l.b16 %v91
  %v788 = vunpack.c.h.b16 %v91
  %v789 = vunpack.c.l.b16 %v92
  %v790 = vunpack.c.h.b16 %v92
  %v791 = vunpack.c.l.b16 %v93
  %v792 = vunpack.c.h.b16 %v93
  %v793 = vunpack.c.l.b16 %v94
  %v794 = vunpack.c.h.b16 %v94
  %v795 = vunpack.c.l.b16 %v95
  %v796 = vunpack.c.h.b16 %v95
  %v797 = vunpack.c.l.b16 %v96
  %v798 = vunpack.c.h.b16 %v96
  %v799 = vunpack.c.l.b16 %v97
  %v800 = vunpack.c.h.b16 %v97
  %v801 = vunpack.c.l.b16 %v98
  %v802 = vunpack.c.h.b16 %v98
  %v803 = vunpack.c.l.b16 %v99
  %v804 = vunpack.c.h.b16 %v99
  %v805 = vunpack.c.l.b16 %v100
  %v806 = vunpack.c.h.b16 %v100
  %v807 = vunpack.c.l.b16 %v101
  %v808 = vunpack.c.h.b16 %v101
  %v809 = vunpack.c.l.b16 %v102
  %v810 = vunpack.c.h.b16 %v102
  %v811 = vunpack.c.l.b16 %v103
  %v812 = vunpack.c.h.b16 %v103
  %v813 = vunpack.c.l.b16 %v104
  %v814 = vunpack.c.h.b16 %v104
  %v815 = vunpack.c.l.b16 %v105
  %v816 = vunpack.c.h.b16 %v105
  %v817 = vunpack.c.l.b16 %v106
  %v818 = vunpack.c.h.b16 %v106
  %v819 = vunpack.c.l.b16 %v107
  %v820 = vunpack.c.h.b16 %v107
  %v821 = vunpack.c.l.b16 %v108
  %v822 = vunpack.c.h.b16 %v108
  %v823 = vunpack.c.l.b16 %v109
  %v824 = vunpack.c.h.b16 %v109
  %v825 = vunpack.c.l.b16 %v110
  %v826 = vunpack.c.h.b16 %v110
  %v827 = vunpack.c.l.b16 %v111
  %v828 = vunpack.c.h.b16 %v111
  %v829 = vunpack.c.l.b16 %v112
  %v830 = vunpack.c.h.b16 %v112
  %v831 = vunpack.c.l.b16 %v113
  %v832 = vunpack.c.h.b16 %v113
  %v833 = vunpack.c.l.b16 %v114
  %v834 = vunpack.c.h.b16 %v114
  %v835 = vunpack.c.l.b16 %v115
  %v836 = vunpack.c.h.b16 %v115
  %v837 = vunpack.c.l.b16 %v116
  %v838 = vunpack.c.h.b16 %v116
  %v839 = vunpack.c.l.b16 %v117
  %v840 = vunpack.c.h.b16 %v117
  %v841 = vunpack.c.l.b16 %v118
  %v842 = vunpack.c.h.b16 %v118
  %v843 = vunpack.c.l.b16 %v119
  %v844 = vunpack.c.h.b16 %v119
  %v845 = vunpack.c.l.b16 %v120
  %v846 = vunpack.c.h.b16 %v120
  %v847 = vunpack.c.l.b16 %v121
  %v848 = vunpack.c.h.b16 %v121
  %v849 = vunpack.c.l.b16 %v122
  %v850 = vunpack.c.h.b16 %v122
  %v851 = vunpack.c.l.b16 %v123
  %v852 = vunpack.c.h.b16 %v123
  %v853 = vunpack.c.l.b16 %v124
  %v854 = vunpack.c.h.b16 %v124
  %v855 = vunpack.c.l.b16 %v125
  %v856 = vunpack.c.h.b16 %v125
  %v857 = vunpack.c.l.b16 %v126
  %v858 = vunpack.c.h.b16 %v126
  %v859 = vunpack.c.l.b16 %v127
  %v860 = vunpack.c.h.b16 %v127
  %v861 = vunpack.c.l.b16 %v128
  %v862 = vunpack.c.h.b16 %v128
  %v863 = vunpack.c.l.b16 %v129
  %v864 = vunpack.c.h.b16 %v129
  %v865 = vunpack.c.l.b16 %v130
  %v866 = vunpack.c.h.b16 %v130
  %v867 = vunpack.c.l.b16 %v131
  %v868 = vunpack.c.h.b16 %v131
  %v869 = vunpack.c.l.b16 %v132
  %v870 = vunpack.c.h.b16 %v132
  %v871 = vunpack.c.l.b16 %v133
  %v872 = vunpack.c.h.b16 %v133
  %v873 = vunpack.c.l.b16 %v134
  %v874 = vunpack.c.h.b16 %v134
  %v875 = vunpack.c.l.b16 %v135
  %v876 = vunpack.c.h.b16 %v135
  %v877 = vunpack.c.l.b16 %v136
  %v878 = vunpack.c.h.b16 %v136
  %v879 = vunpack.c.l.b16 %v137
  %v880 = vunpack.c.h.b16 %v137
  %v881 = vunpack.c.l.b16 %v138
  %v882 = vunpack.c.h.b16 %v138
  %v883 = vunpack.c.l.b16 %v139
  %v884 = vunpack.c.h.b16 %v139
  %v885 = vunpack.c.l.b16 %v140
  %v886 = vunpack.c.h.b16 %v140
  %v887 = vunpack.c.l.b16 %v141
  %v888 = vunpack.c.h.b16 %v141
  %v889 = vunpack.c.l.b16 %v142
  %v890 = vunpack.c.h.b16 %v142
  %v891 = vunpack.c.l.b16 %v143
  %v892 = vunpack.c.h.b16 %v143
  %v893 = vunpack.c.l.b16 %v144
  %v894 = vunpack.c.h.b16 %v144
  %v895 = vunpack.c.l.b16 %v145
  %v896 = vunpack.c.h.b16 %v145
  %v897 = vunpack.c.l.b16 %v146
  %v898 = vunpack.c.h.b16 %v146
  %v899 = vunpack.c.l.b16 %v147
  %v900 = vunpack.c.h.b16 %v147
  %v901 = vunpack.c.l.b16 %v148
  %v902 = vunpack.c.h.b16 %v148
  %v903 = vunpack.c.l.b16 %v149
  %v904 = vunpack.c.h.b16 %v149
  %v905 = vunpack.c.l.b16 %v150
  %v906 = vunpack.c.h.b16 %v150
  %v907 = vunpack.c.l.b16 %v151
  %v908 = vunpack.c.h.b16 %v151
  %v909 = vunpack.c.l.b16 %v152
  %v910 = vunpack.c.h.b16 %v152
  %v911 = vunpack.c.l.b16 %v153
  %v912 = vunpack.c.h.b16 %v153
  %v913 = vunpack.c.l.b16 %v154
  %v914 = vunpack.c.h.b16 %v154
  %v915 = vunpack.c.l.b16 %v155
  %v916 = vunpack.c.h.b16 %v155
  %v917 = vunpack.c.l.b16 %v156
  %v918 = vunpack.c.h.b16 %v156
  %v919 = vunpack.c.l.b16 %v157
  %v920 = vunpack.c.h.b16 %v157
  %v921 = vunpack.c.l.b16 %v158
  %v922 = vunpack.c.h.b16 %v158
  %v923 = vunpack.c.l.b16 %v159
  %v924 = vunpack.c.h.b16 %v159
  %v925 = vunpack.c.l.b16 %v160
  %v926 = vunpack.c.h.b16 %v160
  %v927 = vunpack.c.l.b16 %v161
  %v928 = vunpack.c.h.b16 %v161
  %v929 = vunpack.c.l.b16 %v162
  %v930 = vunpack.c.h.b16 %v162
  %v931 = vunpack.c.l.b16 %v163
  %v932 = vunpack.c.h.b16 %v163
  %v933 = vunpack.c.l.b16 %v164
  %v934 = vunpack.c.h.b16 %v164
  %v935 = vunpack.c.l.b16 %v165
  %v936 = vunpack.c.h.b16 %v165
  %v937 = vunpack.c.l.b16 %v166
  %v938 = vunpack.c.h.b16 %v166
  %v939 = vunpack.c.l.b16 %v167
  %v940 = vunpack.c.h.b16 %v167
  %v941 = vunpack.c.l.b16 %v168
  %v942 = vunpack.c.h.b16 %v168
  %v943 = vunpack.c.l.b16 %v169
  %v944 = vunpack.c.h.b16 %v169
  %v945 = vunpack.c.l.b16 %v170
  %v946 = vunpack.c.h.b16 %v170
  %v947 = vunpack.c.l.b16 %v171
  %v948 = vunpack.c.h.b16 %v171
  %v949 = vunpack.c.l.b16 %v172
  %v950 = vunpack.c.h.b16 %v172
  %v951 = vunpack.c.l.b16 %v173
  %v952 = vunpack.c.h.b16 %v173
  %v953 = vunpack.c.l.b16 %v174
  %v954 = vunpack.c.h.b16 %v174
  %v955 = vunpack.c.l.b16 %v175
  %v956 = vunpack.c.h.b16 %v175
  %v957 = vunpack.c.l.b16 %v176
  %v958 = vunpack.c.h.b16 %v176
  %v959 = vunpack.c.l.b16 %v177
  %v960 = vunpack.c.h.b16 %v177
  %v961 = vunpack.c.l.b16 %v178
  %v962 = vunpack.c.h.b16 %v178
  %v963 = vunpack.c.l.b16 %v179
  %v964 = vunpack.c.h.b16 %v179
  %v965 = vunpack.c.l.b16 %v180
  %v966 = vunpack.c.h.b16 %v180
  %v967 = vunpack.c.l.b16 %v181
  %v968 = vunpack.c.h.b16 %v181
  %v969 = vunpack.c.l.b16 %v182
  %v970 = vunpack.c.h.b16 %v182
  %v971 = vunpack.c.l.b16 %v183
  %v972 = vunpack.c.h.b16 %v183
  %v973 = vunpack.c.l.b16 %v184
  %v974 = vunpack.c.h.b16 %v184
  %v975 = vunpack.c.l.b16 %v185
  %v976 = vunpack.c.h.b16 %v185
  %v977 = vunpack.c.l.b16 %v186
  %v978 = vunpack.c.h.b16 %v186
  %v979 = vunpack.c.l.b16 %v187
  %v980 = vunpack.c.h.b16 %v187
  %v981 = vunpack.c.l.b16 %v188
  %v982 = vunpack.c.h.b16 %v188
  %v983 = vunpack.c.l.b16 %v189
  %v984 = vunpack.c.h.b16 %v189
  %v985 = vunpack.c.l.b16 %v190
  %v986 = vunpack.c.h.b16 %v190
  %v987 = vunpack.c.l.b16 %v191
  %v988 = vunpack.c.h.b16 %v191
  %v989 = vunpack.c.l.b16 %v192
  %v990 = vunpack.c.h.b16 %v192
  %v991 = vunpack.c.l.b16 %v193
  %v992 = vunpack.c.h.b16 %v193
  %v993 = vunpack.c.l.b16 %v194
  %v994 = vunpack.c.h.b16 %v194
  %v995 = vunpack.c.l.b16 %v195
  %v996 = vunpack.c.h.b16 %v195
  %v997 = vunpack.c.l.b16 %v196
  %v998 = vunpack.c.h.b16 %v196
  %v999 = vunpack.c.l.b16 %v197
  %v1000 = vunpack.c.h.b16 %v197
  %v1001 = vunpack.c.l.b16 %v198
  %v1002 = vunpack.c.h.b16 %v198
  %v1003 = vunpack.c.l.b16 %v199
  %v1004 = vunpack.c.h.b16 %v199
  %v1005 = vunpack.c.l.b16 %v200
  %v1006 = vunpack.c.h.b16 %v200
  %v1007 = vunpack.c.l.b16 %v201
  %v1008 = vunpack.c.h.b16 %v201
  %v1009 = vunpack.c.l.b16 %v202
  %v1010 = vunpack.c.h.b16 %v202
  %v1011 = vunpack.c.l.b16 %v203
  %v1012 = vunpack.c.h.b16 %v203
  %v1013 = vunpack.c.l.b16 %v204
  %v1014 = vunpack.c.h.b16 %v204
  %v1015 = vunpack.c.l.b16 %v205
  %v1016 = vunpack.c.h.b16 %v205
  %v1017 = vunpack.c.l.b16 %v206
  %v1018 = vunpack.c.h.b16 %v206
  %v1019 = vunpack.c.l.b16 %v207
  %v1020 = vunpack.c.h.b16 %v207
  %v1021 = vunpack.c.l.b16 %v208
  %v1022 = vunpack.c.h.b16 %v208
  %v1023 = vunpack.c.l.b16 %v209
  %v1024 = vunpack.c.h.b16 %v209
  %v1025 = vunpack.c.l.b16 %v210
  %v1026 = vunpack.c.h.b16 %v210
  %v1027 = vunpack.c.l.b16 %v211
  %v1028 = vunpack.c.h.b16 %v211
  %v1029 = vunpack.c.l.b16 %v212
  %v1030 = vunpack.c.h.b16 %v212
  %v1031 = vunpack.c.l.b16 %v213
  %v1032 = vunpack.c.h.b16 %v213
  %v1033 = vunpack.c.l.b16 %v214
  %v1034 = vunpack.c.h.b16 %v214
  %v1035 = vunpack.c.l.b16 %v215
  %v1036 = vunpack.c.h.b16 %v215
  %v1037 = vunpack.c.l.b16 %v216
  %v1038 = vunpack.c.h.b16 %v216
  %v1039 = vunpack.c.l.b16 %v217
  %v1040 = vunpack.c.h.b16 %v217
  %v1041 = vunpack.c.l.b16 %v218
  %v1042 = vunpack.c.h.b16 %v218
  %v1043 = vunpack.c.l.b16 %v219
  %v1044 = vunpack.c.h.b16 %v219
  %v1045 = vunpack.c.l.b16 %v220
  %v1046 = vunpack.c.h.b16 %v220
  %v1047 = vunpack.c.l.b16 %v221
  %v1048 = vunpack.c.h.b16 %v221
  %v1049 = vunpack.c.l.b16 %v222
  %v1050 = vunpack.c.h.b16 %v222
  %v1051 = vunpack.c.l.b16 %v223
  %v1052 = vunpack.c.h.b16 %v223
  %v1053 = vunpack.c.l.b16 %v224
  %v1054 = vunpack.c.h.b16 %v224
  %v1055 = vunpack.c.l.b16 %v225
  %v1056 = vunpack.c.h.b16 %v225
  %v1057 = vunpack.c.l.b16 %v226
  %v1058 = vunpack.c.h.b16 %v226
  %v1059 = vunpack.c.l.b16 %v227
  %v1060 = vunpack.c.h.b16 %v227
  %v1061 = vunpack.c.l.b16 %v228
  %v1062 = vunpack.c.h.b16 %v228
  %v1063 = vunpack.c.l.b16 %v229
  %v1064 = vunpack.c.h.b16 %v229
  %v1065 = vunpack.c.l.b16 %v230
  %v1066 = vunpack.c.h.b16 %v230
  %v1067 = vunpack.c.l.b16 %v231
  %v1068 = vunpack.c.h.b16 %v231
  %v1069 = vunpack.c.l.b16 %v232
  %v1070 = vunpack.c.h.b16 %v232
  %v1071 = vunpack.c.l.b16 %v233
  %v1072 = vunpack.c.h.b16 %v233
  %v1073 = vunpack.c.l.b16 %v234
  %v1074 = vunpack.c.h.b16 %v234
  %v1075 = vunpack.c.l.b16 %v235
  %v1076 = vunpack.c.h.b16 %v235
  %v1077 = vunpack.c.l.b16 %v236
  %v1078 = vunpack.c.h.b16 %v236
  %v1079 = vunpack.c.l.b16 %v237
  %v1080 = vunpack.c.h.b16 %v237
  %v1081 = vunpack.c.l.b16 %v238
  %v1082 = vunpack.c.h.b16 %v238
  %v1083 = vunpack.c.l.b16 %v239
  %v1084 = vunpack.c.h.b16 %v239
  %v1085 = vunpack.c.l.b16 %v240
  %v1086 = vunpack.c.h.b16 %v240
  %v1087 = vunpack.c.l.b16 %v241
  %v1088 = vunpack.c.h.b16 %v241
  %v1089 = vunpack.c.l.b16 %v242
  %v1090 = vunpack.c.h.b16 %v242
  %v1091 = vunpack.c.l.b16 %v243
  %v1092 = vunpack.c.h.b16 %v243
  %v1093 = vunpack.c.l.b16 %v244
  %v1094 = vunpack.c.h.b16 %v244
  %v1095 = vunpack.c.l.b16 %v245
  %v1096 = vunpack.c.h.b16 %v245
  %v1097 = vunpack.c.l.b16 %v246
  %v1098 = vunpack.c.h.b16 %v246
  %v1099 = vunpack.c.l.b16 %v247
  %v1100 = vunpack.c.h.b16 %v247
  %v1101 = vunpack.c.l.b16 %v248
  %v1102 = vunpack.c.h.b16 %v248
  %v1103 = vunpack.c.l.b16 %v249
  %v1104 = vunpack.c.h.b16 %v249
  %v1105 = vunpack.c.l.b16 %v250
  %v1106 = vunpack.c.h.b16 %v250
  %v1107 = vunpack.c.l.b16 %v251
  %v1108 = vunpack.c.h.b16 %v251
  %v1109 = vunpack.c.l.b16 %v252
  %v1110 = vunpack.c.h.b16 %v252
  %v1111 = vunpack.c.l.b16 %v253
  %v1112 = vunpack.c.h.b16 %v253
  %v1113 = vunpack.c.l.b16 %v254
  %v1114 = vunpack.c.h.b16 %v254
  %v1115 = vunpack.c.l.b16 %v255
  %v1116 = vunpack.c.h.b16 %v255
  %v1117 = vunpack.c.l.b16 %v256
  %v1118 = vunpack.c.h.b16 %v256
  %v1119 = vunpack.c.l.b16 %v257
  %v1120 = vunpack.c.h.b16 %v257
  %v1121 = vunpack.c.l.b16 %v258
  %v1122 = vunpack.c.h.b16 %v258
  %v1123 = vunpack.c.l.b16 %v259
  %v1124 = vunpack.c.h.b16 %v259
  %v1125 = vunpack.c.l.b16 %v260
  %v1126 = vunpack.c.h.b16 %v260
  %v1127 = vunpack.c.l.b16 %v261
  %v1128 = vunpack.c.h.b16 %v261
  %v1129 = vunpack.c.l.b16 %v262
  %v1130 = vunpack.c.h.b16 %v262
  %v1131 = vunpack.c.l.b16 %v263
  %v1132 = vunpack.c.h.b16 %v263
  %v1133 = vunpack.c.l.b16 %v264
  %v1134 = vunpack.c.h.b16 %v264
  %v1135 = vunpack.c.l.b16 %v265
  %v1136 = vunpack.c.h.b16 %v265
  %v1137 = vunpack.c.l.b16 %v266
  %v1138 = vunpack.c.h.b16 %v266
  %v1139 = vunpack.c.l.b16 %v267
  %v1140 = vunpack.c.h.b16 %v267
  %v1141 = vunpack.c.l.b16 %v268
  %v1142 = vunpack.c.h.b16 %v268
  %v1143 = vunpack.c.l.b16 %v269
  %v1144 = vunpack.c.h.b16 %v269
  %v1145 = vunpack.c.l.b16 %v270
  %v1146 = vunpack.c.h.b16 %v270
  %v1147 = vunpack.c.l.b16 %v271
  %v1148 = vunpack.c.h.b16 %v271
  %v1149 = vunpack.c.l.b16 %v272
  %v1150 = vunpack.c.h.b16 %v272
  %v1151 = vunpack.c.l.b16 %v273
  %v1152 = vunpack.c.h.b16 %v273
  %v1153 = vunpack.c.l.b16 %v274
  %v1154 = vunpack.c.h.b16 %v274
  %v1155 = vunpack.c.l.b16 %v275
  %v1156 = vunpack.c.h.b16 %v275
  %v1157 = vunpack.c.l.b16 %v276
  %v1158 = vunpack.c.h.b16 %v276
  %v1159 = vunpack.c.l.b16 %v277
  %v1160 = vunpack.c.h.b16 %v277
  %v1161 = vunpack.c.l.b16 %v278
  %v1162 = vunpack.c.h.b16 %v278
  %v1163 = vunpack.c.l.b16 %v279
  %v1164 = vunpack.c.h.b16 %v279
  %v1165 = vunpack.c.l.b16 %v280
  %v1166 = vunpack.c.h.b16 %v280
  %v1167 = vunpack.c.l.b16 %v281
  %v1168 = vunpack.c.h.b16 %v281
  %v1169 = vunpack.c.l.b16 %v282
  %v1170 = vunpack.c.h.b16 %v282
  %v1171 = vunpack.c.l.b16 %v283
  %v1172 = vunpack.c.h.b16 %v283
  %v1173 = vunpack.c.l.b16 %v284
  %v1174 = vunpack.c.h.b16 %v284
  %v1175 = vunpack.c.l.b16 %v285
  %v1176 = vunpack.c.h.b16 %v285
  %v1177 = vunpack.c.l.b16 %v286
  %v1178 = vunpack.c.h.b16 %v286
  %v1179 = vunpack.c.l.b16 %v287
  %v1180 = vunpack.c.h.b16 %v287
  %v1181 = vunpack.c.l.b16 %v288
  %v1182 = vunpack.c.h.b16 %v288
  %v1183 = vunpack.c.l.b16 %v289
  %v1184 = vunpack.c.h.b16 %v289
  %v1185 = vunpack.c.l.b16 %v290
  %v1186 = vunpack.c.h.b16 %v290
  %v1187 = vunpack.c.l.b16 %v291
  %v1188 = vunpack.c.h.b16 %v291
  %v1189 = vunpack.c.l.b16 %v292
  %v1190 = vunpack.c.h.b16 %v292
  %v1191 = vunpack.c.l.b16 %v293
  %v1192 = vunpack.c.h.b16 %v293
  %v1193 = vunpack.c.l.b16 %v294
  %v1194 = vunpack.c.h.b16 %v294
  %v1195 = vunpack.c.l.b16 %v295
  %v1196 = vunpack.c.h.b16 %v295
  %v1197 = vunpack.c.l.b16 %v296
  %v1198 = vunpack.c.h.b16 %v296
  %v1199 = vunpack.c.l.b16 %v297
  %v1200 = vunpack.c.h.b16 %v297
  %v1201 = vunpack.c.l.b16 %v298
  %v1202 = vunpack.c.h.b16 %v298
  %v1203 = vunpack.c.l.b16 %v299
  %v1204 = vunpack.c.h.b16 %v299
  %v1205 = vunpack.c.l.b16 %v300
  %v1206 = vunpack.c.h.b16 %v300
  %v1207 = vunpack.c.l.b16 %v301
  %v1208 = vunpack.c.h.b16 %v301
  %v1209 = vunpack.c.l.b16 %v302
  %v1210 = vunpack.c.h.b16 %v302
  %v1211 = vunpack.c.l.b16 %v303
  %v1212 = vunpack.c.h.b16 %v303
  %v1213 = vunpack.c.l.b16 %v304
  %v1214 = vunpack.c.h.b16 %v304
  %v1215 = vunpack.c.l.b16 %v305
  %v1216 = vunpack.c.h.b16 %v305
  %v1217 = vunpack.c.l.b16 %v306
  %v1218 = vunpack.c.h.b16 %v306
  %v1219 = vunpack.c.l.b16 %v307
  %v1220 = vunpack.c.h.b16 %v307
  %v1221 = vunpack.c.l.b16 %v308
  %v1222 = vunpack.c.h.b16 %v308
  %v1223 = vunpack.c.l.b16 %v309
  %v1224 = vunpack.c.h.b16 %v309
  %v1225 = vunpack.c.l.b16 %v310
  %v1226 = vunpack.c.h.b16 %v310
  %v1227 = vunpack.c.l.b16 %v311
  %v1228 = vunpack.c.h.b16 %v311
  %v1229 = vunpack.c.l.b16 %v312
  %v1230 = vunpack.c.h.b16 %v312
  %v1231 = vunpack.c.l.b16 %v313
  %v1232 = vunpack.c.h.b16 %v313
  %v1233 = vunpack.c.l.b16 %v314
  %v1234 = vunpack.c.h.b16 %v314
  %v1235 = vunpack.c.l.b16 %v315
  %v1236 = vunpack.c.h.b16 %v315
  %v1237 = vunpack.c.l.b16 %v316
  %v1238 = vunpack.c.h.b16 %v316
  %v1239 = vunpack.c.l.b16 %v317
  %v1240 = vunpack.c.h.b16 %v317
  %v1241 = vunpack.c.l.b16 %v318
  %v1242 = vunpack.c.h.b16 %v318
  %v1243 = vunpack.c.l.b16 %v319
  %v1244 = vunpack.c.h.b16 %v319
  %v1245 = vunpack.c.l.b16 %v320
  %v1246 = vunpack.c.h.b16 %v320
  %v1247 = vpack.c.b16 %v677, %v671
  %v1248 = vpack.c.b16 %v678, %v672
  %v1249 = vpack.c.b16 %v679, %v673
  %v1250 = vpack.c.b16 %v680, %v674
  %v1251 = vpack.c.b16 %v681, %v675
  %v1252 = vpack.c.b16 %v682, %v676
  %v1253 = vpack.c.b16 %v689, %v683
  %v1254 = vpack.c.b16 %v690, %v684
  %v1255 = vpack.c.b16 %v691, %v685
  %v1256 = vpack.c.b16 %v692, %v686
  %v1257 = vpack.c.b16 %v693, %v687
  %v1258 = vpack.c.b16 %v694, %v688
  %v1259 = vpack.c.b16 %v701, %v695
  %v1260 = vpack.c.b16 %v702, %v696
  %v1261 = vpack.c.b16 %v703, %v697
  %v1262 = vpack.c.b16 %v704, %v698
  %v1263 = vpack.c.b16 %v705, %v699
  %v1264 = vpack.c.b16 %v706, %v700
  %v1265 = vpack.c.b16 %v713, %v707
  %v1266 = vpack.c.b16 %v714, %v708
  %v1267 = vpack.c.b16 %v715, %v709
  %v1268 = vpack.c.b16 %v716, %v710
  %v1269 = vpack.c.b16 %v717, %v711
  %v1270 = vpack.c.b16 %v718, %v712
  %v1271 = vpack.c.b16 %v725, %v719
  %v1272 = vpack.c.b16 %v726, %v720
  %v1273 = vpack.c.b16 %v727, %v721
  %v1274 = vpack.c.b16 %v728, %v722
  %v1275 = vpack.c.b16 %v729, %v723
  %v1276 = vpack.c.b16 %v730, %v724
  %v1277 = vpack.c.b16 %v737, %v731
  %v1278 = vpack.c.b16 %v738, %v732
  %v1279 = vpack.c.b16 %v739, %v733
  %v1280 = vpack.c.b16 %v740, %v734
  %v1281 = vpack.c.b16 %v741, %v735
  %v1282 = vpack.c.b16 %v742, %v736
  %v1283 = vpack.c.b16 %v749, %v743
  %v1284 = vpack.c.b16 %v750, %v744
  %v1285 = vpack.c.b16 %v751, %v745
  %v1286 = vpack.c.b16 %v752, %v746
  %v1287 = vpack.c.b16 %v753, %v747
  %v1288 = vpack.c.b16 %v754, %v748
  %v1289 = vpack.c.b16 %v761, %v755
  %v1290 = vpack.c.b16 %v762, %v756
  %v1291 = vpack.c.b16 %v763, %v757
  %v1292 = vpack.c.b16 %v764, %v758
  %v1293 = vpack.c.b16 %v765, %v759
  %v1294 = vpack.c.b16 %v766, %v760
  %v1295 = vpack.c.b16 %v773, %v767
  %v1296 = vpack.c.b16 %v774, %v768
  %v1297 = vpack.c.b16 %v775, %v769
  %v1298 = vpack.c.b16 %v776, %v770
  %v1299 = vpack.c.b16 %v777, %v771
  %v1300 = vpack.c.b16 %v778, %v772
  %v1301 = vpack.c.b16 %v785, %v779
  %v1302 = vpack.c.b16 %v786, %v780
  %v1303 = vpack.c.b16 %v787, %v781
  %v1304 = vpack.c.b16 %v788, %v782
  %v1305 = vpack.c.b16 %v789, %v783
  %v1306 = vpack.c.b16 %v790, %v784
  %v1307 = vpack.c.b16 %v797, %v791
  %v1308 = vpack.c.b16 %v798, %v792
  %v1309 = vpack.c.b16 %v799, %v793
  %v1310 = vpack.c.b16 %v800, %v794
  %v1311 = vpack.c.b16 %v801, %v795
  %v1312 = vpack.c.b16 %v802, %v796
  %v1313 = vpack.c.b16 %v809, %v803
  %v1314 = vpack.c.b16 %v810, %v804
  %v1315 = vpack.c.b16 %v811, %v805
  %v1316 = vpack.c.b16 %v812, %v806
  %v1317 = vpack.c.b16 %v813, %v807
  %v1318 = vpack.c.b16 %v814, %v808
  %v1319 = vpack.c.b16 %v821, %v815
  %v1320 = vpack.c.b16 %v822, %v816
  %v1321 = vpack.c.b16 %v823, %v817
  %v1322 = vpack.c.b16 %v824, %v818
  %v1323 = vpack.c.b16 %v825, %v819
  %v1324 = vpack.c.b16 %v826, %v820
  %v1325 = vpack.c.b16 %v833, %v827
  %v1326 = vpack.c.b16 %v834, %v828
  %v1327 = vpack.c.b16 %v835, %v829
  %v1328 = vpack.c.b16 %v836, %v830
  %v1329 = vpack.c.b16 %v837, %v831
  %v1330 = vpack.c.b16 %v838, %v832
  %v1331 = vpack.c.b16 %v845, %v839
  %v1332 = vpack.c.b16 %v846, %v840
  %v1333 = vpack.c.b16 %v847, %v841
  %v1334 = vpack.c.b16 %v848, %v842
  %v1335 = vpack.c.b16 %v849, %v843
  %v1336 = vpack.c.b16 %v850, %v844
  %v1337 = vpack.c.b16 %v857, %v851
  %v1338 = vpack.c.b16 %v858, %v852
  %v1339 = vpack.c.b16 %v859, %v853
  %v1340 = vpack.c.b16 %v860, %v854
  %v1341 = vpack.c.b16 %v861, %v855
  %v1342 = vpack.c.b16 %v862, %v856
  %v1343 = vpack.c.b16 %v869, %v863
  %v1344 = vpack.c.b16 %v870, %v864
  %v1345 = vpack.c.b16 %v871, %v865
  %v1346 = vpack.c.b16 %v872, %v866
  %v1347 = vpack.c.b16 %v873, %v867
  %v1348 = vpack.c.b16 %v874, %v868
  %v1349 = vpack.c.b16 %v881, %v875
  %v1350 = vpack.c.b16 %v882, %v876
  %v1351 = vpack.c.b16 %v883, %v877
  %v1352 = vpack.c.b16 %v884, %v878
  %v1353 = vpack.c.b16 %v885, %v879
  %v1354 = vpack.c.b16 %v886, %v880
  %v1355 = vpack.c.b16 %v893, %v887
  %v1356 = vpack.c.b16 %v894, %v888
  %v1357 = vpack.c.b16 %v895, %v889
  %v1358 = vpack.c.b16 %v896, %v890
  %v1359 = vpack.c.b16 %v897, %v891
  %v1360 = vpack.c.b16 %v898, %v892
  %v1361 = vpack.c.b16 %v905, %v899
  %v1362 = vpack.c.b16 %v906, %v900
  %v1363 = vpack.c.b16 %v907, %v901
  %v1364 = vpack.c.b16 %v908, %v902
  %v1365 = vpack.c.b16 %v909, %v903
  %v1366 = vpack.c.b16 %v910, %v904
  %v1367 = vpack.c.b16 %v917, %v911
  %v1368 = vpack.c.b16 %v918, %v912
  %v1369 = vpack.c.b16 %v919, %v913
  %v1370 = vpack.c.b16 %v920, %v914
  %v1371 = vpack.c.b16 %v921, %v915
  %v1372 = vpack.c.b16 %v922, %v916
  %v1373 = vpack.c.b16 %v929, %v923
  %v1374 = vpack.c.b16 %v930, %v924
  %v1375 = vpack.c.b16 %v931, %v925
  %v1376 = vpack.c.b16 %v932, %v926
  %v1377 = vpack.c.b16 %v933, %v927
  %v1378 = vpack.c.b16 %v934, %v928
  %v1379 = vpack.c.b16 %v941, %v935
  %v1380 = vpack.c.b16 %v942, %v936
  %v1381 = vpack.c.b16 %v943, %v937
  %v1382 = vpack.c.b16 %v944, %v938
  %v1383 = vpack.c.b16 %v945, %v939
  %v1384 = vpack.c.b16 %v946, %v940
  %v1385 = vpack.c.b16 %v953, %v947
  %v1386 = vpack.c.b16 %v954, %v948
  %v1387 = vpack.c.b16 %v955, %v949
  %v1388 = vpack.c.b16 %v956, %v950
  %v1389 = vpack.c.b16 %v957, %v951
  %v1390 = vpack.c.b16 %v958, %v952
  %v1391 = vpack.c.b16 %v965, %v959
  %v1392 = vpack.c.b16 %v966, %v960
  %v1393 = vpack.c.b16 %v967, %v961
  %v1394 = vpack.c.b16 %v968, %v962
  %v1395 = vpack.c.b16 %v969, %v963
  %v1396 = vpack.c.b16 %v970, %v964
  %v1397 = vpack.c.b16 %v977, %v971
  %v1398 = vpack.c.b16 %v978, %v972
  %v1399 = vpack.c.b16 %v979, %v973
  %v1400 = vpack.c.b16 %v980, %v974
  %v1401 = vpack.c.b16 %v981, %v975
  %v1402 = vpack.c.b16 %v982, %v976
  %v1403 = vpack.c.b16 %v989, %v983
  %v1404 = vpack.c.b16 %v990, %v984
  %v1405 = vpack.c.b16 %v991, %v985
  %v1406 = vpack.c.b16 %v992, %v986
  %v1407 = vpack.c.b16 %v993, %v987
  %v1408 = vpack.c.b16 %v994, %v988
  %v1409 = vpack.c.b16 %v1001, %v995
  %v1410 = vpack.c.b16 %v1002, %v996
  %v1411 = vpack.c.b16 %v1003, %v997
  %v1412 = vpack.c.b16 %v1004, %v998
  %v1413 = vpack.c.b16 %v1005, %v999
  %v1414 = vpack.c.b16 %v1006, %v1000
  %v1415 = vpack.c.b16 %v1013, %v1007
  %v1416 = vpack.c.b16 %v1014, %v1008
  %v1417 = vpack.c.b16 %v1015, %v1009
  %v1418 = vpack.c.b16 %v1016, %v1010
  %v1419 = vpack.c.b16 %v1017, %v1011
  %v1420 = vpack.c.b16 %v1018, %v1012
  %v1421 = vpack.c.b16 %v1025, %v1019
  %v1422 = vpack.c.b16 %v1026, %v1020
  %v1423 = vpack.c.b16 %v1027, %v1021
  %v1424 = vpack.c.b16 %v1028, %v1022
  %v1425 = vpack.c.b16 %v1029, %v1023
  %v1426 = vpack.c.b16 %v1030, %v1024
  %v1427 = vpack.c.b16 %v1037, %v1031
  %v1428 = vpack.c.b16 %v1038, %v1032
  %v1429 = vpack.c.b16 %v1039, %v1033
  %v1430 = vpack.c.b16 %v1040, %v1034
  %v1431 = vpack.c.b16 %v1041, %v1035
  %v1432 = vpack.c.b16 %v1042, %v1036
  %v1433 = vpack.c.b16 %v1049, %v1043
  %v1434 = vpack.c.b16 %v1050, %v1044
  %v1435 = vpack.c.b16 %v1051, %v1045
  %v1436 = vpack.c.b16 %v1052, %v1046
  %v1437 = vpack.c.b16 %v1053, %v1047
  %v1438 = vpack.c.b16 %v1054, %v1048
  %v1439 = vpack.c.b16 %v1061, %v1055
  %v1440 = vpack.c.b16 %v1062, %v1056
  %v1441 = vpack.c.b16 %v1063, %v1057
  %v1442 = vpack.c.b16 %v1064, %v1058
  %v1443 = vpack.c.b16 %v1065, %v1059
  %v1444 = vpack.c.b16 %v1066, %v1060
  %v1445 = vpack.c.b16 %v1073, %v1067
  %v1446 = vpack.c.b16 %v1074, %v1068
  %v1447 = vpack.c.b16 %v1075, %v1069
  %v1448 = vpack.c.b16 %v1076, %v1070
  %v1449 = vpack.c.b16 %v1077, %v1071
  %v1450 = vpack.c.b16 %v1078, %v1072
  %v1451 = vpack.c.b16 %v1085, %v1079
  %v1452 = vpack.c.b16 %v1086, %v1080
  %v1453 = vpack.c.b16 %v1087, %v1081
  %v1454 = vpack.c.b16 %v1088, %v1082
  %v1455 = vpack.c.b16 %v1089, %v1083
  %v1456 = vpack.c.b16 %v1090, %v1084
  %v1457 = vpack.c.b16 %v1097, %v1091
  %v1458 = vpack.c.b16 %v1098, %v1092
  %v1459 = vpack.c.b16 %v1099, %v1093
  %v1460 = vpack.c.b16 %v1100, %v1094
  %v1461 = vpack.c.b16 %v1101, %v1095
  %v1462 = vpack.c.b16 %v1102, %v1096
  %v1463 = vpack.c.b16 %v1109, %v1103
  %v1464 = vpack.c.b16 %v1110, %v1104
  %v1465 = vpack.c.b16 %v1111, %v1105
  %v1466 = vpack.c.b16 %v1112, %v1106
  %v1467 = vpack.c.b16 %v1113, %v1107
  %v1468 = vpack.c.b16 %v1114, %v1108
  %v1469 = vpack.c.b16 %v1121, %v1115
  %v1470 = vpack.c.b16 %v1122, %v1116
  %v1471 = vpack.c.b16 %v1123, %v1117
  %v1472 = vpack.c.b16 %v1124, %v1118
  %v1473 = vpack.c.b16 %v1125, %v1119
  %v1474 = vpack.c.b16 %v1126, %v1120
  %v1475 = vpack.c.b16 %v1133, %v1127
  %v1476 = vpack.c.b16 %v1134, %v1128
  %v1477 = vpack.c.b16 %v1135, %v1129
  %v1478 = vpack.c.b16 %v1136, %v1130
  %v1479 = vpack.c.b16 %v1137, %v1131
  %v1480 = vpack.c.b16 %v1138, %v1132
  %v1481 = vpack.c.b16 %v1145, %v1139
  %v1482 = vpack.c.b16 %v1146, %v1140
  %v1483 = vpack.c.b16 %v1147, %v1141
  %v1484 = vpack.c.b16 %v1148, %v1142
  %v1485 = vpack.c.b16 %v1149, %v1143
  %v1486 = vpack.c.b16 %v1150, %v1144
  %v1487 = vpack.c.b16 %v1157, %v1151
  %v1488 = vpack.c.b16 %v1158, %v1152
  %v1489 = vpack.c.b16 %v1159, %v1153
  %v1490 = vpack.c.b16 %v1160, %v1154
  %v1491 = vpack.c.b16 %v1161, %v1155
  %v1492 = vpack.c.b16 %v1162, %v1156
  %v1493 = vpack.c.b16 %v1169, %v1163
  %v1494 = vpack.c.b16 %v1170, %v1164
  %v1495 = vpack.c.b16 %v1171, %v1165
  %v1496 = vpack.c.b16 %v1172, %v1166
  %v1497 = vpack.c.b16 %v1173, %v1167
  %v1498 = vpack.c.b16 %v1174, %v1168
  %v1499 = vpack.c.b16 %v1181, %v1175
  %v1500 = vpack.c.b16 %v1182, %v1176
  %v1501 = vpack.c.b16 %v1183, %v1177
  %v1502 = vpack.c.b16 %v1184, %v1178
  %v1503 = vpack.c.b16 %v1185, %v1179
  %v1504 = vpack.c.b16 %v1186, %v1180
  %v1505 = vpack.c.b16 %v1193, %v1187
  %v1506 = vpack.c.b16 %v1194, %v1188
  %v1507 = vpack.c.b16 %v1195, %v1189
  %v1508 = vpack.c.b16 %v1196, %v1190
  %v1509 = vpack.c.b16 %v1197, %v1191
  %v1510 = vpack.c.b16 %v1198, %v1192
  %v1511 = vpack.c.b16 %v1205, %v1199
  %v1512 = vpack.c.b16 %v1206, %v1200
  %v1513 = vpack.c.b16 %v1207, %v1201
  %v1514 = vpack.c.b16 %v1208, %v1202
  %v1515 = vpack.c.b16 %v1209, %v1203
  %v1516 = vpack.c.b16 %v1210, %v1204
  %v1517 = vpack.c.b16 %v1217, %v1211
  %v1518 = vpack.c.b16 %v1218, %v1212
  %v1519 = vpack.c.b16 %v1219, %v1213
  %v1520 = vpack.c.b16 %v1220, %v1214
  %v1521 = vpack.c.b16 %v1221, %v1215
  %v1522 = vpack.c.b16 %v1222, %v1216
  %v1523 = vpack.c.b16 %v1229, %v1223
  %v1524 = vpack.c.b16 %v1230, %v1224
  %v1525 = vpack.c.b16 %v1231, %v1225
  %v1526 = vpack.c.b16 %v1232, %v1226
  %v1527 = vpack.c.b16 %v1233, %v1227
  %v1528 = vpack.c.b16 %v1234, %v1228
  %v1529 = vpack.c.b16 %v1241, %v1235
  %v1530 = vpack.c.b16 %v1242, %v1236
  %v1531 = vpack.c.b16 %v1243, %v1237
  %v1532 = vpack.c.b16 %v1244, %v1238
  %v1533 = vpack.c.b16 %v1245, %v1239
  %v1534 = vpack.c.b16 %v1246, %v1240
  %1823 = vmatprep.subr.bf16.mxu0 %v1248
  %1824 = vmatpush1.bf16.msra.mxu0 %v1247
  %1825 = vmatprep.subr.bf16.mxu0 %v1254
  %1826 = vmatpush1.bf16.msra.mxu0 %v1253
  %1827 = vmatprep.subr.bf16.mxu0 %v1260
  %1828 = vmatpush1.bf16.msra.mxu0 %v1259
  %1829 = vmatprep.subr.bf16.mxu0 %v1266
  %1830 = vmatpush1.bf16.msra.mxu0 %v1265
  %1831 = vmatprep.subr.bf16.mxu0 %v1272
  %1832 = vmatpush1.bf16.msra.mxu0 %v1271
  %1833 = vmatprep.subr.bf16.mxu0 %v1278
  %1834 = vmatpush1.bf16.msra.mxu0 %v1277
  %1835 = vmatprep.subr.bf16.mxu0 %v1284
  %1836 = vmatpush1.bf16.msra.mxu0 %v1283
  %1837 = vmatprep.subr.bf16.mxu0 %v1290
  %1838 = vmatpush1.bf16.msra.mxu0 %v1289
  %1839 = vmatprep.subr.bf16.mxu0 %v1296
  %1840 = vmatpush1.bf16.msra.mxu0 %v1295
  %1841 = vmatprep.subr.bf16.mxu0 %v1302
  %1842 = vmatpush1.bf16.msra.mxu0 %v1301
  %1843 = vmatprep.subr.bf16.mxu0 %v1308
  %1844 = vmatpush1.bf16.msra.mxu0 %v1307
  %1845 = vmatprep.subr.bf16.mxu0 %v1314
  %1846 = vmatpush1.bf16.msra.mxu0 %v1313
  %1847 = vmatprep.subr.bf16.mxu0 %v1320
  %1848 = vmatpush1.bf16.msra.mxu0 %v1319
  %1849 = vmatprep.subr.bf16.mxu0 %v1326
  %1850 = vmatpush1.bf16.msra.mxu0 %v1325
  %1851 = vmatprep.subr.bf16.mxu0 %v1332
  %1852 = vmatpush1.bf16.msra.mxu0 %v1331
  %1853 = vmatprep.subr.bf16.mxu0 %v1338
  %1854 = vmatpush1.bf16.msra.mxu0 %v1337
  %1855 = vmatprep.mubr.bf16.mxu0 %v372
  %1856 = vmatmul.mubr.bf16.gmra.mrb[0].mxu0 %v371
  %v1857 = vpop.f32.mrb[0].mxu0
  %v1858 = vadd.f32 %v326, %v1857
  %v1859 = vpop.f32.mrb[0].mxu0
  %v1860 = vadd.f32 %v330, %v1859
  %v1861 = vpop.f32.mrb[0].mxu0
  %v1862 = vadd.f32 %v326, %v1861
  %v1863 = vpop.f32.mrb[0].mxu0
  %v1864 = vadd.f32 %v330, %v1863
  %1865 = vdwg.mxu0
  %1866 = vmatprep.subr.bf16.mxu0 %v1344
  %1867 = vmatpush1.bf16.msra.mxu0 %v1343
  %1868 = vmatprep.subr.bf16.mxu0 %v1350
  %1869 = vmatpush1.bf16.msra.mxu0 %v1349
  %1870 = vmatprep.subr.bf16.mxu0 %v1356
  %1871 = vmatpush1.bf16.msra.mxu0 %v1355
  %1872 = vmatprep.subr.bf16.mxu0 %v1362
  %1873 = vmatpush1.bf16.msra.mxu0 %v1361
  %1874 = vmatprep.subr.bf16.mxu0 %v1368
  %1875 = vmatpush1.bf16.msra.mxu0 %v1367
  %1876 = vmatprep.subr.bf16.mxu0 %v1374
  %1877 = vmatpush1.bf16.msra.mxu0 %v1373
  %1878 = vmatprep.subr.bf16.mxu0 %v1380
  %1879 = vmatpush1.bf16.msra.mxu0 %v1379
  %1880 = vmatprep.subr.bf16.mxu0 %v1386
  %1881 = vmatpush1.bf16.msra.mxu0 %v1385
  %1882 = vmatprep.subr.bf16.mxu0 %v1392
  %1883 = vmatpush1.bf16.msra.mxu0 %v1391
  %1884 = vmatprep.subr.bf16.mxu0 %v1398
  %1885 = vmatpush1.bf16.msra.mxu0 %v1397
  %1886 = vmatprep.subr.bf16.mxu0 %v1404
  %1887 = vmatpush1.bf16.msra.mxu0 %v1403
  %1888 = vmatprep.subr.bf16.mxu0 %v1410
  %1889 = vmatpush1.bf16.msra.mxu0 %v1409
  %1890 = vmatprep.subr.bf16.mxu0 %v1416
  %1891 = vmatpush1.bf16.msra.mxu0 %v1415
  %1892 = vmatprep.subr.bf16.mxu0 %v1422
  %1893 = vmatpush1.bf16.msra.mxu0 %v1421
  %1894 = vmatprep.subr.bf16.mxu0 %v1428
  %1895 = vmatpush1.bf16.msra.mxu0 %v1427
  %1896 = vmatprep.subr.bf16.mxu0 %v1434
  %1897 = vmatpush1.bf16.msra.mxu0 %v1433
  %1898 = vmatprep.mubr.bf16.mxu0 %v374
  %1899 = vmatmul.mubr.bf16.gmra.mrb[0].mxu0 %v373
  %v1900 = vpop.f32.mrb[0].mxu0
  %v1901 = vadd.f32 %v1858, %v1900
  %v1902 = vpop.f32.mrb[0].mxu0
  %v1903 = vadd.f32 %v1860, %v1902
  %v1904 = vpop.f32.mrb[0].mxu0
  %v1905 = vadd.f32 %v1862, %v1904
  %v1906 = vpop.f32.mrb[0].mxu0
  %v1907 = vadd.f32 %v1864, %v1906
  %1908 = vdwg.mxu0
  %1909 = vmatprep.subr.bf16.mxu0 %v1440
  %1910 = vmatpush1.bf16.msra.mxu0 %v1439
  %1911 = vmatprep.subr.bf16.mxu0 %v1446
  %1912 = vmatpush1.bf16.msra.mxu0 %v1445
  %1913 = vmatprep.subr.bf16.mxu0 %v1452
  %1914 = vmatpush1.bf16.msra.mxu0 %v1451
  %1915 = vmatprep.subr.bf16.mxu0 %v1458
  %1916 = vmatpush1.bf16.msra.mxu0 %v1457
  %1917 = vmatprep.subr.bf16.mxu0 %v1464
  %1918 = vmatpush1.bf16.msra.mxu0 %v1463
  %1919 = vmatprep.subr.bf16.mxu0 %v1470
  %1920 = vmatpush1.bf16.msra.mxu0 %v1469
  %1921 = vmatprep.subr.bf16.mxu0 %v1476
  %1922 = vmatpush1.bf16.msra.mxu0 %v1475
  %1923 = vmatprep.subr.bf16.mxu0 %v1482
  %1924 = vmatpush1.bf16.msra.mxu0 %v1481
  %1925 = vmatprep.subr.bf16.mxu0 %v1488
  %1926 = vmatpush1.bf16.msra.mxu0 %v1487
  %1927 = vmatprep.subr.bf16.mxu0 %v1494
  %1928 = vmatpush1.bf16.msra.mxu0 %v1493
  %1929 = vmatprep.subr.bf16.mxu0 %v1500
  %1930 = vmatpush1.bf16.msra.mxu0 %v1499
  %1931 = vmatprep.subr.bf16.mxu0 %v1506
  %1932 = vmatpush1.bf16.msra.mxu0 %v1505
  %1933 = vmatprep.subr.bf16.mxu0 %v1512
  %1934 = vmatpush1.bf16.msra.mxu0 %v1511
  %1935 = vmatprep.subr.bf16.mxu0 %v1518
  %1936 = vmatpush1.bf16.msra.mxu0 %v1517
  %1937 = vmatprep.subr.bf16.mxu0 %v1524
  %1938 = vmatpush1.bf16.msra.mxu0 %v1523
  %1939 = vmatprep.subr.bf16.mxu0 %v1530
  %1940 = vmatpush1.bf16.msra.mxu0 %v1529
  %1941 = vmatprep.mubr.bf16.mxu0 %v376
  %1942 = vmatmul.mubr.bf16.gmra.mrb[0].mxu0 %v375
  %v1943 = vpop.f32.mrb[0].mxu0
  %v1944 = vadd.f32 %v1901, %v1943
  %v1945 = vpop.f32.mrb[0].mxu0
  %v1946 = vadd.f32 %v1903, %v1945
  %v1947 = vpop.f32.mrb[0].mxu0
  %v1948 = vadd.f32 %v1905, %v1947
  %v1949 = vpop.f32.mrb[0].mxu0
  %v1950 = vadd.f32 %v1907, %v1949
  %1951 = vdwg.mxu0
  %1952 = vmatprep.subr.bf16.mxu0 %v1250
  %1953 = vmatpush1.bf16.msra.mxu0 %v1249
  %1954 = vmatprep.subr.bf16.mxu0 %v1256
  %1955 = vmatpush1.bf16.msra.mxu0 %v1255
  %1956 = vmatprep.subr.bf16.mxu0 %v1262
  %1957 = vmatpush1.bf16.msra.mxu0 %v1261
  %1958 = vmatprep.subr.bf16.mxu0 %v1268
  %1959 = vmatpush1.bf16.msra.mxu0 %v1267
  %1960 = vmatprep.subr.bf16.mxu0 %v1274
  %1961 = vmatpush1.bf16.msra.mxu0 %v1273
  %1962 = vmatprep.subr.bf16.mxu0 %v1280
  %1963 = vmatpush1.bf16.msra.mxu0 %v1279
  %1964 = vmatprep.subr.bf16.mxu0 %v1286
  %1965 = vmatpush1.bf16.msra.mxu0 %v1285
  %1966 = vmatprep.subr.bf16.mxu0 %v1292
  %1967 = vmatpush1.bf16.msra.mxu0 %v1291
  %1968 = vmatprep.subr.bf16.mxu0 %v1298
  %1969 = vmatpush1.bf16.msra.mxu0 %v1297
  %1970 = vmatprep.subr.bf16.mxu0 %v1304
  %1971 = vmatpush1.bf16.msra.mxu0 %v1303
  %1972 = vmatprep.subr.bf16.mxu0 %v1310
  %1973 = vmatpush1.bf16.msra.mxu0 %v1309
  %1974 = vmatprep.subr.bf16.mxu0 %v1316
  %1975 = vmatpush1.bf16.msra.mxu0 %v1315
  %1976 = vmatprep.subr.bf16.mxu0 %v1322
  %1977 = vmatpush1.bf16.msra.mxu0 %v1321
  %1978 = vmatprep.subr.bf16.mxu0 %v1328
  %1979 = vmatpush1.bf16.msra.mxu0 %v1327
  %1980 = vmatprep.subr.bf16.mxu0 %v1334
  %1981 = vmatpush1.bf16.msra.mxu0 %v1333
  %1982 = vmatprep.subr.bf16.mxu0 %v1340
  %1983 = vmatpush1.bf16.msra.mxu0 %v1339
  %1984 = vmatprep.mubr.bf16.mxu0 %v372
  %1985 = vmatmul.mubr.bf16.gmra.mrb[0].mxu0 %v371
  %v1986 = vpop.f32.mrb[0].mxu0
  %v1987 = vadd.f32 %v334, %v1986
  %v1988 = vpop.f32.mrb[0].mxu0
  %v1989 = vadd.f32 %v338, %v1988
  %v1990 = vpop.f32.mrb[0].mxu0
  %v1991 = vadd.f32 %v334, %v1990
  %v1992 = vpop.f32.mrb[0].mxu0
  %v1993 = vadd.f32 %v338, %v1992
  %1994 = vdwg.mxu0
  %1995 = vmatprep.subr.bf16.mxu0 %v1346
  %1996 = vmatpush1.bf16.msra.mxu0 %v1345
  %1997 = vmatprep.subr.bf16.mxu0 %v1352
  %1998 = vmatpush1.bf16.msra.mxu0 %v1351
  %1999 = vmatprep.subr.bf16.mxu0 %v1358
  %2000 = vmatpush1.bf16.msra.mxu0 %v1357
  %2001 = vmatprep.subr.bf16.mxu0 %v1364
  %2002 = vmatpush1.bf16.msra.mxu0 %v1363
  %2003 = vmatprep.subr.bf16.mxu0 %v1370
  %2004 = vmatpush1.bf16.msra.mxu0 %v1369
  %2005 = vmatprep.subr.bf16.mxu0 %v1376
  %2006 = vmatpush1.bf16.msra.mxu0 %v1375
  %2007 = vmatprep.subr.bf16.mxu0 %v1382
  %2008 = vmatpush1.bf16.msra.mxu0 %v1381
  %2009 = vmatprep.subr.bf16.mxu0 %v1388
  %2010 = vmatpush1.bf16.msra.mxu0 %v1387
  %2011 = vmatprep.subr.bf16.mxu0 %v1394
  %2012 = vmatpush1.bf16.msra.mxu0 %v1393
  %2013 = vmatprep.subr.bf16.mxu0 %v1400
  %2014 = vmatpush1.bf16.msra.mxu0 %v1399
  %2015 = vmatprep.subr.bf16.mxu0 %v1406
  %2016 = vmatpush1.bf16.msra.mxu0 %v1405
  %2017 = vmatprep.subr.bf16.mxu0 %v1412
  %2018 = vmatpush1.bf16.msra.mxu0 %v1411
  %2019 = vmatprep.subr.bf16.mxu0 %v1418
  %2020 = vmatpush1.bf16.msra.mxu0 %v1417
  %2021 = vmatprep.subr.bf16.mxu0 %v1424
  %2022 = vmatpush1.bf16.msra.mxu0 %v1423
  %2023 = vmatprep.subr.bf16.mxu0 %v1430
  %2024 = vmatpush1.bf16.msra.mxu0 %v1429
  %2025 = vmatprep.subr.bf16.mxu0 %v1436
  %2026 = vmatpush1.bf16.msra.mxu0 %v1435
  %2027 = vmatprep.mubr.bf16.mxu0 %v374
  %2028 = vmatmul.mubr.bf16.gmra.mrb[0].mxu0 %v373
  %v2029 = vpop.f32.mrb[0].mxu0
  %v2030 = vadd.f32 %v1987, %v2029
  %v2031 = vpop.f32.mrb[0].mxu0
  %v2032 = vadd.f32 %v1989, %v2031
  %v2033 = vpop.f32.mrb[0].mxu0
  %v2034 = vadd.f32 %v1991, %v2033
  %v2035 = vpop.f32.mrb[0].mxu0
  %v2036 = vadd.f32 %v1993, %v2035
  %2037 = vdwg.mxu0
  %2038 = vmatprep.subr.bf16.mxu0 %v1442
  %2039 = vmatpush1.bf16.msra.mxu0 %v1441
  %2040 = vmatprep.subr.bf16.mxu0 %v1448
  %2041 = vmatpush1.bf16.msra.mxu0 %v1447
  %2042 = vmatprep.subr.bf16.mxu0 %v1454
  %2043 = vmatpush1.bf16.msra.mxu0 %v1453
  %2044 = vmatprep.subr.bf16.mxu0 %v1460
  %2045 = vmatpush1.bf16.msra.mxu0 %v1459
  %2046 = vmatprep.subr.bf16.mxu0 %v1466
  %2047 = vmatpush1.bf16.msra.mxu0 %v1465
  %2048 = vmatprep.subr.bf16.mxu0 %v1472
  %2049 = vmatpush1.bf16.msra.mxu0 %v1471
  %2050 = vmatprep.subr.bf16.mxu0 %v1478
  %2051 = vmatpush1.bf16.msra.mxu0 %v1477
  %2052 = vmatprep.subr.bf16.mxu0 %v1484
  %2053 = vmatpush1.bf16.msra.mxu0 %v1483
  %2054 = vmatprep.subr.bf16.mxu0 %v1490
  %2055 = vmatpush1.bf16.msra.mxu0 %v1489
  %2056 = vmatprep.subr.bf16.mxu0 %v1496
  %2057 = vmatpush1.bf16.msra.mxu0 %v1495
  %2058 = vmatprep.subr.bf16.mxu0 %v1502
  %2059 = vmatpush1.bf16.msra.mxu0 %v1501
  %2060 = vmatprep.subr.bf16.mxu0 %v1508
  %2061 = vmatpush1.bf16.msra.mxu0 %v1507
  %2062 = vmatprep.subr.bf16.mxu0 %v1514
  %2063 = vmatpush1.bf16.msra.mxu0 %v1513
  %2064 = vmatprep.subr.bf16.mxu0 %v1520
  %2065 = vmatpush1.bf16.msra.mxu0 %v1519
  %2066 = vmatprep.subr.bf16.mxu0 %v1526
  %2067 = vmatpush1.bf16.msra.mxu0 %v1525
  %2068 = vmatprep.subr.bf16.mxu0 %v1532
  %2069 = vmatpush1.bf16.msra.mxu0 %v1531
  %2070 = vmatprep.mubr.bf16.mxu0 %v376
  %2071 = vmatmul.mubr.bf16.gmra.mrb[0].mxu0 %v375
  %v2072 = vpop.f32.mrb[0].mxu0
  %v2073 = vadd.f32 %v2030, %v2072
  %v2074 = vpop.f32.mrb[0].mxu0
  %v2075 = vadd.f32 %v2032, %v2074
  %v2076 = vpop.f32.mrb[0].mxu0
  %v2077 = vadd.f32 %v2034, %v2076
  %v2078 = vpop.f32.mrb[0].mxu0
  %v2079 = vadd.f32 %v2036, %v2078
  %2080 = vdwg.mxu0
  %2081 = vmatprep.subr.bf16.mxu0 %v1252
  %2082 = vmatpush1.bf16.msra.mxu0 %v1251
  %2083 = vmatprep.subr.bf16.mxu0 %v1258
  %2084 = vmatpush1.bf16.msra.mxu0 %v1257
  %2085 = vmatprep.subr.bf16.mxu0 %v1264
  %2086 = vmatpush1.bf16.msra.mxu0 %v1263
  %2087 = vmatprep.subr.bf16.mxu0 %v1270
  %2088 = vmatpush1.bf16.msra.mxu0 %v1269
  %2089 = vmatprep.subr.bf16.mxu0 %v1276
  %2090 = vmatpush1.bf16.msra.mxu0 %v1275
  %2091 = vmatprep.subr.bf16.mxu0 %v1282
  %2092 = vmatpush1.bf16.msra.mxu0 %v1281
  %2093 = vmatprep.subr.bf16.mxu0 %v1288
  %2094 = vmatpush1.bf16.msra.mxu0 %v1287
  %2095 = vmatprep.subr.bf16.mxu0 %v1294
  %2096 = vmatpush1.bf16.msra.mxu0 %v1293
  %2097 = vmatprep.subr.bf16.mxu0 %v1300
  %2098 = vmatpush1.bf16.msra.mxu0 %v1299
  %2099 = vmatprep.subr.bf16.mxu0 %v1306
  %2100 = vmatpush1.bf16.msra.mxu0 %v1305
  %2101 = vmatprep.subr.bf16.mxu0 %v1312
  %2102 = vmatpush1.bf16.msra.mxu0 %v1311
  %2103 = vmatprep.subr.bf16.mxu0 %v1318
  %2104 = vmatpush1.bf16.msra.mxu0 %v1317
  %2105 = vmatprep.subr.bf16.mxu0 %v1324
  %2106 = vmatpush1.bf16.msra.mxu0 %v1323
  %2107 = vmatprep.subr.bf16.mxu0 %v1330
  %2108 = vmatpush1.bf16.msra.mxu0 %v1329
  %2109 = vmatprep.subr.bf16.mxu0 %v1336
  %2110 = vmatpush1.bf16.msra.mxu0 %v1335
  %2111 = vmatprep.subr.bf16.mxu0 %v1342
  %2112 = vmatpush1.bf16.msra.mxu0 %v1341
  %2113 = vmatprep.mubr.bf16.mxu0 %v372
  %2114 = vmatmul.mubr.bf16.gmra.mrb[0].mxu0 %v371
  %v2115 = vpop.f32.mrb[0].mxu0
  %v2116 = vadd.f32 %v342, %v2115
  %v2117 = vpop.f32.mrb[0].mxu0
  %v2118 = vadd.f32 %v346, %v2117
  %v2119 = vpop.f32.mrb[0].mxu0
  %v2120 = vadd.f32 %v342, %v2119
  %v2121 = vpop.f32.mrb[0].mxu0
  %v2122 = vadd.f32 %v346, %v2121
  %2123 = vdwg.mxu0
  %2124 = vmatprep.subr.bf16.mxu0 %v1348
  %2125 = vmatpush1.bf16.msra.mxu0 %v1347
  %2126 = vmatprep.subr.bf16.mxu0 %v1354
  %2127 = vmatpush1.bf16.msra.mxu0 %v1353
  %2128 = vmatprep.subr.bf16.mxu0 %v1360
  %2129 = vmatpush1.bf16.msra.mxu0 %v1359
  %2130 = vmatprep.subr.bf16.mxu0 %v1366
  %2131 = vmatpush1.bf16.msra.mxu0 %v1365
  %2132 = vmatprep.subr.bf16.mxu0 %v1372
  %2133 = vmatpush1.bf16.msra.mxu0 %v1371
  %2134 = vmatprep.subr.bf16.mxu0 %v1378
  %2135 = vmatpush1.bf16.msra.mxu0 %v1377
  %2136 = vmatprep.subr.bf16.mxu0 %v1384
  %2137 = vmatpush1.bf16.msra.mxu0 %v1383
  %2138 = vmatprep.subr.bf16.mxu0 %v1390
  %2139 = vmatpush1.bf16.msra.mxu0 %v1389
  %2140 = vmatprep.subr.bf16.mxu0 %v1396
  %2141 = vmatpush1.bf16.msra.mxu0 %v1395
  %2142 = vmatprep.subr.bf16.mxu0 %v1402
  %2143 = vmatpush1.bf16.msra.mxu0 %v1401
  %2144 = vmatprep.subr.bf16.mxu0 %v1408
  %2145 = vmatpush1.bf16.msra.mxu0 %v1407
  %2146 = vmatprep.subr.bf16.mxu0 %v1414
  %2147 = vmatpush1.bf16.msra.mxu0 %v1413
  %2148 = vmatprep.subr.bf16.mxu0 %v1420
  %2149 = vmatpush1.bf16.msra.mxu0 %v1419
  %2150 = vmatprep.subr.bf16.mxu0 %v1426
  %2151 = vmatpush1.bf16.msra.mxu0 %v1425
  %2152 = vmatprep.subr.bf16.mxu0 %v1432
  %2153 = vmatpush1.bf16.msra.mxu0 %v1431
  %2154 = vmatprep.subr.bf16.mxu0 %v1438
  %2155 = vmatpush1.bf16.msra.mxu0 %v1437
  %2156 = vmatprep.mubr.bf16.mxu0 %v374
  %2157 = vmatmul.mubr.bf16.gmra.mrb[0].mxu0 %v373
  %v2158 = vpop.f32.mrb[0].mxu0
  %v2159 = vadd.f32 %v2116, %v2158
  %v2160 = vpop.f32.mrb[0].mxu0
  %v2161 = vadd.f32 %v2118, %v2160
  %v2162 = vpop.f32.mrb[0].mxu0
  %v2163 = vadd.f32 %v2120, %v2162
  %v2164 = vpop.f32.mrb[0].mxu0
  %v2165 = vadd.f32 %v2122, %v2164
  %2166 = vdwg.mxu0
  %2167 = vmatprep.subr.bf16.mxu0 %v1444
  %2168 = vmatpush1.bf16.msra.mxu0 %v1443
  %2169 = vmatprep.subr.bf16.mxu0 %v1450
  %2170 = vmatpush1.bf16.msra.mxu0 %v1449
  %2171 = vmatprep.subr.bf16.mxu0 %v1456
  %2172 = vmatpush1.bf16.msra.mxu0 %v1455
  %2173 = vmatprep.subr.bf16.mxu0 %v1462
  %2174 = vmatpush1.bf16.msra.mxu0 %v1461
  %2175 = vmatprep.subr.bf16.mxu0 %v1468
  %2176 = vmatpush1.bf16.msra.mxu0 %v1467
  %2177 = vmatprep.subr.bf16.mxu0 %v1474
  %2178 = vmatpush1.bf16.msra.mxu0 %v1473
  %2179 = vmatprep.subr.bf16.mxu0 %v1480
  %2180 = vmatpush1.bf16.msra.mxu0 %v1479
  %2181 = vmatprep.subr.bf16.mxu0 %v1486
  %2182 = vmatpush1.bf16.msra.mxu0 %v1485
  %2183 = vmatprep.subr.bf16.mxu0 %v1492
  %2184 = vmatpush1.bf16.msra.mxu0 %v1491
  %2185 = vmatprep.subr.bf16.mxu0 %v1498
  %2186 = vmatpush1.bf16.msra.mxu0 %v1497
  %2187 = vmatprep.subr.bf16.mxu0 %v1504
  %2188 = vmatpush1.bf16.msra.mxu0 %v1503
  %2189 = vmatprep.subr.bf16.mxu0 %v1510
  %2190 = vmatpush1.bf16.msra.mxu0 %v1509
  %2191 = vmatprep.subr.bf16.mxu0 %v1516
  %2192 = vmatpush1.bf16.msra.mxu0 %v1515
  %2193 = vmatprep.subr.bf16.mxu0 %v1522
  %2194 = vmatpush1.bf16.msra.mxu0 %v1521
  %2195 = vmatprep.subr.bf16.mxu0 %v1528
  %2196 = vmatpush1.bf16.msra.mxu0 %v1527
  %2197 = vmatprep.subr.bf16.mxu0 %v1534
  %2198 = vmatpush1.bf16.msra.mxu0 %v1533
  %2199 = vmatprep.mubr.bf16.mxu0 %v376
  %2200 = vmatmul.mubr.bf16.gmra.mrb[0].mxu0 %v375
  %v2201 = vpop.f32.mrb[0].mxu0
  %v2202 = vadd.f32 %v2159, %v2201
  %v2203 = vpop.f32.mrb[0].mxu0
  %v2204 = vadd.f32 %v2161, %v2203
  %v2205 = vpop.f32.mrb[0].mxu0
  %v2206 = vadd.f32 %v2163, %v2205
  %v2207 = vpop.f32.mrb[0].mxu0
  %v2208 = vadd.f32 %v2165, %v2207
  %2209 = vdwg.mxu0
  %v2210 = vtanh.pop %v1944
  %v2211 = vtanh.pop %v1946
  %v2212 = vtanh.pop %v2073
  %v2213 = vtanh.pop %v2075
  %v2214 = vtanh.pop %v2202
  %v2215 = vtanh.pop %v2204
  %v2216 = vtanh.pop %v1948
  %v2217 = vtanh.pop %v1950
  %v2218 = vtanh.pop %v2077
  %v2219 = vtanh.pop %v2079
  %v2220 = vtanh.pop %v2206
  %v2221 = vtanh.pop %v2208
  %v2222 = vpack.c.bf16 %v2216, %v2210
  %v2223 = vpack.c.bf16 %v2217, %v2211
  %v2224 = vpack.c.bf16 %v2218, %v2212
  %v2225 = vpack.c.bf16 %v2219, %v2213
  %v2226 = vpack.c.bf16 %v2220, %v2214
  %v2227 = vpack.c.bf16 %v2221, %v2215
  %v2228 = vld [vmem:[%s3] sm:$0xff]
  %v2229 = vld [vmem:[%s3 + $0x8] sm:$0xff]
  %v2230 = vld [vmem:[%s3 + $0x10] sm:$0xff]
  %v2231 = vld [vmem:[%s3 + $0x18] sm:$0xff]
  %v2232 = vld [vmem:[%s3 + $0x20] sm:$0xff]
  %v2233 = vld [vmem:[%s3 + $0x28] sm:$0xff]
  %v2234 = vld [vmem:[%s3 + $0x30] sm:$0xff]
  %v2235 = vld [vmem:[%s3 + $0x38] sm:$0xff]
  %v2236 = vld [vmem:[%s3 + $0x40] sm:$0xff]
  %v2237 = vld [vmem:[%s3 + $0x48] sm:$0xff]
  %v2238 = vld [vmem:[%s3 + $0x50] sm:$0xff]
  %v2239 = vld [vmem:[%s3 + $0x58] sm:$0xff]
  %v2240 = vld [vmem:[%s3 + $0x60] sm:$0xff]
  %v2241 = vld [vmem:[%s3 + $0x68] sm:$0xff]
  %v2242 = vld [vmem:[%s3 + $0x70] sm:$0xff]
  %v2243 = vld [vmem:[%s3 + $0x78] sm:$0xff]
  %v2244 = vld [vmem:[%s3 + $0x80] sm:$0xff]
  %v2245 = vld [vmem:[%s3 + $0x88] sm:$0xff]
  %v2246 = vld [vmem:[%s3 + $0x90] sm:$0xff]
  %v2247 = vld [vmem:[%s3 + $0x98] sm:$0xff]
  %v2248 = vld [vmem:[%s3 + $0xa0] sm:$0xff]
  %v2249 = vld [vmem:[%s3 + $0xa8] sm:$0xff]
  %v2250 = vld [vmem:[%s3 + $0xb0] sm:$0xff]
  %v2251 = vld [vmem:[%s3 + $0xb8] sm:$0xff]
  %v2252 = vld [vmem:[%s3 + $0xc0] sm:$0xff]
  %v2253 = vld [vmem:[%s3 + $0xc8] sm:$0xff]
  %v2254 = vld [vmem:[%s3 + $0xd0] sm:$0xff]
  %v2255 = vld [vmem:[%s3 + $0xd8] sm:$0xff]
  %v2256 = vld [vmem:[%s3 + $0xe0] sm:$0xff]
  %v2257 = vld [vmem:[%s3 + $0xe8] sm:$0xff]
  %v2258 = vld [vmem:[%s3 + $0xf0] sm:$0xff]
  %v2259 = vld [vmem:[%s3 + $0xf8] sm:$0xff]
  %v2260 = vld [vmem:[%s3 + $0x100] sm:$0xff]
  %v2261 = vld [vmem:[%s3 + $0x108] sm:$0xff]
  %v2262 = vld [vmem:[%s3 + $0x110] sm:$0xff]
  %v2263 = vld [vmem:[%s3 + $0x118] sm:$0xff]
  %v2264 = vld [vmem:[%s3 + $0x120] sm:$0xff]
  %v2265 = vld [vmem:[%s3 + $0x128] sm:$0xff]
  %v2266 = vld [vmem:[%s3 + $0x130] sm:$0xff]
  %v2267 = vld [vmem:[%s3 + $0x138] sm:$0xff]
  %v2268 = vld [vmem:[%s3 + $0x140] sm:$0xff]
  %v2269 = vld [vmem:[%s3 + $0x148] sm:$0xff]
  %v2270 = vld [vmem:[%s3 + $0x150] sm:$0xff]
  %v2271 = vld [vmem:[%s3 + $0x158] sm:$0xff]
  %v2272 = vld [vmem:[%s3 + $0x160] sm:$0xff]
  %v2273 = vld [vmem:[%s3 + $0x168] sm:$0xff]
  %v2274 = vld [vmem:[%s3 + $0x170] sm:$0xff]
  %v2275 = vld [vmem:[%s3 + $0x178] sm:$0xff]
  %v2276 = vld [vmem:[%s3 + $0x180] sm:$0xff]
  %v2277 = vld [vmem:[%s3 + $0x188] sm:$0xff]
  %v2278 = vld [vmem:[%s3 + $0x190] sm:$0xff]
  %v2279 = vld [vmem:[%s3 + $0x198] sm:$0xff]
  %v2280 = vld [vmem:[%s3 + $0x1a0] sm:$0xff]
  %v2281 = vld [vmem:[%s3 + $0x1a8] sm:$0xff]
  %v2282 = vld [vmem:[%s3 + $0x1b0] sm:$0xff]
  %v2283 = vld [vmem:[%s3 + $0x1b8] sm:$0xff]
  %v2284 = vld [vmem:[%s3 + $0x1c0] sm:$0xff]
  %v2285 = vld [vmem:[%s3 + $0x1c8] sm:$0xff]
  %v2286 = vld [vmem:[%s3 + $0x1d0] sm:$0xff]
  %v2287 = vld [vmem:[%s3 + $0x1d8] sm:$0xff]
  %v2288 = vld [vmem:[%s3 + $0x1e0] sm:$0xff]
  %v2289 = vld [vmem:[%s3 + $0x1e8] sm:$0xff]
  %v2290 = vld [vmem:[%s3 + $0x1f0] sm:$0xff]
  %v2291 = vld [vmem:[%s3 + $0x1f8] sm:$0xff]
  %v2292 = vld [vmem:[%s3 + $0x200] sm:$0xff]
  %v2293 = vld [vmem:[%s3 + $0x208] sm:$0xff]
  %v2294 = vld [vmem:[%s3 + $0x210] sm:$0xff]
  %v2295 = vld [vmem:[%s3 + $0x218] sm:$0xff]
  %v2296 = vld [vmem:[%s3 + $0x220] sm:$0xff]
  %v2297 = vld [vmem:[%s3 + $0x228] sm:$0xff]
  %v2298 = vld [vmem:[%s3 + $0x230] sm:$0xff]
  %v2299 = vld [vmem:[%s3 + $0x238] sm:$0xff]
  %v2300 = vld [vmem:[%s3 + $0x240] sm:$0xff]
  %v2301 = vld [vmem:[%s3 + $0x248] sm:$0xff]
  %v2302 = vld [vmem:[%s3 + $0x250] sm:$0xff]
  %v2303 = vld [vmem:[%s3 + $0x258] sm:$0xff]
  %v2304 = vld [vmem:[%s3 + $0x260] sm:$0xff]
  %v2305 = vld [vmem:[%s3 + $0x268] sm:$0xff]
  %v2306 = vld [vmem:[%s3 + $0x270] sm:$0xff]
  %v2307 = vld [vmem:[%s3 + $0x278] sm:$0xff]
  %v2308 = vld [vmem:[%s3 + $0x280] sm:$0xff]
  %v2309 = vld [vmem:[%s3 + $0x288] sm:$0xff]
  %v2310 = vld [vmem:[%s3 + $0x290] sm:$0xff]
  %v2311 = vld [vmem:[%s3 + $0x298] sm:$0xff]
  %v2312 = vld [vmem:[%s3 + $0x2a0] sm:$0xff]
  %v2313 = vld [vmem:[%s3 + $0x2a8] sm:$0xff]
  %v2314 = vld [vmem:[%s3 + $0x2b0] sm:$0xff]
  %v2315 = vld [vmem:[%s3 + $0x2b8] sm:$0xff]
  %v2316 = vld [vmem:[%s3 + $0x2c0] sm:$0xff]
  %v2317 = vld [vmem:[%s3 + $0x2c8] sm:$0xff]
  %v2318 = vld [vmem:[%s3 + $0x2d0] sm:$0xff]
  %v2319 = vld [vmem:[%s3 + $0x2d8] sm:$0xff]
  %v2320 = vld [vmem:[%s3 + $0x2e0] sm:$0xff]
  %v2321 = vld [vmem:[%s3 + $0x2e8] sm:$0xff]
  %v2322 = vld [vmem:[%s3 + $0x2f0] sm:$0xff]
  %v2323 = vld [vmem:[%s3 + $0x2f8] sm:$0xff]
  %v2324 = vld [vmem:[%s3 + $0x300] sm:$0xff]
  %v2325 = vld [vmem:[%s3 + $0x308] sm:$0xff]
  %v2326 = vld [vmem:[%s3 + $0x310] sm:$0xff]
  %v2327 = vld [vmem:[%s3 + $0x318] sm:$0xff]
  %v2328 = vld [vmem:[%s3 + $0x320] sm:$0xff]
  %v2329 = vld [vmem:[%s3 + $0x328] sm:$0xff]
  %v2330 = vld [vmem:[%s3 + $0x330] sm:$0xff]
  %v2331 = vld [vmem:[%s3 + $0x338] sm:$0xff]
  %v2332 = vld [vmem:[%s3 + $0x340] sm:$0xff]
  %v2333 = vld [vmem:[%s3 + $0x348] sm:$0xff]
  %v2334 = vld [vmem:[%s3 + $0x350] sm:$0xff]
  %v2335 = vld [vmem:[%s3 + $0x358] sm:$0xff]
  %v2336 = vld [vmem:[%s3 + $0x360] sm:$0xff]
  %v2337 = vld [vmem:[%s3 + $0x368] sm:$0xff]
  %v2338 = vld [vmem:[%s3 + $0x370] sm:$0xff]
  %v2339 = vld [vmem:[%s3 + $0x378] sm:$0xff]
  %v2340 = vld [vmem:[%s3 + $0x380] sm:$0xff]
  %v2341 = vld [vmem:[%s3 + $0x388] sm:$0xff]
  %v2342 = vld [vmem:[%s3 + $0x390] sm:$0xff]
  %v2343 = vld [vmem:[%s3 + $0x398] sm:$0xff]
  %v2344 = vld [vmem:[%s3 + $0x3a0] sm:$0xff]
  %v2345 = vld [vmem:[%s3 + $0x3a8] sm:$0xff]
  %v2346 = vld [vmem:[%s3 + $0x3b0] sm:$0xff]
  %v2347 = vld [vmem:[%s3 + $0x3b8] sm:$0xff]
  %v2348 = vld [vmem:[%s3 + $0x3c0] sm:$0xff]
  %v2349 = vld [vmem:[%s3 + $0x3c8] sm:$0xff]
  %v2350 = vld [vmem:[%s3 + $0x3d0] sm:$0xff]
  %v2351 = vld [vmem:[%s3 + $0x3d8] sm:$0xff]
  %v2352 = vld [vmem:[%s3 + $0x3e0] sm:$0xff]
  %v2353 = vld [vmem:[%s3 + $0x3e8] sm:$0xff]
  %v2354 = vld [vmem:[%s3 + $0x3f0] sm:$0xff]
  %v2355 = vld [vmem:[%s3 + $0x3f8] sm:$0xff]
  %v2356 = vld [vmem:[%s3 + $0x400] sm:$0xff]
  %v2357 = vld [vmem:[%s3 + $0x408] sm:$0xff]
  %v2358 = vld [vmem:[%s3 + $0x410] sm:$0xff]
  %v2359 = vld [vmem:[%s3 + $0x418] sm:$0xff]
  %v2360 = vld [vmem:[%s3 + $0x420] sm:$0xff]
  %v2361 = vld [vmem:[%s3 + $0x428] sm:$0xff]
  %v2362 = vld [vmem:[%s3 + $0x430] sm:$0xff]
  %v2363 = vld [vmem:[%s3 + $0x438] sm:$0xff]
  %v2364 = vld [vmem:[%s3 + $0x440] sm:$0xff]
  %v2365 = vld [vmem:[%s3 + $0x448] sm:$0xff]
  %v2366 = vld [vmem:[%s3 + $0x450] sm:$0xff]
  %v2367 = vld [vmem:[%s3 + $0x458] sm:$0xff]
  %v2368 = vld [vmem:[%s3 + $0x460] sm:$0xff]
  %v2369 = vld [vmem:[%s3 + $0x468] sm:$0xff]
  %v2370 = vld [vmem:[%s3 + $0x470] sm:$0xff]
  %v2371 = vld [vmem:[%s3 + $0x478] sm:$0xff]
  %v2372 = vld [vmem:[%s3 + $0x480] sm:$0xff]
  %v2373 = vld [vmem:[%s3 + $0x488] sm:$0xff]
  %v2374 = vld [vmem:[%s3 + $0x490] sm:$0xff]
  %v2375 = vld [vmem:[%s3 + $0x498] sm:$0xff]
  %v2376 = vld [vmem:[%s3 + $0x4a0] sm:$0xff]
  %v2377 = vld [vmem:[%s3 + $0x4a8] sm:$0xff]
  %v2378 = vld [vmem:[%s3 + $0x4b0] sm:$0xff]
  %v2379 = vld [vmem:[%s3 + $0x4b8] sm:$0xff]
  %v2380 = vld [vmem:[%s3 + $0x4c0] sm:$0xff]
  %v2381 = vld [vmem:[%s3 + $0x4c8] sm:$0xff]
  %v2382 = vld [vmem:[%s3 + $0x4d0] sm:$0xff]
  %v2383 = vld [vmem:[%s3 + $0x4d8] sm:$0xff]
  %v2384 = vld [vmem:[%s3 + $0x4e0] sm:$0xff]
  %v2385 = vld [vmem:[%s3 + $0x4e8] sm:$0xff]
  %v2386 = vld [vmem:[%s3 + $0x4f0] sm:$0xff]
  %v2387 = vld [vmem:[%s3 + $0x4f8] sm:$0xff]
  %v2388 = vld [vmem:[%s3 + $0x500] sm:$0xff]
  %v2389 = vld [vmem:[%s3 + $0x508] sm:$0xff]
  %v2390 = vld [vmem:[%s3 + $0x510] sm:$0xff]
  %v2391 = vld [vmem:[%s3 + $0x518] sm:$0xff]
  %v2392 = vld [vmem:[%s3 + $0x520] sm:$0xff]
  %v2393 = vld [vmem:[%s3 + $0x528] sm:$0xff]
  %v2394 = vld [vmem:[%s3 + $0x530] sm:$0xff]
  %v2395 = vld [vmem:[%s3 + $0x538] sm:$0xff]
  %v2396 = vld [vmem:[%s3 + $0x540] sm:$0xff]
  %v2397 = vld [vmem:[%s3 + $0x548] sm:$0xff]
  %v2398 = vld [vmem:[%s3 + $0x550] sm:$0xff]
  %v2399 = vld [vmem:[%s3 + $0x558] sm:$0xff]
  %v2400 = vld [vmem:[%s3 + $0x560] sm:$0xff]
  %v2401 = vld [vmem:[%s3 + $0x568] sm:$0xff]
  %v2402 = vld [vmem:[%s3 + $0x570] sm:$0xff]
  %v2403 = vld [vmem:[%s3 + $0x578] sm:$0xff]
  %v2404 = vld [vmem:[%s3 + $0x580] sm:$0xff]
  %v2405 = vld [vmem:[%s3 + $0x588] sm:$0xff]
  %v2406 = vld [vmem:[%s3 + $0x590] sm:$0xff]
  %v2407 = vld [vmem:[%s3 + $0x598] sm:$0xff]
  %v2408 = vld [vmem:[%s3 + $0x5a0] sm:$0xff]
  %v2409 = vld [vmem:[%s3 + $0x5a8] sm:$0xff]
  %v2410 = vld [vmem:[%s3 + $0x5b0] sm:$0xff]
  %v2411 = vld [vmem:[%s3 + $0x5b8] sm:$0xff]
  %v2412 = vld [vmem:[%s3 + $0x5c0] sm:$0xff]
  %v2413 = vld [vmem:[%s3 + $0x5c8] sm:$0xff]
  %v2414 = vld [vmem:[%s3 + $0x5d0] sm:$0xff]
  %v2415 = vld [vmem:[%s3 + $0x5d8] sm:$0xff]
  %v2416 = vld [vmem:[%s3 + $0x5e0] sm:$0xff]
  %v2417 = vld [vmem:[%s3 + $0x5e8] sm:$0xff]
  %v2418 = vld [vmem:[%s3 + $0x5f0] sm:$0xff]
  %v2419 = vld [vmem:[%s3 + $0x5f8] sm:$0xff]
  %v2420 = vld [vmem:[%s4] sm:$0xf]
  %v2422 = vlaneseq
  %v2423 = vshrl.u32 %v2422, 7
  %v2424 = vsub.s32 0, %v2423
  %v2425 = vrot.slane %v2420, %v2424
  %v2426 = vlaneseq
  %v2427 = vshrl.u32 %v2426, 7
  %v2428 = vsub.s32 1, %v2427
  %v2429 = vrot.slane %v2420, %v2428
  %v2430 = vlaneseq
  %v2431 = vshrl.u32 %v2430, 7
  %v2432 = vsub.s32 2, %v2431
  %v2433 = vrot.slane %v2420, %v2432
  %v2434 = vlaneseq
  %v2435 = vshrl.u32 %v2434, 7
  %v2436 = vsub.s32 3, %v2435
  %v2437 = vrot.slane %v2420, %v2436
  %v2634 = vunpack.c.l.b16 %v2228
  %v2635 = vunpack.c.h.b16 %v2228
  %v2636 = vunpack.c.l.b16 %v2229
  %v2637 = vunpack.c.h.b16 %v2229
  %v2638 = vunpack.c.l.b16 %v2230
  %v2639 = vunpack.c.h.b16 %v2230
  %v2640 = vunpack.c.l.b16 %v2231
  %v2641 = vunpack.c.h.b16 %v2231
  %v2642 = vunpack.c.l.b16 %v2232
  %v2643 = vunpack.c.h.b16 %v2232
  %v2644 = vunpack.c.l.b16 %v2233
  %v2645 = vunpack.c.h.b16 %v2233
  %v2646 = vunpack.c.l.b16 %v2234
  %v2647 = vunpack.c.h.b16 %v2234
  %v2648 = vunpack.c.l.b16 %v2235
  %v2649 = vunpack.c.h.b16 %v2235
  %v2650 = vunpack.c.l.b16 %v2236
  %v2651 = vunpack.c.h.b16 %v2236
  %v2652 = vunpack.c.l.b16 %v2237
  %v2653 = vunpack.c.h.b16 %v2237
  %v2654 = vunpack.c.l.b16 %v2238
  %v2655 = vunpack.c.h.b16 %v2238
  %v2656 = vunpack.c.l.b16 %v2239
  %v2657 = vunpack.c.h.b16 %v2239
  %v2658 = vunpack.c.l.b16 %v2240
  %v2659 = vunpack.c.h.b16 %v2240
  %v2660 = vunpack.c.l.b16 %v2241
  %v2661 = vunpack.c.h.b16 %v2241
  %v2662 = vunpack.c.l.b16 %v2242
  %v2663 = vunpack.c.h.b16 %v2242
  %v2664 = vunpack.c.l.b16 %v2243
  %v2665 = vunpack.c.h.b16 %v2243
  %v2666 = vunpack.c.l.b16 %v2244
  %v2667 = vunpack.c.h.b16 %v2244
  %v2668 = vunpack.c.l.b16 %v2245
  %v2669 = vunpack.c.h.b16 %v2245
  %v2670 = vunpack.c.l.b16 %v2246
  %v2671 = vunpack.c.h.b16 %v2246
  %v2672 = vunpack.c.l.b16 %v2247
  %v2673 = vunpack.c.h.b16 %v2247
  %v2674 = vunpack.c.l.b16 %v2248
  %v2675 = vunpack.c.h.b16 %v2248
  %v2676 = vunpack.c.l.b16 %v2249
  %v2677 = vunpack.c.h.b16 %v2249
  %v2678 = vunpack.c.l.b16 %v2250
  %v2679 = vunpack.c.h.b16 %v2250
  %v2680 = vunpack.c.l.b16 %v2251
  %v2681 = vunpack.c.h.b16 %v2251
  %v2682 = vunpack.c.l.b16 %v2252
  %v2683 = vunpack.c.h.b16 %v2252
  %v2684 = vunpack.c.l.b16 %v2253
  %v2685 = vunpack.c.h.b16 %v2253
  %v2686 = vunpack.c.l.b16 %v2254
  %v2687 = vunpack.c.h.b16 %v2254
  %v2688 = vunpack.c.l.b16 %v2255
  %v2689 = vunpack.c.h.b16 %v2255
  %v2690 = vunpack.c.l.b16 %v2256
  %v2691 = vunpack.c.h.b16 %v2256
  %v2692 = vunpack.c.l.b16 %v2257
  %v2693 = vunpack.c.h.b16 %v2257
  %v2694 = vunpack.c.l.b16 %v2258
  %v2695 = vunpack.c.h.b16 %v2258
  %v2696 = vunpack.c.l.b16 %v2259
  %v2697 = vunpack.c.h.b16 %v2259
  %v2698 = vunpack.c.l.b16 %v2260
  %v2699 = vunpack.c.h.b16 %v2260
  %v2700 = vunpack.c.l.b16 %v2261
  %v2701 = vunpack.c.h.b16 %v2261
  %v2702 = vunpack.c.l.b16 %v2262
  %v2703 = vunpack.c.h.b16 %v2262
  %v2704 = vunpack.c.l.b16 %v2263
  %v2705 = vunpack.c.h.b16 %v2263
  %v2706 = vunpack.c.l.b16 %v2264
  %v2707 = vunpack.c.h.b16 %v2264
  %v2708 = vunpack.c.l.b16 %v2265
  %v2709 = vunpack.c.h.b16 %v2265
  %v2710 = vunpack.c.l.b16 %v2266
  %v2711 = vunpack.c.h.b16 %v2266
  %v2712 = vunpack.c.l.b16 %v2267
  %v2713 = vunpack.c.h.b16 %v2267
  %v2714 = vunpack.c.l.b16 %v2268
  %v2715 = vunpack.c.h.b16 %v2268
  %v2716 = vunpack.c.l.b16 %v2269
  %v2717 = vunpack.c.h.b16 %v2269
  %v2718 = vunpack.c.l.b16 %v2270
  %v2719 = vunpack.c.h.b16 %v2270
  %v2720 = vunpack.c.l.b16 %v2271
  %v2721 = vunpack.c.h.b16 %v2271
  %v2722 = vunpack.c.l.b16 %v2272
  %v2723 = vunpack.c.h.b16 %v2272
  %v2724 = vunpack.c.l.b16 %v2273
  %v2725 = vunpack.c.h.b16 %v2273
  %v2726 = vunpack.c.l.b16 %v2274
  %v2727 = vunpack.c.h.b16 %v2274
  %v2728 = vunpack.c.l.b16 %v2275
  %v2729 = vunpack.c.h.b16 %v2275
  %v2730 = vunpack.c.l.b16 %v2276
  %v2731 = vunpack.c.h.b16 %v2276
  %v2732 = vunpack.c.l.b16 %v2277
  %v2733 = vunpack.c.h.b16 %v2277
  %v2734 = vunpack.c.l.b16 %v2278
  %v2735 = vunpack.c.h.b16 %v2278
  %v2736 = vunpack.c.l.b16 %v2279
  %v2737 = vunpack.c.h.b16 %v2279
  %v2738 = vunpack.c.l.b16 %v2280
  %v2739 = vunpack.c.h.b16 %v2280
  %v2740 = vunpack.c.l.b16 %v2281
  %v2741 = vunpack.c.h.b16 %v2281
  %v2742 = vunpack.c.l.b16 %v2282
  %v2743 = vunpack.c.h.b16 %v2282
  %v2744 = vunpack.c.l.b16 %v2283
  %v2745 = vunpack.c.h.b16 %v2283
  %v2746 = vunpack.c.l.b16 %v2284
  %v2747 = vunpack.c.h.b16 %v2284
  %v2748 = vunpack.c.l.b16 %v2285
  %v2749 = vunpack.c.h.b16 %v2285
  %v2750 = vunpack.c.l.b16 %v2286
  %v2751 = vunpack.c.h.b16 %v2286
  %v2752 = vunpack.c.l.b16 %v2287
  %v2753 = vunpack.c.h.b16 %v2287
  %v2754 = vunpack.c.l.b16 %v2288
  %v2755 = vunpack.c.h.b16 %v2288
  %v2756 = vunpack.c.l.b16 %v2289
  %v2757 = vunpack.c.h.b16 %v2289
  %v2758 = vunpack.c.l.b16 %v2290
  %v2759 = vunpack.c.h.b16 %v2290
  %v2760 = vunpack.c.l.b16 %v2291
  %v2761 = vunpack.c.h.b16 %v2291
  %v2762 = vunpack.c.l.b16 %v2292
  %v2763 = vunpack.c.h.b16 %v2292
  %v2764 = vunpack.c.l.b16 %v2293
  %v2765 = vunpack.c.h.b16 %v2293
  %v2766 = vunpack.c.l.b16 %v2294
  %v2767 = vunpack.c.h.b16 %v2294
  %v2768 = vunpack.c.l.b16 %v2295
  %v2769 = vunpack.c.h.b16 %v2295
  %v2770 = vunpack.c.l.b16 %v2296
  %v2771 = vunpack.c.h.b16 %v2296
  %v2772 = vunpack.c.l.b16 %v2297
  %v2773 = vunpack.c.h.b16 %v2297
  %v2774 = vunpack.c.l.b16 %v2298
  %v2775 = vunpack.c.h.b16 %v2298
  %v2776 = vunpack.c.l.b16 %v2299
  %v2777 = vunpack.c.h.b16 %v2299
  %v2778 = vunpack.c.l.b16 %v2300
  %v2779 = vunpack.c.h.b16 %v2300
  %v2780 = vunpack.c.l.b16 %v2301
  %v2781 = vunpack.c.h.b16 %v2301
  %v2782 = vunpack.c.l.b16 %v2302
  %v2783 = vunpack.c.h.b16 %v2302
  %v2784 = vunpack.c.l.b16 %v2303
  %v2785 = vunpack.c.h.b16 %v2303
  %v2786 = vunpack.c.l.b16 %v2304
  %v2787 = vunpack.c.h.b16 %v2304
  %v2788 = vunpack.c.l.b16 %v2305
  %v2789 = vunpack.c.h.b16 %v2305
  %v2790 = vunpack.c.l.b16 %v2306
  %v2791 = vunpack.c.h.b16 %v2306
  %v2792 = vunpack.c.l.b16 %v2307
  %v2793 = vunpack.c.h.b16 %v2307
  %v2794 = vunpack.c.l.b16 %v2308
  %v2795 = vunpack.c.h.b16 %v2308
  %v2796 = vunpack.c.l.b16 %v2309
  %v2797 = vunpack.c.h.b16 %v2309
  %v2798 = vunpack.c.l.b16 %v2310
  %v2799 = vunpack.c.h.b16 %v2310
  %v2800 = vunpack.c.l.b16 %v2311
  %v2801 = vunpack.c.h.b16 %v2311
  %v2802 = vunpack.c.l.b16 %v2312
  %v2803 = vunpack.c.h.b16 %v2312
  %v2804 = vunpack.c.l.b16 %v2313
  %v2805 = vunpack.c.h.b16 %v2313
  %v2806 = vunpack.c.l.b16 %v2314
  %v2807 = vunpack.c.h.b16 %v2314
  %v2808 = vunpack.c.l.b16 %v2315
  %v2809 = vunpack.c.h.b16 %v2315
  %v2810 = vunpack.c.l.b16 %v2316
  %v2811 = vunpack.c.h.b16 %v2316
  %v2812 = vunpack.c.l.b16 %v2317
  %v2813 = vunpack.c.h.b16 %v2317
  %v2814 = vunpack.c.l.b16 %v2318
  %v2815 = vunpack.c.h.b16 %v2318
  %v2816 = vunpack.c.l.b16 %v2319
  %v2817 = vunpack.c.h.b16 %v2319
  %v2818 = vunpack.c.l.b16 %v2320
  %v2819 = vunpack.c.h.b16 %v2320
  %v2820 = vunpack.c.l.b16 %v2321
  %v2821 = vunpack.c.h.b16 %v2321
  %v2822 = vunpack.c.l.b16 %v2322
  %v2823 = vunpack.c.h.b16 %v2322
  %v2824 = vunpack.c.l.b16 %v2323
  %v2825 = vunpack.c.h.b16 %v2323
  %v2826 = vunpack.c.l.b16 %v2324
  %v2827 = vunpack.c.h.b16 %v2324
  %v2828 = vunpack.c.l.b16 %v2325
  %v2829 = vunpack.c.h.b16 %v2325
  %v2830 = vunpack.c.l.b16 %v2326
  %v2831 = vunpack.c.h.b16 %v2326
  %v2832 = vunpack.c.l.b16 %v2327
  %v2833 = vunpack.c.h.b16 %v2327
  %v2834 = vunpack.c.l.b16 %v2328
  %v2835 = vunpack.c.h.b16 %v2328
  %v2836 = vunpack.c.l.b16 %v2329
  %v2837 = vunpack.c.h.b16 %v2329
  %v2838 = vunpack.c.l.b16 %v2330
  %v2839 = vunpack.c.h.b16 %v2330
  %v2840 = vunpack.c.l.b16 %v2331
  %v2841 = vunpack.c.h.b16 %v2331
  %v2842 = vunpack.c.l.b16 %v2332
  %v2843 = vunpack.c.h.b16 %v2332
  %v2844 = vunpack.c.l.b16 %v2333
  %v2845 = vunpack.c.h.b16 %v2333
  %v2846 = vunpack.c.l.b16 %v2334
  %v2847 = vunpack.c.h.b16 %v2334
  %v2848 = vunpack.c.l.b16 %v2335
  %v2849 = vunpack.c.h.b16 %v2335
  %v2850 = vunpack.c.l.b16 %v2336
  %v2851 = vunpack.c.h.b16 %v2336
  %v2852 = vunpack.c.l.b16 %v2337
  %v2853 = vunpack.c.h.b16 %v2337
  %v2854 = vunpack.c.l.b16 %v2338
  %v2855 = vunpack.c.h.b16 %v2338
  %v2856 = vunpack.c.l.b16 %v2339
  %v2857 = vunpack.c.h.b16 %v2339
  %v2858 = vunpack.c.l.b16 %v2340
  %v2859 = vunpack.c.h.b16 %v2340
  %v2860 = vunpack.c.l.b16 %v2341
  %v2861 = vunpack.c.h.b16 %v2341
  %v2862 = vunpack.c.l.b16 %v2342
  %v2863 = vunpack.c.h.b16 %v2342
  %v2864 = vunpack.c.l.b16 %v2343
  %v2865 = vunpack.c.h.b16 %v2343
  %v2866 = vunpack.c.l.b16 %v2344
  %v2867 = vunpack.c.h.b16 %v2344
  %v2868 = vunpack.c.l.b16 %v2345
  %v2869 = vunpack.c.h.b16 %v2345
  %v2870 = vunpack.c.l.b16 %v2346
  %v2871 = vunpack.c.h.b16 %v2346
  %v2872 = vunpack.c.l.b16 %v2347
  %v2873 = vunpack.c.h.b16 %v2347
  %v2874 = vunpack.c.l.b16 %v2348
  %v2875 = vunpack.c.h.b16 %v2348
  %v2876 = vunpack.c.l.b16 %v2349
  %v2877 = vunpack.c.h.b16 %v2349
  %v2878 = vunpack.c.l.b16 %v2350
  %v2879 = vunpack.c.h.b16 %v2350
  %v2880 = vunpack.c.l.b16 %v2351
  %v2881 = vunpack.c.h.b16 %v2351
  %v2882 = vunpack.c.l.b16 %v2352
  %v2883 = vunpack.c.h.b16 %v2352
  %v2884 = vunpack.c.l.b16 %v2353
  %v2885 = vunpack.c.h.b16 %v2353
  %v2886 = vunpack.c.l.b16 %v2354
  %v2887 = vunpack.c.h.b16 %v2354
  %v2888 = vunpack.c.l.b16 %v2355
  %v2889 = vunpack.c.h.b16 %v2355
  %v2890 = vunpack.c.l.b16 %v2356
  %v2891 = vunpack.c.h.b16 %v2356
  %v2892 = vunpack.c.l.b16 %v2357
  %v2893 = vunpack.c.h.b16 %v2357
  %v2894 = vunpack.c.l.b16 %v2358
  %v2895 = vunpack.c.h.b16 %v2358
  %v2896 = vunpack.c.l.b16 %v2359
  %v2897 = vunpack.c.h.b16 %v2359
  %v2898 = vunpack.c.l.b16 %v2360
  %v2899 = vunpack.c.h.b16 %v2360
  %v2900 = vunpack.c.l.b16 %v2361
  %v2901 = vunpack.c.h.b16 %v2361
  %v2902 = vunpack.c.l.b16 %v2362
  %v2903 = vunpack.c.h.b16 %v2362
  %v2904 = vunpack.c.l.b16 %v2363
  %v2905 = vunpack.c.h.b16 %v2363
  %v2906 = vunpack.c.l.b16 %v2364
  %v2907 = vunpack.c.h.b16 %v2364
  %v2908 = vunpack.c.l.b16 %v2365
  %v2909 = vunpack.c.h.b16 %v2365
  %v2910 = vunpack.c.l.b16 %v2366
  %v2911 = vunpack.c.h.b16 %v2366
  %v2912 = vunpack.c.l.b16 %v2367
  %v2913 = vunpack.c.h.b16 %v2367
  %v2914 = vunpack.c.l.b16 %v2368
  %v2915 = vunpack.c.h.b16 %v2368
  %v2916 = vunpack.c.l.b16 %v2369
  %v2917 = vunpack.c.h.b16 %v2369
  %v2918 = vunpack.c.l.b16 %v2370
  %v2919 = vunpack.c.h.b16 %v2370
  %v2920 = vunpack.c.l.b16 %v2371
  %v2921 = vunpack.c.h.b16 %v2371
  %v2922 = vunpack.c.l.b16 %v2372
  %v2923 = vunpack.c.h.b16 %v2372
  %v2924 = vunpack.c.l.b16 %v2373
  %v2925 = vunpack.c.h.b16 %v2373
  %v2926 = vunpack.c.l.b16 %v2374
  %v2927 = vunpack.c.h.b16 %v2374
  %v2928 = vunpack.c.l.b16 %v2375
  %v2929 = vunpack.c.h.b16 %v2375
  %v2930 = vunpack.c.l.b16 %v2376
  %v2931 = vunpack.c.h.b16 %v2376
  %v2932 = vunpack.c.l.b16 %v2377
  %v2933 = vunpack.c.h.b16 %v2377
  %v2934 = vunpack.c.l.b16 %v2378
  %v2935 = vunpack.c.h.b16 %v2378
  %v2936 = vunpack.c.l.b16 %v2379
  %v2937 = vunpack.c.h.b16 %v2379
  %v2938 = vunpack.c.l.b16 %v2380
  %v2939 = vunpack.c.h.b16 %v2380
  %v2940 = vunpack.c.l.b16 %v2381
  %v2941 = vunpack.c.h.b16 %v2381
  %v2942 = vunpack.c.l.b16 %v2382
  %v2943 = vunpack.c.h.b16 %v2382
  %v2944 = vunpack.c.l.b16 %v2383
  %v2945 = vunpack.c.h.b16 %v2383
  %v2946 = vunpack.c.l.b16 %v2384
  %v2947 = vunpack.c.h.b16 %v2384
  %v2948 = vunpack.c.l.b16 %v2385
  %v2949 = vunpack.c.h.b16 %v2385
  %v2950 = vunpack.c.l.b16 %v2386
  %v2951 = vunpack.c.h.b16 %v2386
  %v2952 = vunpack.c.l.b16 %v2387
  %v2953 = vunpack.c.h.b16 %v2387
  %v2954 = vunpack.c.l.b16 %v2388
  %v2955 = vunpack.c.h.b16 %v2388
  %v2956 = vunpack.c.l.b16 %v2389
  %v2957 = vunpack.c.h.b16 %v2389
  %v2958 = vunpack.c.l.b16 %v2390
  %v2959 = vunpack.c.h.b16 %v2390
  %v2960 = vunpack.c.l.b16 %v2391
  %v2961 = vunpack.c.h.b16 %v2391
  %v2962 = vunpack.c.l.b16 %v2392
  %v2963 = vunpack.c.h.b16 %v2392
  %v2964 = vunpack.c.l.b16 %v2393
  %v2965 = vunpack.c.h.b16 %v2393
  %v2966 = vunpack.c.l.b16 %v2394
  %v2967 = vunpack.c.h.b16 %v2394
  %v2968 = vunpack.c.l.b16 %v2395
  %v2969 = vunpack.c.h.b16 %v2395
  %v2970 = vunpack.c.l.b16 %v2396
  %v2971 = vunpack.c.h.b16 %v2396
  %v2972 = vunpack.c.l.b16 %v2397
  %v2973 = vunpack.c.h.b16 %v2397
  %v2974 = vunpack.c.l.b16 %v2398
  %v2975 = vunpack.c.h.b16 %v2398
  %v2976 = vunpack.c.l.b16 %v2399
  %v2977 = vunpack.c.h.b16 %v2399
  %v2978 = vunpack.c.l.b16 %v2400
  %v2979 = vunpack.c.h.b16 %v2400
  %v2980 = vunpack.c.l.b16 %v2401
  %v2981 = vunpack.c.h.b16 %v2401
  %v2982 = vunpack.c.l.b16 %v2402
  %v2983 = vunpack.c.h.b16 %v2402
  %v2984 = vunpack.c.l.b16 %v2403
  %v2985 = vunpack.c.h.b16 %v2403
  %v2986 = vunpack.c.l.b16 %v2404
  %v2987 = vunpack.c.h.b16 %v2404
  %v2988 = vunpack.c.l.b16 %v2405
  %v2989 = vunpack.c.h.b16 %v2405
  %v2990 = vunpack.c.l.b16 %v2406
  %v2991 = vunpack.c.h.b16 %v2406
  %v2992 = vunpack.c.l.b16 %v2407
  %v2993 = vunpack.c.h.b16 %v2407
  %v2994 = vunpack.c.l.b16 %v2408
  %v2995 = vunpack.c.h.b16 %v2408
  %v2996 = vunpack.c.l.b16 %v2409
  %v2997 = vunpack.c.h.b16 %v2409
  %v2998 = vunpack.c.l.b16 %v2410
  %v2999 = vunpack.c.h.b16 %v2410
  %v3000 = vunpack.c.l.b16 %v2411
  %v3001 = vunpack.c.h.b16 %v2411
  %v3002 = vunpack.c.l.b16 %v2412
  %v3003 = vunpack.c.h.b16 %v2412
  %v3004 = vunpack.c.l.b16 %v2413
  %v3005 = vunpack.c.h.b16 %v2413
  %v3006 = vunpack.c.l.b16 %v2414
  %v3007 = vunpack.c.h.b16 %v2414
  %v3008 = vunpack.c.l.b16 %v2415
  %v3009 = vunpack.c.h.b16 %v2415
  %v3010 = vunpack.c.l.b16 %v2416
  %v3011 = vunpack.c.h.b16 %v2416
  %v3012 = vunpack.c.l.b16 %v2417
  %v3013 = vunpack.c.h.b16 %v2417
  %v3014 = vunpack.c.l.b16 %v2418
  %v3015 = vunpack.c.h.b16 %v2418
  %v3016 = vunpack.c.l.b16 %v2419
  %v3017 = vunpack.c.h.b16 %v2419
  %v3018 = vpack.c.b16 %v2638, %v2634
  %v3019 = vpack.c.b16 %v2639, %v2635
  %v3020 = vpack.c.b16 %v2640, %v2636
  %v3021 = vpack.c.b16 %v2641, %v2637
  %v3022 = vpack.c.b16 %v2646, %v2642
  %v3023 = vpack.c.b16 %v2647, %v2643
  %v3024 = vpack.c.b16 %v2648, %v2644
  %v3025 = vpack.c.b16 %v2649, %v2645
  %v3026 = vpack.c.b16 %v2654, %v2650
  %v3027 = vpack.c.b16 %v2655, %v2651
  %v3028 = vpack.c.b16 %v2656, %v2652
  %v3029 = vpack.c.b16 %v2657, %v2653
  %v3030 = vpack.c.b16 %v2662, %v2658
  %v3031 = vpack.c.b16 %v2663, %v2659
  %v3032 = vpack.c.b16 %v2664, %v2660
  %v3033 = vpack.c.b16 %v2665, %v2661
  %v3034 = vpack.c.b16 %v2670, %v2666
  %v3035 = vpack.c.b16 %v2671, %v2667
  %v3036 = vpack.c.b16 %v2672, %v2668
  %v3037 = vpack.c.b16 %v2673, %v2669
  %v3038 = vpack.c.b16 %v2678, %v2674
  %v3039 = vpack.c.b16 %v2679, %v2675
  %v3040 = vpack.c.b16 %v2680, %v2676
  %v3041 = vpack.c.b16 %v2681, %v2677
  %v3042 = vpack.c.b16 %v2686, %v2682
  %v3043 = vpack.c.b16 %v2687, %v2683
  %v3044 = vpack.c.b16 %v2688, %v2684
  %v3045 = vpack.c.b16 %v2689, %v2685
  %v3046 = vpack.c.b16 %v2694, %v2690
  %v3047 = vpack.c.b16 %v2695, %v2691
  %v3048 = vpack.c.b16 %v2696, %v2692
  %v3049 = vpack.c.b16 %v2697, %v2693
  %v3050 = vpack.c.b16 %v2702, %v2698
  %v3051 = vpack.c.b16 %v2703, %v2699
  %v3052 = vpack.c.b16 %v2704, %v2700
  %v3053 = vpack.c.b16 %v2705, %v2701
  %v3054 = vpack.c.b16 %v2710, %v2706
  %v3055 = vpack.c.b16 %v2711, %v2707
  %v3056 = vpack.c.b16 %v2712, %v2708
  %v3057 = vpack.c.b16 %v2713, %v2709
  %v3058 = vpack.c.b16 %v2718, %v2714
  %v3059 = vpack.c.b16 %v2719, %v2715
  %v3060 = vpack.c.b16 %v2720, %v2716
  %v3061 = vpack.c.b16 %v2721, %v2717
  %v3062 = vpack.c.b16 %v2726, %v2722
  %v3063 = vpack.c.b16 %v2727, %v2723
  %v3064 = vpack.c.b16 %v2728, %v2724
  %v3065 = vpack.c.b16 %v2729, %v2725
  %v3066 = vpack.c.b16 %v2734, %v2730
  %v3067 = vpack.c.b16 %v2735, %v2731
  %v3068 = vpack.c.b16 %v2736, %v2732
  %v3069 = vpack.c.b16 %v2737, %v2733
  %v3070 = vpack.c.b16 %v2742, %v2738
  %v3071 = vpack.c.b16 %v2743, %v2739
  %v3072 = vpack.c.b16 %v2744, %v2740
  %v3073 = vpack.c.b16 %v2745, %v2741
  %v3074 = vpack.c.b16 %v2750, %v2746
  %v3075 = vpack.c.b16 %v2751, %v2747
  %v3076 = vpack.c.b16 %v2752, %v2748
  %v3077 = vpack.c.b16 %v2753, %v2749
  %v3078 = vpack.c.b16 %v2758, %v2754
  %v3079 = vpack.c.b16 %v2759, %v2755
  %v3080 = vpack.c.b16 %v2760, %v2756
  %v3081 = vpack.c.b16 %v2761, %v2757
  %v3082 = vpack.c.b16 %v2766, %v2762
  %v3083 = vpack.c.b16 %v2767, %v2763
  %v3084 = vpack.c.b16 %v2768, %v2764
  %v3085 = vpack.c.b16 %v2769, %v2765
  %v3086 = vpack.c.b16 %v2774, %v2770
  %v3087 = vpack.c.b16 %v2775, %v2771
  %v3088 = vpack.c.b16 %v2776, %v2772
  %v3089 = vpack.c.b16 %v2777, %v2773
  %v3090 = vpack.c.b16 %v2782, %v2778
  %v3091 = vpack.c.b16 %v2783, %v2779
  %v3092 = vpack.c.b16 %v2784, %v2780
  %v3093 = vpack.c.b16 %v2785, %v2781
  %v3094 = vpack.c.b16 %v2790, %v2786
  %v3095 = vpack.c.b16 %v2791, %v2787
  %v3096 = vpack.c.b16 %v2792, %v2788
  %v3097 = vpack.c.b16 %v2793, %v2789
  %v3098 = vpack.c.b16 %v2798, %v2794
  %v3099 = vpack.c.b16 %v2799, %v2795
  %v3100 = vpack.c.b16 %v2800, %v2796
  %v3101 = vpack.c.b16 %v2801, %v2797
  %v3102 = vpack.c.b16 %v2806, %v2802
  %v3103 = vpack.c.b16 %v2807, %v2803
  %v3104 = vpack.c.b16 %v2808, %v2804
  %v3105 = vpack.c.b16 %v2809, %v2805
  %v3106 = vpack.c.b16 %v2814, %v2810
  %v3107 = vpack.c.b16 %v2815, %v2811
  %v3108 = vpack.c.b16 %v2816, %v2812
  %v3109 = vpack.c.b16 %v2817, %v2813
  %v3110 = vpack.c.b16 %v2822, %v2818
  %v3111 = vpack.c.b16 %v2823, %v2819
  %v3112 = vpack.c.b16 %v2824, %v2820
  %v3113 = vpack.c.b16 %v2825, %v2821
  %v3114 = vpack.c.b16 %v2830, %v2826
  %v3115 = vpack.c.b16 %v2831, %v2827
  %v3116 = vpack.c.b16 %v2832, %v2828
  %v3117 = vpack.c.b16 %v2833, %v2829
  %v3118 = vpack.c.b16 %v2838, %v2834
  %v3119 = vpack.c.b16 %v2839, %v2835
  %v3120 = vpack.c.b16 %v2840, %v2836
  %v3121 = vpack.c.b16 %v2841, %v2837
  %v3122 = vpack.c.b16 %v2846, %v2842
  %v3123 = vpack.c.b16 %v2847, %v2843
  %v3124 = vpack.c.b16 %v2848, %v2844
  %v3125 = vpack.c.b16 %v2849, %v2845
  %v3126 = vpack.c.b16 %v2854, %v2850
  %v3127 = vpack.c.b16 %v2855, %v2851
  %v3128 = vpack.c.b16 %v2856, %v2852
  %v3129 = vpack.c.b16 %v2857, %v2853
  %v3130 = vpack.c.b16 %v2862, %v2858
  %v3131 = vpack.c.b16 %v2863, %v2859
  %v3132 = vpack.c.b16 %v2864, %v2860
  %v3133 = vpack.c.b16 %v2865, %v2861
  %v3134 = vpack.c.b16 %v2870, %v2866
  %v3135 = vpack.c.b16 %v2871, %v2867
  %v3136 = vpack.c.b16 %v2872, %v2868
  %v3137 = vpack.c.b16 %v2873, %v2869
  %v3138 = vpack.c.b16 %v2878, %v2874
  %v3139 = vpack.c.b16 %v2879, %v2875
  %v3140 = vpack.c.b16 %v2880, %v2876
  %v3141 = vpack.c.b16 %v2881, %v2877
  %v3142 = vpack.c.b16 %v2886, %v2882
  %v3143 = vpack.c.b16 %v2887, %v2883
  %v3144 = vpack.c.b16 %v2888, %v2884
  %v3145 = vpack.c.b16 %v2889, %v2885
  %v3146 = vpack.c.b16 %v2894, %v2890
  %v3147 = vpack.c.b16 %v2895, %v2891
  %v3148 = vpack.c.b16 %v2896, %v2892
  %v3149 = vpack.c.b16 %v2897, %v2893
  %v3150 = vpack.c.b16 %v2902, %v2898
  %v3151 = vpack.c.b16 %v2903, %v2899
  %v3152 = vpack.c.b16 %v2904, %v2900
  %v3153 = vpack.c.b16 %v2905, %v2901
  %v3154 = vpack.c.b16 %v2910, %v2906
  %v3155 = vpack.c.b16 %v2911, %v2907
  %v3156 = vpack.c.b16 %v2912, %v2908
  %v3157 = vpack.c.b16 %v2913, %v2909
  %v3158 = vpack.c.b16 %v2918, %v2914
  %v3159 = vpack.c.b16 %v2919, %v2915
  %v3160 = vpack.c.b16 %v2920, %v2916
  %v3161 = vpack.c.b16 %v2921, %v2917
  %v3162 = vpack.c.b16 %v2926, %v2922
  %v3163 = vpack.c.b16 %v2927, %v2923
  %v3164 = vpack.c.b16 %v2928, %v2924
  %v3165 = vpack.c.b16 %v2929, %v2925
  %v3166 = vpack.c.b16 %v2934, %v2930
  %v3167 = vpack.c.b16 %v2935, %v2931
  %v3168 = vpack.c.b16 %v2936, %v2932
  %v3169 = vpack.c.b16 %v2937, %v2933
  %v3170 = vpack.c.b16 %v2942, %v2938
  %v3171 = vpack.c.b16 %v2943, %v2939
  %v3172 = vpack.c.b16 %v2944, %v2940
  %v3173 = vpack.c.b16 %v2945, %v2941
  %v3174 = vpack.c.b16 %v2950, %v2946
  %v3175 = vpack.c.b16 %v2951, %v2947
  %v3176 = vpack.c.b16 %v2952, %v2948
  %v3177 = vpack.c.b16 %v2953, %v2949
  %v3178 = vpack.c.b16 %v2958, %v2954
  %v3179 = vpack.c.b16 %v2959, %v2955
  %v3180 = vpack.c.b16 %v2960, %v2956
  %v3181 = vpack.c.b16 %v2961, %v2957
  %v3182 = vpack.c.b16 %v2966, %v2962
  %v3183 = vpack.c.b16 %v2967, %v2963
  %v3184 = vpack.c.b16 %v2968, %v2964
  %v3185 = vpack.c.b16 %v2969, %v2965
  %v3186 = vpack.c.b16 %v2974, %v2970
  %v3187 = vpack.c.b16 %v2975, %v2971
  %v3188 = vpack.c.b16 %v2976, %v2972
  %v3189 = vpack.c.b16 %v2977, %v2973
  %v3190 = vpack.c.b16 %v2982, %v2978
  %v3191 = vpack.c.b16 %v2983, %v2979
  %v3192 = vpack.c.b16 %v2984, %v2980
  %v3193 = vpack.c.b16 %v2985, %v2981
  %v3194 = vpack.c.b16 %v2990, %v2986
  %v3195 = vpack.c.b16 %v2991, %v2987
  %v3196 = vpack.c.b16 %v2992, %v2988
  %v3197 = vpack.c.b16 %v2993, %v2989
  %v3198 = vpack.c.b16 %v2998, %v2994
  %v3199 = vpack.c.b16 %v2999, %v2995
  %v3200 = vpack.c.b16 %v3000, %v2996
  %v3201 = vpack.c.b16 %v3001, %v2997
  %v3202 = vpack.c.b16 %v3006, %v3002
  %v3203 = vpack.c.b16 %v3007, %v3003
  %v3204 = vpack.c.b16 %v3008, %v3004
  %v3205 = vpack.c.b16 %v3009, %v3005
  %v3206 = vpack.c.b16 %v3014, %v3010
  %v3207 = vpack.c.b16 %v3015, %v3011
  %v3208 = vpack.c.b16 %v3016, %v3012
  %v3209 = vpack.c.b16 %v3017, %v3013
  %3402 = vmatprep.subr.bf16.mxu0 %v3019
  %3403 = vmatpush1.bf16.msra.mxu0 %v3018
  %3404 = vmatprep.subr.bf16.mxu0 %v3023
  %3405 = vmatpush1.bf16.msra.mxu0 %v3022
  %3406 = vmatprep.subr.bf16.mxu0 %v3027
  %3407 = vmatpush1.bf16.msra.mxu0 %v3026
  %3408 = vmatprep.subr.bf16.mxu0 %v3031
  %3409 = vmatpush1.bf16.msra.mxu0 %v3030
  %3410 = vmatprep.subr.bf16.mxu0 %v3035
  %3411 = vmatpush1.bf16.msra.mxu0 %v3034
  %3412 = vmatprep.subr.bf16.mxu0 %v3039
  %3413 = vmatpush1.bf16.msra.mxu0 %v3038
  %3414 = vmatprep.subr.bf16.mxu0 %v3043
  %3415 = vmatpush1.bf16.msra.mxu0 %v3042
  %3416 = vmatprep.subr.bf16.mxu0 %v3047
  %3417 = vmatpush1.bf16.msra.mxu0 %v3046
  %3418 = vmatprep.subr.bf16.mxu0 %v3051
  %3419 = vmatpush1.bf16.msra.mxu0 %v3050
  %3420 = vmatprep.subr.bf16.mxu0 %v3055
  %3421 = vmatpush1.bf16.msra.mxu0 %v3054
  %3422 = vmatprep.subr.bf16.mxu0 %v3059
  %3423 = vmatpush1.bf16.msra.mxu0 %v3058
  %3424 = vmatprep.subr.bf16.mxu0 %v3063
  %3425 = vmatpush1.bf16.msra.mxu0 %v3062
  %3426 = vmatprep.subr.bf16.mxu0 %v3067
  %3427 = vmatpush1.bf16.msra.mxu0 %v3066
  %3428 = vmatprep.subr.bf16.mxu0 %v3071
  %3429 = vmatpush1.bf16.msra.mxu0 %v3070
  %3430 = vmatprep.subr.bf16.mxu0 %v3075
  %3431 = vmatpush1.bf16.msra.mxu0 %v3074
  %3432 = vmatprep.subr.bf16.mxu0 %v3079
  %3433 = vmatpush1.bf16.msra.mxu0 %v3078
  %3434 = vmatprep.mubr.bf16.mxu0 %v2223
  %3435 = vmatmul.mubr.bf16.gmra.mrb[0].mxu0 %v2222
  %v3436 = vpop.f32.mrb[0].mxu0
  %v3437 = vadd.f32 %v2425, %v3436
  %v3438 = vpop.f32.mrb[0].mxu0
  %v3439 = vadd.f32 %v2429, %v3438
  %v3440 = vpop.f32.mrb[0].mxu0
  %v3441 = vadd.f32 %v2425, %v3440
  %v3442 = vpop.f32.mrb[0].mxu0
  %v3443 = vadd.f32 %v2429, %v3442
  %3444 = vdwg.mxu0
  %3445 = vmatprep.subr.bf16.mxu0 %v3083
  %3446 = vmatpush1.bf16.msra.mxu0 %v3082
  %3447 = vmatprep.subr.bf16.mxu0 %v3087
  %3448 = vmatpush1.bf16.msra.mxu0 %v3086
  %3449 = vmatprep.subr.bf16.mxu0 %v3091
  %3450 = vmatpush1.bf16.msra.mxu0 %v3090
  %3451 = vmatprep.subr.bf16.mxu0 %v3095
  %3452 = vmatpush1.bf16.msra.mxu0 %v3094
  %3453 = vmatprep.subr.bf16.mxu0 %v3099
  %3454 = vmatpush1.bf16.msra.mxu0 %v3098
  %3455 = vmatprep.subr.bf16.mxu0 %v3103
  %3456 = vmatpush1.bf16.msra.mxu0 %v3102
  %3457 = vmatprep.subr.bf16.mxu0 %v3107
  %3458 = vmatpush1.bf16.msra.mxu0 %v3106
  %3459 = vmatprep.subr.bf16.mxu0 %v3111
  %3460 = vmatpush1.bf16.msra.mxu0 %v3110
  %3461 = vmatprep.subr.bf16.mxu0 %v3115
  %3462 = vmatpush1.bf16.msra.mxu0 %v3114
  %3463 = vmatprep.subr.bf16.mxu0 %v3119
  %3464 = vmatpush1.bf16.msra.mxu0 %v3118
  %3465 = vmatprep.subr.bf16.mxu0 %v3123
  %3466 = vmatpush1.bf16.msra.mxu0 %v3122
  %3467 = vmatprep.subr.bf16.mxu0 %v3127
  %3468 = vmatpush1.bf16.msra.mxu0 %v3126
  %3469 = vmatprep.subr.bf16.mxu0 %v3131
  %3470 = vmatpush1.bf16.msra.mxu0 %v3130
  %3471 = vmatprep.subr.bf16.mxu0 %v3135
  %3472 = vmatpush1.bf16.msra.mxu0 %v3134
  %3473 = vmatprep.subr.bf16.mxu0 %v3139
  %3474 = vmatpush1.bf16.msra.mxu0 %v3138
  %3475 = vmatprep.subr.bf16.mxu0 %v3143
  %3476 = vmatpush1.bf16.msra.mxu0 %v3142
  %3477 = vmatprep.mubr.bf16.mxu0 %v2225
  %3478 = vmatmul.mubr.bf16.gmra.mrb[0].mxu0 %v2224
  %v3479 = vpop.f32.mrb[0].mxu0
  %v3480 = vadd.f32 %v3437, %v3479
  %v3481 = vpop.f32.mrb[0].mxu0
  %v3482 = vadd.f32 %v3439, %v3481
  %v3483 = vpop.f32.mrb[0].mxu0
  %v3484 = vadd.f32 %v3441, %v3483
  %v3485 = vpop.f32.mrb[0].mxu0
  %v3486 = vadd.f32 %v3443, %v3485
  %3487 = vdwg.mxu0
  %3488 = vmatprep.subr.bf16.mxu0 %v3147
  %3489 = vmatpush1.bf16.msra.mxu0 %v3146
  %3490 = vmatprep.subr.bf16.mxu0 %v3151
  %3491 = vmatpush1.bf16.msra.mxu0 %v3150
  %3492 = vmatprep.subr.bf16.mxu0 %v3155
  %3493 = vmatpush1.bf16.msra.mxu0 %v3154
  %3494 = vmatprep.subr.bf16.mxu0 %v3159
  %3495 = vmatpush1.bf16.msra.mxu0 %v3158
  %3496 = vmatprep.subr.bf16.mxu0 %v3163
  %3497 = vmatpush1.bf16.msra.mxu0 %v3162
  %3498 = vmatprep.subr.bf16.mxu0 %v3167
  %3499 = vmatpush1.bf16.msra.mxu0 %v3166
  %3500 = vmatprep.subr.bf16.mxu0 %v3171
  %3501 = vmatpush1.bf16.msra.mxu0 %v3170
  %3502 = vmatprep.subr.bf16.mxu0 %v3175
  %3503 = vmatpush1.bf16.msra.mxu0 %v3174
  %3504 = vmatprep.subr.bf16.mxu0 %v3179
  %3505 = vmatpush1.bf16.msra.mxu0 %v3178
  %3506 = vmatprep.subr.bf16.mxu0 %v3183
  %3507 = vmatpush1.bf16.msra.mxu0 %v3182
  %3508 = vmatprep.subr.bf16.mxu0 %v3187
  %3509 = vmatpush1.bf16.msra.mxu0 %v3186
  %3510 = vmatprep.subr.bf16.mxu0 %v3191
  %3511 = vmatpush1.bf16.msra.mxu0 %v3190
  %3512 = vmatprep.subr.bf16.mxu0 %v3195
  %3513 = vmatpush1.bf16.msra.mxu0 %v3194
  %3514 = vmatprep.subr.bf16.mxu0 %v3199
  %3515 = vmatpush1.bf16.msra.mxu0 %v3198
  %3516 = vmatprep.subr.bf16.mxu0 %v3203
  %3517 = vmatpush1.bf16.msra.mxu0 %v3202
  %3518 = vmatprep.subr.bf16.mxu0 %v3207
  %3519 = vmatpush1.bf16.msra.mxu0 %v3206
  %3520 = vmatprep.mubr.bf16.mxu0 %v2227
  %3521 = vmatmul.mubr.bf16.gmra.mrb[0].mxu0 %v2226
  %v3522 = vpop.f32.mrb[0].mxu0
  %v3523 = vadd.f32 %v3480, %v3522
  %v3524 = vpop.f32.mrb[0].mxu0
  %v3525 = vadd.f32 %v3482, %v3524
  %v3526 = vpop.f32.mrb[0].mxu0
  %v3527 = vadd.f32 %v3484, %v3526
  %v3528 = vpop.f32.mrb[0].mxu0
  %v3529 = vadd.f32 %v3486, %v3528
  %3530 = vdwg.mxu0
  %3531 = vmatprep.subr.bf16.mxu0 %v3021
  %3532 = vmatpush1.bf16.msra.mxu0 %v3020
  %3533 = vmatprep.subr.bf16.mxu0 %v3025
  %3534 = vmatpush1.bf16.msra.mxu0 %v3024
  %3535 = vmatprep.subr.bf16.mxu0 %v3029
  %3536 = vmatpush1.bf16.msra.mxu0 %v3028
  %3537 = vmatprep.subr.bf16.mxu0 %v3033
  %3538 = vmatpush1.bf16.msra.mxu0 %v3032
  %3539 = vmatprep.subr.bf16.mxu0 %v3037
  %3540 = vmatpush1.bf16.msra.mxu0 %v3036
  %3541 = vmatprep.subr.bf16.mxu0 %v3041
  %3542 = vmatpush1.bf16.msra.mxu0 %v3040
  %3543 = vmatprep.subr.bf16.mxu0 %v3045
  %3544 = vmatpush1.bf16.msra.mxu0 %v3044
  %3545 = vmatprep.subr.bf16.mxu0 %v3049
  %3546 = vmatpush1.bf16.msra.mxu0 %v3048
  %3547 = vmatprep.subr.bf16.mxu0 %v3053
  %3548 = vmatpush1.bf16.msra.mxu0 %v3052
  %3549 = vmatprep.subr.bf16.mxu0 %v3057
  %3550 = vmatpush1.bf16.msra.mxu0 %v3056
  %3551 = vmatprep.subr.bf16.mxu0 %v3061
  %3552 = vmatpush1.bf16.msra.mxu0 %v3060
  %3553 = vmatprep.subr.bf16.mxu0 %v3065
  %3554 = vmatpush1.bf16.msra.mxu0 %v3064
  %3555 = vmatprep.subr.bf16.mxu0 %v3069
  %3556 = vmatpush1.bf16.msra.mxu0 %v3068
  %3557 = vmatprep.subr.bf16.mxu0 %v3073
  %3558 = vmatpush1.bf16.msra.mxu0 %v3072
  %3559 = vmatprep.subr.bf16.mxu0 %v3077
  %3560 = vmatpush1.bf16.msra.mxu0 %v3076
  %3561 = vmatprep.subr.bf16.mxu0 %v3081
  %3562 = vmatpush1.bf16.msra.mxu0 %v3080
  %3563 = vmatprep.mubr.bf16.mxu0 %v2223
  %3564 = vmatmul.mubr.bf16.gmra.mrb[0].mxu0 %v2222
  %v3565 = vpop.f32.mrb[0].mxu0
  %v3566 = vadd.f32 %v2433, %v3565
  %v3567 = vpop.f32.mrb[0].mxu0
  %v3568 = vadd.f32 %v2437, %v3567
  %v3569 = vpop.f32.mrb[0].mxu0
  %v3570 = vadd.f32 %v2433, %v3569
  %v3571 = vpop.f32.mrb[0].mxu0
  %v3572 = vadd.f32 %v2437, %v3571
  %3573 = vdwg.mxu0
  %3574 = vmatprep.subr.bf16.mxu0 %v3085
  %3575 = vmatpush1.bf16.msra.mxu0 %v3084
  %3576 = vmatprep.subr.bf16.mxu0 %v3089
  %3577 = vmatpush1.bf16.msra.mxu0 %v3088
  %3578 = vmatprep.subr.bf16.mxu0 %v3093
  %3579 = vmatpush1.bf16.msra.mxu0 %v3092
  %3580 = vmatprep.subr.bf16.mxu0 %v3097
  %3581 = vmatpush1.bf16.msra.mxu0 %v3096
  %3582 = vmatprep.subr.bf16.mxu0 %v3101
  %3583 = vmatpush1.bf16.msra.mxu0 %v3100
  %3584 = vmatprep.subr.bf16.mxu0 %v3105
  %3585 = vmatpush1.bf16.msra.mxu0 %v3104
  %3586 = vmatprep.subr.bf16.mxu0 %v3109
  %3587 = vmatpush1.bf16.msra.mxu0 %v3108
  %3588 = vmatprep.subr.bf16.mxu0 %v3113
  %3589 = vmatpush1.bf16.msra.mxu0 %v3112
  %3590 = vmatprep.subr.bf16.mxu0 %v3117
  %3591 = vmatpush1.bf16.msra.mxu0 %v3116
  %3592 = vmatprep.subr.bf16.mxu0 %v3121
  %3593 = vmatpush1.bf16.msra.mxu0 %v3120
  %3594 = vmatprep.subr.bf16.mxu0 %v3125
  %3595 = vmatpush1.bf16.msra.mxu0 %v3124
  %3596 = vmatprep.subr.bf16.mxu0 %v3129
  %3597 = vmatpush1.bf16.msra.mxu0 %v3128
  %3598 = vmatprep.subr.bf16.mxu0 %v3133
  %3599 = vmatpush1.bf16.msra.mxu0 %v3132
  %3600 = vmatprep.subr.bf16.mxu0 %v3137
  %3601 = vmatpush1.bf16.msra.mxu0 %v3136
  %3602 = vmatprep.subr.bf16.mxu0 %v3141
  %3603 = vmatpush1.bf16.msra.mxu0 %v3140
  %3604 = vmatprep.subr.bf16.mxu0 %v3145
  %3605 = vmatpush1.bf16.msra.mxu0 %v3144
  %3606 = vmatprep.mubr.bf16.mxu0 %v2225
  %3607 = vmatmul.mubr.bf16.gmra.mrb[0].mxu0 %v2224
  %v3608 = vpop.f32.mrb[0].mxu0
  %v3609 = vadd.f32 %v3566, %v3608
  %v3610 = vpop.f32.mrb[0].mxu0
  %v3611 = vadd.f32 %v3568, %v3610
  %v3612 = vpop.f32.mrb[0].mxu0
  %v3613 = vadd.f32 %v3570, %v3612
  %v3614 = vpop.f32.mrb[0].mxu0
  %v3615 = vadd.f32 %v3572, %v3614
  %3616 = vdwg.mxu0
  %3617 = vmatprep.subr.bf16.mxu0 %v3149
  %3618 = vmatpush1.bf16.msra.mxu0 %v3148
  %3619 = vmatprep.subr.bf16.mxu0 %v3153
  %3620 = vmatpush1.bf16.msra.mxu0 %v3152
  %3621 = vmatprep.subr.bf16.mxu0 %v3157
  %3622 = vmatpush1.bf16.msra.mxu0 %v3156
  %3623 = vmatprep.subr.bf16.mxu0 %v3161
  %3624 = vmatpush1.bf16.msra.mxu0 %v3160
  %3625 = vmatprep.subr.bf16.mxu0 %v3165
  %3626 = vmatpush1.bf16.msra.mxu0 %v3164
  %3627 = vmatprep.subr.bf16.mxu0 %v3169
  %3628 = vmatpush1.bf16.msra.mxu0 %v3168
  %3629 = vmatprep.subr.bf16.mxu0 %v3173
  %3630 = vmatpush1.bf16.msra.mxu0 %v3172
  %3631 = vmatprep.subr.bf16.mxu0 %v3177
  %3632 = vmatpush1.bf16.msra.mxu0 %v3176
  %3633 = vmatprep.subr.bf16.mxu0 %v3181
  %3634 = vmatpush1.bf16.msra.mxu0 %v3180
  %3635 = vmatprep.subr.bf16.mxu0 %v3185
  %3636 = vmatpush1.bf16.msra.mxu0 %v3184
  %3637 = vmatprep.subr.bf16.mxu0 %v3189
  %3638 = vmatpush1.bf16.msra.mxu0 %v3188
  %3639 = vmatprep.subr.bf16.mxu0 %v3193
  %3640 = vmatpush1.bf16.msra.mxu0 %v3192
  %3641 = vmatprep.subr.bf16.mxu0 %v3197
  %3642 = vmatpush1.bf16.msra.mxu0 %v3196
  %3643 = vmatprep.subr.bf16.mxu0 %v3201
  %3644 = vmatpush1.bf16.msra.mxu0 %v3200
  %3645 = vmatprep.subr.bf16.mxu0 %v3205
  %3646 = vmatpush1.bf16.msra.mxu0 %v3204
  %3647 = vmatprep.subr.bf16.mxu0 %v3209
  %3648 = vmatpush1.bf16.msra.mxu0 %v3208
  %3649 = vmatprep.mubr.bf16.mxu0 %v2227
  %3650 = vmatmul.mubr.bf16.gmra.mrb[0].mxu0 %v2226
  %v3651 = vpop.f32.mrb[0].mxu0
  %v3652 = vadd.f32 %v3609, %v3651
  %v3653 = vpop.f32.mrb[0].mxu0
  %v3654 = vadd.f32 %v3611, %v3653
  %v3655 = vpop.f32.mrb[0].mxu0
  %v3656 = vadd.f32 %v3613, %v3655
  %v3657 = vpop.f32.mrb[0].mxu0
  %v3658 = vadd.f32 %v3615, %v3657
  %3659 = vdwg.mxu0
  %v3660 = vmax.f32 %v3523, 0.0
  %v3661 = vmax.f32 %v3525, 0.0
  %v3662 = vmax.f32 %v3652, 0.0
  %v3663 = vmax.f32 %v3654, 0.0
  %v3664 = vmax.f32 %v3527, 0.0
  %v3665 = vmax.f32 %v3529, 0.0
  %v3666 = vmax.f32 %v3656, 0.0
  %v3667 = vmax.f32 %v3658, 0.0
  %v3668 = vpack.c.bf16 %v3664, %v3660
  %v3669 = vpack.c.bf16 %v3665, %v3661
  %v3670 = vpack.c.bf16 %v3666, %v3662
  %v3671 = vpack.c.bf16 %v3667, %v3663
  %v3672 = vld [vmem:[%s5] sm:$0xf]
  %v3673 = vld [vmem:[%s5 + $0x4] sm:$0xf]
  %v3674 = vld [vmem:[%s5 + $0x8] sm:$0xf]
  %v3675 = vld [vmem:[%s5 + $0xc] sm:$0xf]
  %v3676 = vld [vmem:[%s5 + $0x10] sm:$0xf]
  %v3677 = vld [vmem:[%s5 + $0x14] sm:$0xf]
  %v3678 = vld [vmem:[%s5 + $0x18] sm:$0xf]
  %v3679 = vld [vmem:[%s5 + $0x1c] sm:$0xf]
  %v3680 = vld [vmem:[%s5 + $0x20] sm:$0xf]
  %v3681 = vld [vmem:[%s5 + $0x24] sm:$0xf]
  %v3682 = vld [vmem:[%s5 + $0x28] sm:$0xf]
  %v3683 = vld [vmem:[%s5 + $0x2c] sm:$0xf]
  %v3684 = vld [vmem:[%s5 + $0x30] sm:$0xf]
  %v3685 = vld [vmem:[%s5 + $0x34] sm:$0xf]
  %v3686 = vld [vmem:[%s5 + $0x38] sm:$0xf]
  %v3687 = vld [vmem:[%s5 + $0x3c] sm:$0xf]
  %v3688 = vld [vmem:[%s5 + $0x40] sm:$0xf]
  %v3689 = vld [vmem:[%s5 + $0x44] sm:$0xf]
  %v3690 = vld [vmem:[%s5 + $0x48] sm:$0xf]
  %v3691 = vld [vmem:[%s5 + $0x4c] sm:$0xf]
  %v3692 = vld [vmem:[%s5 + $0x50] sm:$0xf]
  %v3693 = vld [vmem:[%s5 + $0x54] sm:$0xf]
  %v3694 = vld [vmem:[%s5 + $0x58] sm:$0xf]
  %v3695 = vld [vmem:[%s5 + $0x5c] sm:$0xf]
  %v3696 = vld [vmem:[%s5 + $0x60] sm:$0xf]
  %v3697 = vld [vmem:[%s5 + $0x64] sm:$0xf]
  %v3698 = vld [vmem:[%s5 + $0x68] sm:$0xf]
  %v3699 = vld [vmem:[%s5 + $0x6c] sm:$0xf]
  %v3700 = vld [vmem:[%s5 + $0x70] sm:$0xf]
  %v3701 = vld [vmem:[%s5 + $0x74] sm:$0xf]
  %v3702 = vld [vmem:[%s5 + $0x78] sm:$0xf]
  %v3703 = vld [vmem:[%s5 + $0x7c] sm:$0xf]
  %v3704 = vld [vmem:[%s5 + $0x80] sm:$0xf]
  %v3705 = vld [vmem:[%s5 + $0x84] sm:$0xf]
  %v3706 = vld [vmem:[%s5 + $0x88] sm:$0xf]
  %v3707 = vld [vmem:[%s5 + $0x8c] sm:$0xf]
  %v3708 = vld [vmem:[%s5 + $0x90] sm:$0xf]
  %v3709 = vld [vmem:[%s5 + $0x94] sm:$0xf]
  %v3710 = vld [vmem:[%s5 + $0x98] sm:$0xf]
  %v3711 = vld [vmem:[%s5 + $0x9c] sm:$0xf]
  %v3712 = vld [vmem:[%s5 + $0xa0] sm:$0xf]
  %v3713 = vld [vmem:[%s5 + $0xa4] sm:$0xf]
  %v3714 = vld [vmem:[%s5 + $0xa8] sm:$0xf]
  %v3715 = vld [vmem:[%s5 + $0xac] sm:$0xf]
  %v3716 = vld [vmem:[%s5 + $0xb0] sm:$0xf]
  %v3717 = vld [vmem:[%s5 + $0xb4] sm:$0xf]
  %v3718 = vld [vmem:[%s5 + $0xb8] sm:$0xf]
  %v3719 = vld [vmem:[%s5 + $0xbc] sm:$0xf]
  %v3720 = vld [vmem:[%s5 + $0xc0] sm:$0xf]
  %v3721 = vld [vmem:[%s5 + $0xc4] sm:$0xf]
  %v3722 = vld [vmem:[%s5 + $0xc8] sm:$0xf]
  %v3723 = vld [vmem:[%s5 + $0xcc] sm:$0xf]
  %v3724 = vld [vmem:[%s5 + $0xd0] sm:$0xf]
  %v3725 = vld [vmem:[%s5 + $0xd4] sm:$0xf]
  %v3726 = vld [vmem:[%s5 + $0xd8] sm:$0xf]
  %v3727 = vld [vmem:[%s5 + $0xdc] sm:$0xf]
  %v3728 = vld [vmem:[%s5 + $0xe0] sm:$0xf]
  %v3729 = vld [vmem:[%s5 + $0xe4] sm:$0xf]
  %v3730 = vld [vmem:[%s5 + $0xe8] sm:$0xf]
  %v3731 = vld [vmem:[%s5 + $0xec] sm:$0xf]
  %v3732 = vld [vmem:[%s5 + $0xf0] sm:$0xf]
  %v3733 = vld [vmem:[%s5 + $0xf4] sm:$0xf]
  %v3734 = vld [vmem:[%s5 + $0xf8] sm:$0xf]
  %v3735 = vld [vmem:[%s5 + $0xfc] sm:$0xf]
  %v3736 = vld [vmem:[%s6] sm:$0x1]
  %v3738 = vlaneseq
  %v3739 = vshrl.u32 %v3738, 7
  %v3740 = vsub.s32 0, %v3739
  %v3741 = vrot.slane %v3736, %v3740
  %v3807 = vunpack.c.l.b16 %v3672
  %v3808 = vunpack.c.l.b16 %v3673
  %v3809 = vunpack.c.l.b16 %v3674
  %v3810 = vunpack.c.l.b16 %v3675
  %v3811 = vunpack.c.l.b16 %v3676
  %v3812 = vunpack.c.l.b16 %v3677
  %v3813 = vunpack.c.l.b16 %v3678
  %v3814 = vunpack.c.l.b16 %v3679
  %v3815 = vunpack.c.l.b16 %v3680
  %v3816 = vunpack.c.l.b16 %v3681
  %v3817 = vunpack.c.l.b16 %v3682
  %v3818 = vunpack.c.l.b16 %v3683
  %v3819 = vunpack.c.l.b16 %v3684
  %v3820 = vunpack.c.l.b16 %v3685
  %v3821 = vunpack.c.l.b16 %v3686
  %v3822 = vunpack.c.l.b16 %v3687
  %v3823 = vunpack.c.l.b16 %v3688
  %v3824 = vunpack.c.l.b16 %v3689
  %v3825 = vunpack.c.l.b16 %v3690
  %v3826 = vunpack.c.l.b16 %v3691
  %v3827 = vunpack.c.l.b16 %v3692
  %v3828 = vunpack.c.l.b16 %v3693
  %v3829 = vunpack.c.l.b16 %v3694
  %v3830 = vunpack.c.l.b16 %v3695
  %v3831 = vunpack.c.l.b16 %v3696
  %v3832 = vunpack.c.l.b16 %v3697
  %v3833 = vunpack.c.l.b16 %v3698
  %v3834 = vunpack.c.l.b16 %v3699
  %v3835 = vunpack.c.l.b16 %v3700
  %v3836 = vunpack.c.l.b16 %v3701
  %v3837 = vunpack.c.l.b16 %v3702
  %v3838 = vunpack.c.l.b16 %v3703
  %v3839 = vunpack.c.l.b16 %v3704
  %v3840 = vunpack.c.l.b16 %v3705
  %v3841 = vunpack.c.l.b16 %v3706
  %v3842 = vunpack.c.l.b16 %v3707
  %v3843 = vunpack.c.l.b16 %v3708
  %v3844 = vunpack.c.l.b16 %v3709
  %v3845 = vunpack.c.l.b16 %v3710
  %v3846 = vunpack.c.l.b16 %v3711
  %v3847 = vunpack.c.l.b16 %v3712
  %v3848 = vunpack.c.l.b16 %v3713
  %v3849 = vunpack.c.l.b16 %v3714
  %v3850 = vunpack.c.l.b16 %v3715
  %v3851 = vunpack.c.l.b16 %v3716
  %v3852 = vunpack.c.l.b16 %v3717
  %v3853 = vunpack.c.l.b16 %v3718
  %v3854 = vunpack.c.l.b16 %v3719
  %v3855 = vunpack.c.l.b16 %v3720
  %v3856 = vunpack.c.l.b16 %v3721
  %v3857 = vunpack.c.l.b16 %v3722
  %v3858 = vunpack.c.l.b16 %v3723
  %v3859 = vunpack.c.l.b16 %v3724
  %v3860 = vunpack.c.l.b16 %v3725
  %v3861 = vunpack.c.l.b16 %v3726
  %v3862 = vunpack.c.l.b16 %v3727
  %v3863 = vunpack.c.l.b16 %v3728
  %v3864 = vunpack.c.l.b16 %v3729
  %v3865 = vunpack.c.l.b16 %v3730
  %v3866 = vunpack.c.l.b16 %v3731
  %v3867 = vunpack.c.l.b16 %v3732
  %v3868 = vunpack.c.l.b16 %v3733
  %v3869 = vunpack.c.l.b16 %v3734
  %v3870 = vunpack.c.l.b16 %v3735
  %v3871 = vpack.c.b16 %v3808, %v3807
  %v3872 = vpack.c.b16 %v3810, %v3809
  %v3873 = vpack.c.b16 %v3812, %v3811
  %v3874 = vpack.c.b16 %v3814, %v3813
  %v3875 = vpack.c.b16 %v3816, %v3815
  %v3876 = vpack.c.b16 %v3818, %v3817
  %v3877 = vpack.c.b16 %v3820, %v3819
  %v3878 = vpack.c.b16 %v3822, %v3821
  %v3879 = vpack.c.b16 %v3824, %v3823
  %v3880 = vpack.c.b16 %v3826, %v3825
  %v3881 = vpack.c.b16 %v3828, %v3827
  %v3882 = vpack.c.b16 %v3830, %v3829
  %v3883 = vpack.c.b16 %v3832, %v3831
  %v3884 = vpack.c.b16 %v3834, %v3833
  %v3885 = vpack.c.b16 %v3836, %v3835
  %v3886 = vpack.c.b16 %v3838, %v3837
  %v3887 = vpack.c.b16 %v3840, %v3839
  %v3888 = vpack.c.b16 %v3842, %v3841
  %v3889 = vpack.c.b16 %v3844, %v3843
  %v3890 = vpack.c.b16 %v3846, %v3845
  %v3891 = vpack.c.b16 %v3848, %v3847
  %v3892 = vpack.c.b16 %v3850, %v3849
  %v3893 = vpack.c.b16 %v3852, %v3851
  %v3894 = vpack.c.b16 %v3854, %v3853
  %v3895 = vpack.c.b16 %v3856, %v3855
  %v3896 = vpack.c.b16 %v3858, %v3857
  %v3897 = vpack.c.b16 %v3860, %v3859
  %v3898 = vpack.c.b16 %v3862, %v3861
  %v3899 = vpack.c.b16 %v3864, %v3863
  %v3900 = vpack.c.b16 %v3866, %v3865
  %v3901 = vpack.c.b16 %v3868, %v3867
  %v3902 = vpack.c.b16 %v3870, %v3869
  %3935 = vmatprep.subr.bf16.mxu0 0
  %3936 = vmatpush1.bf16.msra.mxu0 %v3871
  %3937 = vmatprep.subr.bf16.mxu0 0
  %3938 = vmatpush1.bf16.msra.mxu0 %v3872
  %3939 = vmatprep.subr.bf16.mxu0 0
  %3940 = vmatpush1.bf16.msra.mxu0 %v3873
  %3941 = vmatprep.subr.bf16.mxu0 0
  %3942 = vmatpush1.bf16.msra.mxu0 %v3874
  %3943 = vmatprep.subr.bf16.mxu0 0
  %3944 = vmatpush1.bf16.msra.mxu0 %v3875
  %3945 = vmatprep.subr.bf16.mxu0 0
  %3946 = vmatpush1.bf16.msra.mxu0 %v3876
  %3947 = vmatprep.subr.bf16.mxu0 0
  %3948 = vmatpush1.bf16.msra.mxu0 %v3877
  %3949 = vmatprep.subr.bf16.mxu0 0
  %3950 = vmatpush1.bf16.msra.mxu0 %v3878
  %3951 = vmatprep.subr.bf16.mxu0 0
  %3952 = vmatpush1.bf16.msra.mxu0 %v3879
  %3953 = vmatprep.subr.bf16.mxu0 0
  %3954 = vmatpush1.bf16.msra.mxu0 %v3880
  %3955 = vmatprep.subr.bf16.mxu0 0
  %3956 = vmatpush1.bf16.msra.mxu0 %v3881
  %3957 = vmatprep.subr.bf16.mxu0 0
  %3958 = vmatpush1.bf16.msra.mxu0 %v3882
  %3959 = vmatprep.subr.bf16.mxu0 0
  %3960 = vmatpush1.bf16.msra.mxu0 %v3883
  %3961 = vmatprep.subr.bf16.mxu0 0
  %3962 = vmatpush1.bf16.msra.mxu0 %v3884
  %3963 = vmatprep.subr.bf16.mxu0 0
  %3964 = vmatpush1.bf16.msra.mxu0 %v3885
  %3965 = vmatprep.subr.bf16.mxu0 0
  %3966 = vmatpush1.bf16.msra.mxu0 %v3886
  %3967 = vmatprep.mubr.bf16.mxu0 %v3669
  %3968 = vmatmul.mubr.bf16.gmra.mrb[0].mxu0 %v3668
  %v3969 = vpop.f32.mrb[0].mxu0
  %v3970 = vadd.f32 %v3741, %v3969
  %v3971 = vpop.f32.mrb[0].mxu0
  %v3972 = vpop.f32.mrb[0].mxu0
  %v3973 = vadd.f32 %v3741, %v3972
  %v3974 = vpop.f32.mrb[0].mxu0
  %3975 = vdwg.mxu0
  %3976 = vmatprep.subr.bf16.mxu0 0
  %3977 = vmatpush1.bf16.msra.mxu0 %v3887
  %3978 = vmatprep.subr.bf16.mxu0 0
  %3979 = vmatpush1.bf16.msra.mxu0 %v3888
  %3980 = vmatprep.subr.bf16.mxu0 0
  %3981 = vmatpush1.bf16.msra.mxu0 %v3889
  %3982 = vmatprep.subr.bf16.mxu0 0
  %3983 = vmatpush1.bf16.msra.mxu0 %v3890
  %3984 = vmatprep.subr.bf16.mxu0 0
  %3985 = vmatpush1.bf16.msra.mxu0 %v3891
  %3986 = vmatprep.subr.bf16.mxu0 0
  %3987 = vmatpush1.bf16.msra.mxu0 %v3892
  %3988 = vmatprep.subr.bf16.mxu0 0
  %3989 = vmatpush1.bf16.msra.mxu0 %v3893
  %3990 = vmatprep.subr.bf16.mxu0 0
  %3991 = vmatpush1.bf16.msra.mxu0 %v3894
  %3992 = vmatprep.subr.bf16.mxu0 0
  %3993 = vmatpush1.bf16.msra.mxu0 %v3895
  %3994 = vmatprep.subr.bf16.mxu0 0
  %3995 = vmatpush1.bf16.msra.mxu0 %v3896
  %3996 = vmatprep.subr.bf16.mxu0 0
  %3997 = vmatpush1.bf16.msra.mxu0 %v3897
  %3998 = vmatprep.subr.bf16.mxu0 0
  %3999 = vmatpush1.bf16.msra.mxu0 %v3898
  %4000 = vmatprep.subr.bf16.mxu0 0
  %4001 = vmatpush1.bf16.msra.mxu0 %v3899
  %4002 = vmatprep.subr.bf16.mxu0 0
  %4003 = vmatpush1.bf16.msra.mxu0 %v3900
  %4004 = vmatprep.subr.bf16.mxu0 0
  %4005 = vmatpush1.bf16.msra.mxu0 %v3901
  %4006 = vmatprep.subr.bf16.mxu0 0
  %4007 = vmatpush1.bf16.msra.mxu0 %v3902
  %4008 = vmatprep.mubr.bf16.mxu0 %v3671
  %4009 = vmatmul.mubr.bf16.gmra.mrb[0].mxu0 %v3670
  %v4010 = vpop.f32.mrb[0].mxu0
  %v4011 = vadd.f32 %v3970, %v4010
  %v4012 = vpop.f32.mrb[0].mxu0
  %v4013 = vpop.f32.mrb[0].mxu0
  %v4014 = vadd.f32 %v3973, %v4013
  %v4015 = vpop.f32.mrb[0].mxu0
  %4016 = vdwg.mxu0
  %v4017 = vlaneseq
  %v4018 = vand.u32 %v4017, 127
  %vm4019 = vcmp.lt.s32.totalorder %v4018, 2
  %v4020 = vsel %vm4019, %v4011, -1e+30
  %v4021 = vsel %vm4019, %v4014, -1e+30
  %4022 = vmax.xlane.f32.xlu0 %v4020
  %v4023 = vpop.xlane.xlu0 %4022
  %4024 = vmax.xlane.f32.xlu0 %v4021
  %v4025 = vpop.xlane.xlu0 %4024
  %v4026 = vsub.f32 %v4020, %v4023
  %v4027 = vsub.f32 %v4021, %v4025
  %v4028 = vmul.f32 %v4026, 1.442695
  %v4029 = vpow.pop %v4028
  %v4030 = vmul.f32 %v4027, 1.442695
  %v4031 = vpow.pop %v4030
  %4032 = vadd.xlane.f32.xlu0 %v4029
  %v4033 = vpop.xlane.xlu0 %4032
  %4034 = vadd.xlane.f32.xlu0 %v4031
  %v4035 = vpop.xlane.xlu0 %4034
  %v4036 = vlog2.pop %v4033
  %v4037 = vmul.f32 %v4036, 0.6931472
  %v4038 = vlog2.pop %v4035
  %v4039 = vmul.f32 %v4038, 0.6931472
  %v4040 = vsub.f32 %v4026, %v4037
  %v4041 = vsub.f32 %v4027, %v4039
  %4042 = vst [vmem:[%s7] sm:$0xff] %v4040
  %4043 = vst [vmem:[%s7 + $0x8] sm:$0xff] %v4041
  // Predicated region
  $region30: #{forward.1} parent=0 // pred_check
    _
  $region31: #{forward.1} parent=0 // pred_check_branch
    %4045 = sbr.rel (0) target = $region33
  $region32: #{forward.1} parent=0 // pred_region
    _
  $region33: #{forward.1} parent=0 // pred_fallthru
    _
  // Predicated region
  $region34: #{forward.1} parent=0 // pred_check
    _
  $region35: #{forward.1} parent=0 // pred_check_branch
    %4047 = sbr.rel (0) target = $region37
  $region36: #{forward.1} parent=0 // pred_region
    _
  $region37: #{forward.1} parent=0 // pred_fallthru
    _

</llo_original>
